<compile_context>
chip_gen: v5e
topology: v5e:2x2
jax: 0.10.0
libtpu: 0.0.40
codegen_flags: <defaults>
</compile_context>

<pallas_src>
import math
import functools
import numpy as np
import jax
import jax.numpy as jnp
from jax.experimental import pallas as pl
from jax.experimental.pallas import tpu as pltpu


def _round_up(x, m):
    return ((x + m - 1) // m) * m


def _num_tensorcores():
    """2 on v7x-style megacore parts, else 1 (conservative)."""
    try:
        dk = jax.devices()[0].device_kind.lower()
    except Exception:
        dk = ""
    return 2 if ("v7" in dk or "7x" in dk) else 1


def _vmem_capacity_bytes():
    try:
        cap = getattr(pltpu.get_tpu_info(), "vmem_capacity_bytes", None)
        if cap:
            return int(cap)
    except Exception:
        pass
    try:
        dk = jax.devices()[0].device_kind.lower()
    except Exception:
        dk = ""
    return (64 << 20) if ("v7" in dk or "7x" in dk) else (128 << 20)


def _pick_tc(T, tc_max=64):
    """Largest tc <= tc_max that divides T (searched down to tc_max//2);
    otherwise fall back to tc_max with padded/masked tail timesteps."""
    tc_max = min(T, tc_max)
    lo = max(tc_max // 2, 1)
    for tc in range(tc_max, lo - 1, -1):
        if T % tc == 0:
            return tc, T
    return tc_max, _round_up(T, tc_max)


# ------------------------------ Pallas kernel --------------------------------

def _lstm_chunk_kernel(x_ref, wx_ref, wh_ref, b_ref,
                       h_seq_ref, h_last_ref, c_last_ref, pre_ref,
                       *, tc, hp, t_real, needs_mask):
    """One grid step = TC timesteps of one LSTM layer for one batch block.

    x_ref      : (TC, Bt, in)   bf16  input chunk (layer input / prev h_seq)
    wx_ref     : (in, 4*Hp)     bf16  fused input->gate weights (VMEM resident)
    wh_ref     : (Hp, 4*Hp)     bf16  fused hidden->gate weights (VMEM resident)
    b_ref      : (1, 4*Hp)      f32   fused bias (VMEM resident)
    h_seq_ref  : (TC, Bt, Hp)         hidden sequence output for this chunk
    h_last_ref : (Bt, Hp)       f32   final hidden state (resident accumulator)
    c_last_ref : (Bt, Hp)       f32   final cell state   (resident accumulator)
    pre_ref    : (TC*Bt, 4*Hp)  f32   VMEM scratch for the chunk preactivations
    Fused gate order along the 4*Hp axis: [forget, input, output | cell].
    """
    chunk = pl.program_id(1)

    @pl.when(chunk == 0)
    def _():
        h_last_ref[...] = jnp.zeros_like(h_last_ref)
        c_last_ref[...] = jnp.zeros_like(c_last_ref)

    bt = x_ref.shape[1]
    in_dim = x_ref.shape[2]

    # Fused chunk-level input projection: one large MXU matmul (M = tc*bt),
    # written once into VMEM scratch.  bt is a multiple of 8, so the merge
    # reshape is sublane-tile aligned.
    x2 = x_ref[...].reshape(tc * bt, in_dim)
    pre_ref[...] = (jnp.dot(x2, wx_ref[...], preferred_element_type=jnp.float32)
                    + b_ref[...])

    wh = wh_ref[...]  # (Hp, 4*Hp) bf16, live across the unrolled time loop

    def step(s, carry):
        h, c = carry  # (Bt, Hp) f32 recurrent state
        row0 = pl.multiple_of(s * bt, 8)
        pre = pre_ref[pl.ds(row0, bt), :] + jnp.dot(
            h.astype(wh.dtype), wh, preferred_element_type=jnp.float32)
        # sigmoid(x) == 0.5*(tanh(x/2)+1): 1 EUP op instead of exp + reciprocal
        fio = 0.5 * (jnp.tanh(0.5 * pre[:, : 3 * hp]) + 1.0)   # forget/input/output
        g = jnp.tanh(pre[:, 3 * hp:])                          # cell candidate
        c_new = fio[:, :hp] * c + fio[:, hp:2 * hp] * g
        h_new = jnp.tanh(c_new) * fio[:, 2 * hp:]
        if needs_mask:  # only traced when T is not a multiple of TC
            m = ((chunk * tc + s) < t_real).astype(jnp.float32)
            c_new = m * c_new + (1.0 - m) * c
            h_new = m * h_new + (1.0 - m) * h
        h_seq_ref[s] = h_new.astype(h_seq_ref.dtype)
        return h_new, c_new

    unroll = True if tc <= 32 else 8
    h_fin, c_fin = jax.lax.fori_loop(
        0, tc, step, (h_last_ref[...], c_last_ref[...]), unroll=unroll)
    h_last_ref[...] = h_fin
    c_last_ref[...] = c_fin


def _lstm_layer_recurrence(x_seq, wx_f, wh_f, b_f, t_real, tc, out_dtype):
    """Run the sequential recurrence for one layer.

    x_seq : (T_pad, Bp, in) bf16   time-major layer input
    wx_f  : (in, 4*Hp)      bf16   fused input weights (resident)
    wh_f  : (Hp, 4*Hp)      bf16   fused hidden weights (resident)
    b_f   : (1, 4*Hp)       f32    fused bias (resident)
    Returns h_seq (T_pad, Bp, Hp) out_dtype, h_last / c_last (Bp, Hp) f32.
    """
    t_pad, bp, in_dim = x_seq.shape
    g4 = wh_f.shape[1]
    hp = g4 // 4
    nc = t_pad // tc

    # Split the batch across grid axis 0 only when a second TensorCore exists
    # (v7x megacore); on 1-TC chips a split just serializes 2x the recurrence.
    two_cores = _num_tensorcores() >= 2
    bt = bp // 2 if (two_cores and bp >= 16 and bp % 16 == 0) else bp
    nb = bp // bt

    kernel = functools.partial(
        _lstm_chunk_kernel, tc=tc, hp=hp, t_real=t_real,
        needs_mask=(t_pad != t_real))

    out_size = np.dtype(out_dtype).itemsize
    vmem_est = (2 * tc * bt * in_dim * 2          # double-buffered x chunk (bf16)
                + in_dim * g4 * 2                 # resident Wx (bf16)
                + hp * g4 * 2                     # resident Wh (bf16)
                + g4 * 4                          # resident bias (f32)
                + tc * bt * g4 * 4                # preact VMEM scratch (f32)
                + 2 * tc * bt * hp * out_size     # double-buffered h_seq blocks
                + 4 * bt * hp * 4)                # resident h/c accumulators
    # Per-generation cap: ~3/4 of physical VMEM (≈48 MiB on v7x, ≈96 MiB v5e/v6e)
    # leaves Mosaic scratch headroom while not wasting v5e/v6e's 128 MiB.
    ceiling = (_vmem_capacity_bytes() * 3) // 4
    vmem_limit = int(min(max(2 * vmem_est, 32 << 20), ceiling))
    # TODO(synk): for very large Hp on v7x (resident Wx+Wh > ~48 MiB) the weights
    # should be streamed per chunk / tc reduced; not needed at these sizes.

    h_seq, h_last, c_last = pl.pallas_call(
        kernel,
        out_shape=(
            jax.ShapeDtypeStruct((t_pad, bp, hp), out_dtype),
            jax.ShapeDtypeStruct((bp, hp), jnp.float32),
            jax.ShapeDtypeStruct((bp, hp), jnp.float32),
        ),
        grid=(nb, nc),
        in_specs=[
            pl.BlockSpec((tc, bt, in_dim), lambda b, t: (t, b, 0)),
            # Whole-array, VMEM-resident (non-pipelined) weights / bias.
            pl.BlockSpec(memory_space=pltpu.MemorySpace.VMEM),
            pl.BlockSpec(memory_space=pltpu.MemorySpace.VMEM),
            pl.BlockSpec(memory_space=pltpu.MemorySpace.VMEM),
        ],
        out_specs=(
            pl.BlockSpec((tc, bt, hp), lambda b, t: (t, b, 0)),
            pl.BlockSpec((bt, hp), lambda b, t: (b, 0)),
            pl.BlockSpec((bt, hp), lambda b, t: (b, 0)),
        ),
        scratch_shapes=[pltpu.VMEM((tc * bt, g4), jnp.float32)],
        compiler_params=pltpu.CompilerParams(
            dimension_semantics=("parallel", "arbitrary"),
            vmem_limit_bytes=vmem_limit),
    )(x_seq, wx_f, wh_f, b_f)
    return h_seq, h_last, c_last


# ------------------------------ wrapper / forward -----------------------------

def _prepare_kernel_params(raw_params, H, Hp):
    """Fuse per-gate weights into (in, 4*Hp)/(Hp, 4*Hp) bf16 + (1, 4*Hp) f32
    bias, padding the hidden dim to Hp (lane-dense). Gate order [f, i, o, g]."""
    kparams = []
    for layer, (wx, wh, b) in enumerate(raw_params):
        in_dim = wx.shape[1]
        wx_p = jnp.pad(wx, ((0, 0), (0, 0), (0, Hp - H)))             # (4, in, Hp)
        if layer > 0:  # inputs of deeper layers are the padded (Hp) hidden seq
            wx_p = jnp.pad(wx_p, ((0, 0), (0, Hp - in_dim), (0, 0)))  # (4, Hp, Hp)
        wh_p = jnp.pad(wh, ((0, 0), (0, Hp - H), (0, Hp - H)))        # (4, Hp, Hp)
        b_p = jnp.pad(b, ((0, 0), (0, Hp - H)))                       # (4, Hp)
        wx_f = jnp.concatenate([wx_p[g] for g in range(4)], axis=1).astype(jnp.bfloat16)
        wh_f = jnp.concatenate([wh_p[g] for g in range(4)], axis=1).astype(jnp.bfloat16)
        b_f = jnp.concatenate([b_p[g] for g in range(4)], axis=0)
        b_f = b_f.astype(jnp.float32).reshape(1, 4 * Hp)
        kparams.append((wx_f, wh_f, b_f))
    return kparams


def lstm_forward(x, params):
    """Multi-layer LSTM forward (bidirectional=False, dropout=0 => identity).

    x: (B, T, D) f32
    params: per-layer (wx (4,in,H), wh (4,H,H), b (4,H)), gate order [f,i,o,g].
    Returns output (B, T, H) f32, (h_n (L, B, H), c_n (L, B, H)) f32.
    """
    B, T, _ = x.shape
    H = params[0][1].shape[-1]
    Hp = _round_up(H, 128)       # lane-dense gate width
    Bp = _round_up(B, 8)         # sublane-dense batch
    tc, t_pad = _pick_tc(T)      # divisor-friendly chunk size (avoid masking)
    L = len(params)

    kparams = _prepare_kernel_params(params, H, Hp)

    # Single small transpose/pad of the D-wide input; afterwards layers exchange
    # time-major (T_pad, Bp, Hp) bf16 slabs directly (no big-tensor pads/copies).
    cur = jnp.transpose(x, (1, 0, 2))
    cur = jnp.pad(cur, ((0, t_pad - T), (0, Bp - B), (0, 0))).astype(jnp.bfloat16)

    h_finals, c_finals = [], []
    for layer, (wx_f, wh_f, b_f) in enumerate(kparams):
        out_dtype = jnp.float32 if layer == L - 1 else jnp.bfloat16
        h_seq, h_last, c_last = _lstm_layer_recurrence(
            cur, wx_f, wh_f, b_f, T, tc, out_dtype)
        h_finals.append(h_last[:B, :H])
        c_finals.append(c_last[:B, :H])
        cur = h_seq  # (T_pad, Bp, Hp) feeds the next layer's kernel directly
    output = jnp.transpose(cur[:T, :B, :H], (1, 0, 2)).astype(jnp.float32)
    return output, (jnp.stack(h_finals, 0), jnp.stack(c_finals, 0))


# --------------------- parameter init (mirrors the module) --------------------

def xavier_uniform(key, shape):
    fan_in, fan_out = shape
    a = math.sqrt(6.0 / (fan_in + fan_out))
    return jax.random.uniform(key, shape, jnp.float32, minval=-a, maxval=a)


def init_lstm_params(key, input_dim, hidden_dim, num_layers):
    params = []
    for layer in range(num_layers):
        in_dim = input_dim if layer == 0 else hidden_dim
        wx_list, wh_list, b_list = [], [], []
        for _gate in range(4):  # forget, input, output, cell
            key, k1, k2 = jax.random.split(key, 3)
            wx_list.append(xavier_uniform(k1, (in_dim, hidden_dim)))
            wh_list.append(xavier_uniform(k2, (hidden_dim, hidden_dim)))
            b_list.append(jnp.zeros((hidden_dim,), jnp.float32))  # zeros, as in module
        params.append((jnp.stack(wx_list, 0),          # (4, in_dim, H)
                       jnp.stack(wh_list, 0),          # (4, H, H)
                       jnp.stack(b_list, 0)))          # (4, H)
    return params


# ------------------------- pure-JAX f32 reference -----------------------------

def lstm_reference(x, params):
    B, T, _ = x.shape
    cur = x
    h_finals, c_finals = [], []
    for (wx, wh, b) in params:
        H = wh.shape[-1]
        h = jnp.zeros((B, H), jnp.float32)
        c = jnp.zeros((B, H), jnp.float32)
        outs = []
        for t in range(T):
            xt = cur[:, t]
            f = jax.nn.sigmoid(xt @ wx[0] + h @ wh[0] + b[0])
            i = jax.nn.sigmoid(xt @ wx[1] + h @ wh[1] + b[1])
            o = jax.nn.sigmoid(xt @ wx[2] + h @ wh[2] + b[2])
            g = jnp.tanh(xt @ wx[3] + h @ wh[3] + b[3])
            c = f * c + i * g
            h = jnp.tanh(c) * o
            outs.append(h)
        cur = jnp.stack(outs, axis=1)
        h_finals.append(h)
        c_finals.append(c)
    return cur, (jnp.stack(h_finals, 0), jnp.stack(c_finals, 0))


if __name__ == "__main__":
    B, T, D, H, L = 2, 8, 4, 32, 2

    key = jax.random.PRNGKey(0)
    key, kx = jax.random.split(key)
    x = jax.random.normal(kx, (B, T, D), jnp.float32)
    params = init_lstm_params(key, D, H, L)

    fwd = jax.jit(lambda xv: lstm_forward(xv, params))
    out, (h_n, c_n) = fwd(x)
    out = jax.block_until_ready(out)
    h_n = jax.block_until_ready(h_n)
    c_n = jax.block_until_ready(c_n)

    # Validate against the pure-JAX f32 reference. Tolerance is loosened because
    # the MXU dots run with bf16 inputs/weights (f32 accumulation) and the
    # inter-layer hidden sequence is carried in bf16.
    ref_out, (ref_h, ref_c) = lstm_reference(x, params)
    assert out.shape == (B, T, H)
    assert h_n.shape == (L, B, H) and c_n.shape == (L, B, H)
    np.testing.assert_allclose(np.asarray(out), np.asarray(ref_out), atol=5e-2, rtol=5e-2)
    np.testing.assert_allclose(np.asarray(h_n), np.asarray(ref_h), atol=5e-2, rtol=5e-2)
    np.testing.assert_allclose(np.asarray(c_n), np.asarray(ref_c), atol=5e-2, rtol=5e-2)

    # TODO(synk): bidirectional=True path of the module is not exercised here
    # (module default is False); it would be a second pass over flipped time.
    print("KERNEL_OK")
</pallas_src>

<mosaic_0001>
module attributes {stable_mosaic.version = 11 : i64} {
  func.func @_lstm_chunk_kernel(%arg0: i32, %arg1: i32, %arg2: memref<8x8x4xbf16, #tpu.memory_space<vmem>>, %arg3: memref<4x512xbf16, #tpu.memory_space<vmem>>, %arg4: memref<128x512xbf16, #tpu.memory_space<vmem>>, %arg5: memref<1x512xf32, #tpu.memory_space<vmem>>, %arg6: memref<8x8x128xbf16, #tpu.memory_space<vmem>>, %arg7: memref<8x128xf32, #tpu.memory_space<vmem>>, %arg8: memref<8x128xf32, #tpu.memory_space<vmem>>, %arg9: memref<64x512xf32, #tpu.memory_space<vmem>>) attributes {dimension_semantics = [#tpu.dimension_semantics<parallel>, #tpu.dimension_semantics<arbitrary>], iteration_bounds = array<i64: 1, 1>, scalar_prefetch = 0 : i64, scratch_operands = 1 : i64, tpu.core_type = #tpu.core_type<tc>, window_params = [{transform_indices = @transform_0, window_bounds = array<i64: 8, 8, 4>}, {pipeline_mode = #tpu.pipeline_mode<synchronous>, transform_indices = @transform_1, window_bounds = array<i64: 4, 512>}, {pipeline_mode = #tpu.pipeline_mode<synchronous>, transform_indices = @transform_2, window_bounds = array<i64: 128, 512>}, {pipeline_mode = #tpu.pipeline_mode<synchronous>, transform_indices = @transform_3, window_bounds = array<i64: 1, 512>}, {transform_indices = @transform_4, window_bounds = array<i64: 8, 8, 128>}, {transform_indices = @transform_5, window_bounds = array<i64: 8, 128>}, {transform_indices = @transform_6, window_bounds = array<i64: 8, 128>}]} {
    %c0_i32 = arith.constant 0 : i32
    %0 = arith.cmpi eq, %arg1, %c0_i32 : i32
    %1 = arith.extui %0 : i1 to i32
    %c0_i32_0 = arith.constant 0 : i32
    %2 = arith.cmpi ne, %1, %c0_i32_0 : i32
    scf.if %2 {
      %cst_84 = arith.constant 0.000000e+00 : f32
      %256 = vector.broadcast %cst_84 : f32 to vector<8x128xf32>
      %c0_85 = arith.constant 0 : index
      %c0_86 = arith.constant 0 : index
      %257 = vector.load %arg7[%c0_85, %c0_86] : memref<8x128xf32, #tpu.memory_space<vmem>>, vector<8x128xf32>
      tpu.vector_store %arg7[%c0_85, %c0_86], %256 {strides = array<i32>} : memref<8x128xf32, #tpu.memory_space<vmem>>, vector<8x128xf32>,
      %cst_87 = arith.constant 0.000000e+00 : f32
      %258 = vector.broadcast %cst_87 : f32 to vector<8x128xf32>
      %c0_88 = arith.constant 0 : index
      %c0_89 = arith.constant 0 : index
      %259 = vector.load %arg8[%c0_88, %c0_89] : memref<8x128xf32, #tpu.memory_space<vmem>>, vector<8x128xf32>
      tpu.vector_store %arg8[%c0_88, %c0_89], %258 {strides = array<i32>} : memref<8x128xf32, #tpu.memory_space<vmem>>, vector<8x128xf32>,
    } else {
    }
    %c0 = arith.constant 0 : index
    %c0_1 = arith.constant 0 : index
    %c0_2 = arith.constant 0 : index
    %3 = vector.load %arg2[%c0, %c0_1, %c0_2] : memref<8x8x4xbf16, #tpu.memory_space<vmem>>, vector<8x8x4xbf16>
    %4 = vector.shape_cast %3 : vector<8x8x4xbf16> to vector<64x4xbf16>
    %c0_3 = arith.constant 0 : index
    %c0_4 = arith.constant 0 : index
    %5 = vector.load %arg3[%c0_3, %c0_4] : memref<4x512xbf16, #tpu.memory_space<vmem>>, vector<4x512xbf16>
    %cst = arith.constant dense<0.000000e+00> : vector<64x512xf32>
    %6 = tpu.matmul %4, %5, %cst {dimension_numbers = #tpu.dot_dimension_numbers<[1], [0], [0], [1], [0, 0, 1, 1], [], []>} : vector<64x4xbf16>, vector<4x512xbf16>, vector<64x512xf32> -> vector<64x512xf32>
    %c0_5 = arith.constant 0 : index
    %c0_6 = arith.constant 0 : index
    %7 = vector.load %arg5[%c0_5, %c0_6] : memref<1x512xf32, #tpu.memory_space<vmem>>, vector<1x512xf32>
    %8 = vector.broadcast %7 : vector<1x512xf32> to vector<64x512xf32>
    %9 = arith.addf %6, %8 : vector<64x512xf32>
    %c0_7 = arith.constant 0 : index
    %c0_8 = arith.constant 0 : index
    %10 = vector.load %arg9[%c0_7, %c0_8] : memref<64x512xf32, #tpu.memory_space<vmem>>, vector<64x512xf32>
    tpu.vector_store %arg9[%c0_7, %c0_8], %9 {strides = array<i32>} : memref<64x512xf32, #tpu.memory_space<vmem>>, vector<64x512xf32>,
    %c0_9 = arith.constant 0 : index
    %c0_10 = arith.constant 0 : index
    %11 = vector.load %arg4[%c0_9, %c0_10] : memref<128x512xbf16, #tpu.memory_space<vmem>>, vector<128x512xbf16>
    %c0_11 = arith.constant 0 : index
    %c0_12 = arith.constant 0 : index
    %12 = vector.load %arg7[%c0_11, %c0_12] : memref<8x128xf32, #tpu.memory_space<vmem>>, vector<8x128xf32>
    %c0_13 = arith.constant 0 : index
    %c0_14 = arith.constant 0 : index
    %13 = vector.load %arg8[%c0_13, %c0_14] : memref<8x128xf32, #tpu.memory_space<vmem>>, vector<8x128xf32>
    %c0_i32_15 = arith.constant 0 : i32
    %c8_i32 = arith.constant 8 : i32
    %14 = arith.muli %c0_i32_15, %c8_i32 : i32
    %15 = tpu.assume_multiple %14, 8 : i32
    %16 = arith.index_cast %15 : i32 to index
    %c0_16 = arith.constant 0 : index
    %17 = vector.load %arg9[%16, %c0_16] : memref<64x512xf32, #tpu.memory_space<vmem>>, vector<8x512xf32>
    %18 = arith.truncf %12 : vector<8x128xf32> to vector<8x128xbf16>
    %cst_17 = arith.constant dense<0.000000e+00> : vector<8x512xf32>
    %19 = tpu.matmul %18, %11, %cst_17 {dimension_numbers = #tpu.dot_dimension_numbers<[1], [0], [0], [1], [0, 0, 1, 1], [], []>} : vector<8x128xbf16>, vector<128x512xbf16>, vector<8x512xf32> -> vector<8x512xf32>
    %20 = arith.addf %17, %19 : vector<8x512xf32>
    %21 = vector.extract_strided_slice %20 {offsets = [0, 0], sizes = [8, 384], strides = [1, 1]} : vector<8x512xf32> to vector<8x384xf32>
    %cst_18 = arith.constant 5.000000e-01 : f32
    %22 = vector.broadcast %cst_18 : f32 to vector<8x384xf32>
    %23 = arith.mulf %22, %21 : vector<8x384xf32>
    %24 = math.tanh %23 : vector<8x384xf32>
    %cst_19 = arith.constant 1.000000e+00 : f32
    %25 = vector.broadcast %cst_19 : f32 to vector<8x384xf32>
    %26 = arith.addf %24, %25 : vector<8x384xf32>
    %cst_20 = arith.constant 5.000000e-01 : f32
    %27 = vector.broadcast %cst_20 : f32 to vector<8x384xf32>
    %28 = arith.mulf %27, %26 : vector<8x384xf32>
    %29 = vector.extract_strided_slice %20 {offsets = [0, 384], sizes = [8, 128], strides = [1, 1]} : vector<8x512xf32> to vector<8x128xf32>
    %30 = math.tanh %29 : vector<8x128xf32>
    %31 = vector.extract_strided_slice %28 {offsets = [0, 0], sizes = [8, 128], strides = [1, 1]} : vector<8x384xf32> to vector<8x128xf32>
    %32 = arith.mulf %31, %13 : vector<8x128xf32>
    %33 = vector.extract_strided_slice %28 {offsets = [0, 128], sizes = [8, 128], strides = [1, 1]} : vector<8x384xf32> to vector<8x128xf32>
    %34 = arith.mulf %33, %30 : vector<8x128xf32>
    %35 = arith.addf %32, %34 : vector<8x128xf32>
    %36 = math.tanh %35 : vector<8x128xf32>
    %37 = vector.extract_strided_slice %28 {offsets = [0, 256], sizes = [8, 128], strides = [1, 1]} : vector<8x384xf32> to vector<8x128xf32>
    %38 = arith.mulf %36, %37 : vector<8x128xf32>
    %39 = arith.truncf %38 : vector<8x128xf32> to vector<8x128xbf16>
    %40 = arith.index_cast %c0_i32_15 : i32 to index
    %c0_21 = arith.constant 0 : index
    %c0_22 = arith.constant 0 : index
    %41 = vector.load %arg6[%40, %c0_21, %c0_22] : memref<8x8x128xbf16, #tpu.memory_space<vmem>>, vector<1x8x128xbf16>
    %42 = vector.shape_cast %41 : vector<1x8x128xbf16> to vector<8x128xbf16>
    %43 = vector.shape_cast %39 : vector<8x128xbf16> to vector<1x8x128xbf16>
    tpu.vector_store %arg6[%40, %c0_21, %c0_22], %43 {strides = array<i32>} : memref<8x8x128xbf16, #tpu.memory_space<vmem>>, vector<1x8x128xbf16>,
    %c1_i32 = arith.constant 1 : i32
    %c8_i32_23 = arith.constant 8 : i32
    %44 = arith.muli %c1_i32, %c8_i32_23 : i32
    %45 = tpu.assume_multiple %44, 8 : i32
    %46 = arith.index_cast %45 : i32 to index
    %c0_24 = arith.constant 0 : index
    %47 = vector.load %arg9[%46, %c0_24] : memref<64x512xf32, #tpu.memory_space<vmem>>, vector<8x512xf32>
    %48 = arith.truncf %38 : vector<8x128xf32> to vector<8x128xbf16>
    %cst_25 = arith.constant dense<0.000000e+00> : vector<8x512xf32>
    %49 = tpu.matmul %48, %11, %cst_25 {dimension_numbers = #tpu.dot_dimension_numbers<[1], [0], [0], [1], [0, 0, 1, 1], [], []>} : vector<8x128xbf16>, vector<128x512xbf16>, vector<8x512xf32> -> vector<8x512xf32>
    %50 = arith.addf %47, %49 : vector<8x512xf32>
    %51 = vector.extract_strided_slice %50 {offsets = [0, 0], sizes = [8, 384], strides = [1, 1]} : vector<8x512xf32> to vector<8x384xf32>
    %cst_26 = arith.constant 5.000000e-01 : f32
    %52 = vector.broadcast %cst_26 : f32 to vector<8x384xf32>
    %53 = arith.mulf %52, %51 : vector<8x384xf32>
    %54 = math.tanh %53 : vector<8x384xf32>
    %cst_27 = arith.constant 1.000000e+00 : f32
    %55 = vector.broadcast %cst_27 : f32 to vector<8x384xf32>
    %56 = arith.addf %54, %55 : vector<8x384xf32>
    %cst_28 = arith.constant 5.000000e-01 : f32
    %57 = vector.broadcast %cst_28 : f32 to vector<8x384xf32>
    %58 = arith.mulf %57, %56 : vector<8x384xf32>
    %59 = vector.extract_strided_slice %50 {offsets = [0, 384], sizes = [8, 128], strides = [1, 1]} : vector<8x512xf32> to vector<8x128xf32>
    %60 = math.tanh %59 : vector<8x128xf32>
    %61 = vector.extract_strided_slice %58 {offsets = [0, 0], sizes = [8, 128], strides = [1, 1]} : vector<8x384xf32> to vector<8x128xf32>
    %62 = arith.mulf %61, %35 : vector<8x128xf32>
    %63 = vector.extract_strided_slice %58 {offsets = [0, 128], sizes = [8, 128], strides = [1, 1]} : vector<8x384xf32> to vector<8x128xf32>
    %64 = arith.mulf %63, %60 : vector<8x128xf32>
    %65 = arith.addf %62, %64 : vector<8x128xf32>
    %66 = math.tanh %65 : vector<8x128xf32>
    %67 = vector.extract_strided_slice %58 {offsets = [0, 256], sizes = [8, 128], strides = [1, 1]} : vector<8x384xf32> to vector<8x128xf32>
    %68 = arith.mulf %66, %67 : vector<8x128xf32>
    %69 = arith.truncf %68 : vector<8x128xf32> to vector<8x128xbf16>
    %70 = arith.index_cast %c1_i32 : i32 to index
    %c0_29 = arith.constant 0 : index
    %c0_30 = arith.constant 0 : index
    %71 = vector.load %arg6[%70, %c0_29, %c0_30] : memref<8x8x128xbf16, #tpu.memory_space<vmem>>, vector<1x8x128xbf16>
    %72 = vector.shape_cast %71 : vector<1x8x128xbf16> to vector<8x128xbf16>
    %73 = vector.shape_cast %69 : vector<8x128xbf16> to vector<1x8x128xbf16>
    tpu.vector_store %arg6[%70, %c0_29, %c0_30], %73 {strides = array<i32>} : memref<8x8x128xbf16, #tpu.memory_space<vmem>>, vector<1x8x128xbf16>,
    %c2_i32 = arith.constant 2 : i32
    %c8_i32_31 = arith.constant 8 : i32
    %74 = arith.muli %c2_i32, %c8_i32_31 : i32
    %75 = tpu.assume_multiple %74, 8 : i32
    %76 = arith.index_cast %75 : i32 to index
    %c0_32 = arith.constant 0 : index
    %77 = vector.load %arg9[%76, %c0_32] : memref<64x512xf32, #tpu.memory_space<vmem>>, vector<8x512xf32>
    %78 = arith.truncf %68 : vector<8x128xf32> to vector<8x128xbf16>
    %cst_33 = arith.constant dense<0.000000e+00> : vector<8x512xf32>
    %79 = tpu.matmul %78, %11, %cst_33 {dimension_numbers = #tpu.dot_dimension_numbers<[1], [0], [0], [1], [0, 0, 1, 1], [], []>} : vector<8x128xbf16>, vector<128x512xbf16>, vector<8x512xf32> -> vector<8x512xf32>
    %80 = arith.addf %77, %79 : vector<8x512xf32>
    %81 = vector.extract_strided_slice %80 {offsets = [0, 0], sizes = [8, 384], strides = [1, 1]} : vector<8x512xf32> to vector<8x384xf32>
    %cst_34 = arith.constant 5.000000e-01 : f32
    %82 = vector.broadcast %cst_34 : f32 to vector<8x384xf32>
    %83 = arith.mulf %82, %81 : vector<8x384xf32>
    %84 = math.tanh %83 : vector<8x384xf32>
    %cst_35 = arith.constant 1.000000e+00 : f32
    %85 = vector.broadcast %cst_35 : f32 to vector<8x384xf32>
    %86 = arith.addf %84, %85 : vector<8x384xf32>
    %cst_36 = arith.constant 5.000000e-01 : f32
    %87 = vector.broadcast %cst_36 : f32 to vector<8x384xf32>
    %88 = arith.mulf %87, %86 : vector<8x384xf32>
    %89 = vector.extract_strided_slice %80 {offsets = [0, 384], sizes = [8, 128], strides = [1, 1]} : vector<8x512xf32> to vector<8x128xf32>
    %90 = math.tanh %89 : vector<8x128xf32>
    %91 = vector.extract_strided_slice %88 {offsets = [0, 0], sizes = [8, 128], strides = [1, 1]} : vector<8x384xf32> to vector<8x128xf32>
    %92 = arith.mulf %91, %65 : vector<8x128xf32>
    %93 = vector.extract_strided_slice %88 {offsets = [0, 128], sizes = [8, 128], strides = [1, 1]} : vector<8x384xf32> to vector<8x128xf32>
    %94 = arith.mulf %93, %90 : vector<8x128xf32>
    %95 = arith.addf %92, %94 : vector<8x128xf32>
    %96 = math.tanh %95 : vector<8x128xf32>
    %97 = vector.extract_strided_slice %88 {offsets = [0, 256], sizes = [8, 128], strides = [1, 1]} : vector<8x384xf32> to vector<8x128xf32>
    %98 = arith.mulf %96, %97 : vector<8x128xf32>
    %99 = arith.truncf %98 : vector<8x128xf32> to vector<8x128xbf16>
    %100 = arith.index_cast %c2_i32 : i32 to index
    %c0_37 = arith.constant 0 : index
    %c0_38 = arith.constant 0 : index
    %101 = vector.load %arg6[%100, %c0_37, %c0_38] : memref<8x8x128xbf16, #tpu.memory_space<vmem>>, vector<1x8x128xbf16>
    %102 = vector.shape_cast %101 : vector<1x8x128xbf16> to vector<8x128xbf16>
    %103 = vector.shape_cast %99 : vector<8x128xbf16> to vector<1x8x128xbf16>
    tpu.vector_store %arg6[%100, %c0_37, %c0_38], %103 {strides = array<i32>} : memref<8x8x128xbf16, #tpu.memory_space<vmem>>, vector<1x8x128xbf16>,
    %c3_i32 = arith.constant 3 : i32
    %c8_i32_39 = arith.constant 8 : i32
    %104 = arith.muli %c3_i32, %c8_i32_39 : i32
    %105 = tpu.assume_multiple %104, 8 : i32
    %106 = arith.index_cast %105 : i32 to index
    %c0_40 = arith.constant 0 : index
    %107 = vector.load %arg9[%106, %c0_40] : memref<64x512xf32, #tpu.memory_space<vmem>>, vector<8x512xf32>
    %108 = arith.truncf %98 : vector<8x128xf32> to vector<8x128xbf16>
    %cst_41 = arith.constant dense<0.000000e+00> : vector<8x512xf32>
    %109 = tpu.matmul %108, %11, %cst_41 {dimension_numbers = #tpu.dot_dimension_numbers<[1], [0], [0], [1], [0, 0, 1, 1], [], []>} : vector<8x128xbf16>, vector<128x512xbf16>, vector<8x512xf32> -> vector<8x512xf32>
    %110 = arith.addf %107, %109 : vector<8x512xf32>
    %111 = vector.extract_strided_slice %110 {offsets = [0, 0], sizes = [8, 384], strides = [1, 1]} : vector<8x512xf32> to vector<8x384xf32>
    %cst_42 = arith.constant 5.000000e-01 : f32
    %112 = vector.broadcast %cst_42 : f32 to vector<8x384xf32>
    %113 = arith.mulf %112, %111 : vector<8x384xf32>
    %114 = math.tanh %113 : vector<8x384xf32>
    %cst_43 = arith.constant 1.000000e+00 : f32
    %115 = vector.broadcast %cst_43 : f32 to vector<8x384xf32>
    %116 = arith.addf %114, %115 : vector<8x384xf32>
    %cst_44 = arith.constant 5.000000e-01 : f32
    %117 = vector.broadcast %cst_44 : f32 to vector<8x384xf32>
    %118 = arith.mulf %117, %116 : vector<8x384xf32>
    %119 = vector.extract_strided_slice %110 {offsets = [0, 384], sizes = [8, 128], strides = [1, 1]} : vector<8x512xf32> to vector<8x128xf32>
    %120 = math.tanh %119 : vector<8x128xf32>
    %121 = vector.extract_strided_slice %118 {offsets = [0, 0], sizes = [8, 128], strides = [1, 1]} : vector<8x384xf32> to vector<8x128xf32>
    %122 = arith.mulf %121, %95 : vector<8x128xf32>
    %123 = vector.extract_strided_slice %118 {offsets = [0, 128], sizes = [8, 128], strides = [1, 1]} : vector<8x384xf32> to vector<8x128xf32>
    %124 = arith.mulf %123, %120 : vector<8x128xf32>
    %125 = arith.addf %122, %124 : vector<8x128xf32>
    %126 = math.tanh %125 : vector<8x128xf32>
    %127 = vector.extract_strided_slice %118 {offsets = [0, 256], sizes = [8, 128], strides = [1, 1]} : vector<8x384xf32> to vector<8x128xf32>
    %128 = arith.mulf %126, %127 : vector<8x128xf32>
    %129 = arith.truncf %128 : vector<8x128xf32> to vector<8x128xbf16>
    %130 = arith.index_cast %c3_i32 : i32 to index
    %c0_45 = arith.constant 0 : index
    %c0_46 = arith.constant 0 : index
    %131 = vector.load %arg6[%130, %c0_45, %c0_46] : memref<8x8x128xbf16, #tpu.memory_space<vmem>>, vector<1x8x128xbf16>
    %132 = vector.shape_cast %131 : vector<1x8x128xbf16> to vector<8x128xbf16>
    %133 = vector.shape_cast %129 : vector<8x128xbf16> to vector<1x8x128xbf16>
    tpu.vector_store %arg6[%130, %c0_45, %c0_46], %133 {strides = array<i32>} : memref<8x8x128xbf16, #tpu.memory_space<vmem>>, vector<1x8x128xbf16>,
    %c4_i32 = arith.constant 4 : i32
    %c8_i32_47 = arith.constant 8 : i32
    %134 = arith.muli %c4_i32, %c8_i32_47 : i32
    %135 = tpu.assume_multiple %134, 8 : i32
    %136 = arith.index_cast %135 : i32 to index
    %c0_48 = arith.constant 0 : index
    %137 = vector.load %arg9[%136, %c0_48] : memref<64x512xf32, #tpu.memory_space<vmem>>, vector<8x512xf32>
    %138 = arith.truncf %128 : vector<8x128xf32> to vector<8x128xbf16>
    %cst_49 = arith.constant dense<0.000000e+00> : vector<8x512xf32>
    %139 = tpu.matmul %138, %11, %cst_49 {dimension_numbers = #tpu.dot_dimension_numbers<[1], [0], [0], [1], [0, 0, 1, 1], [], []>} : vector<8x128xbf16>, vector<128x512xbf16>, vector<8x512xf32> -> vector<8x512xf32>
    %140 = arith.addf %137, %139 : vector<8x512xf32>
    %141 = vector.extract_strided_slice %140 {offsets = [0, 0], sizes = [8, 384], strides = [1, 1]} : vector<8x512xf32> to vector<8x384xf32>
    %cst_50 = arith.constant 5.000000e-01 : f32
    %142 = vector.broadcast %cst_50 : f32 to vector<8x384xf32>
    %143 = arith.mulf %142, %141 : vector<8x384xf32>
    %144 = math.tanh %143 : vector<8x384xf32>
    %cst_51 = arith.constant 1.000000e+00 : f32
    %145 = vector.broadcast %cst_51 : f32 to vector<8x384xf32>
    %146 = arith.addf %144, %145 : vector<8x384xf32>
    %cst_52 = arith.constant 5.000000e-01 : f32
    %147 = vector.broadcast %cst_52 : f32 to vector<8x384xf32>
    %148 = arith.mulf %147, %146 : vector<8x384xf32>
    %149 = vector.extract_strided_slice %140 {offsets = [0, 384], sizes = [8, 128], strides = [1, 1]} : vector<8x512xf32> to vector<8x128xf32>
    %150 = math.tanh %149 : vector<8x128xf32>
    %151 = vector.extract_strided_slice %148 {offsets = [0, 0], sizes = [8, 128], strides = [1, 1]} : vector<8x384xf32> to vector<8x128xf32>
    %152 = arith.mulf %151, %125 : vector<8x128xf32>
    %153 = vector.extract_strided_slice %148 {offsets = [0, 128], sizes = [8, 128], strides = [1, 1]} : vector<8x384xf32> to vector<8x128xf32>
    %154 = arith.mulf %153, %150 : vector<8x128xf32>
    %155 = arith.addf %152, %154 : vector<8x128xf32>
    %156 = math.tanh %155 : vector<8x128xf32>
    %157 = vector.extract_strided_slice %148 {offsets = [0, 256], sizes = [8, 128], strides = [1, 1]} : vector<8x384xf32> to vector<8x128xf32>
    %158 = arith.mulf %156, %157 : vector<8x128xf32>
    %159 = arith.truncf %158 : vector<8x128xf32> to vector<8x128xbf16>
    %160 = arith.index_cast %c4_i32 : i32 to index
    %c0_53 = arith.constant 0 : index
    %c0_54 = arith.constant 0 : index
    %161 = vector.load %arg6[%160, %c0_53, %c0_54] : memref<8x8x128xbf16, #tpu.memory_space<vmem>>, vector<1x8x128xbf16>
    %162 = vector.shape_cast %161 : vector<1x8x128xbf16> to vector<8x128xbf16>
    %163 = vector.shape_cast %159 : vector<8x128xbf16> to vector<1x8x128xbf16>
    tpu.vector_store %arg6[%160, %c0_53, %c0_54], %163 {strides = array<i32>} : memref<8x8x128xbf16, #tpu.memory_space<vmem>>, vector<1x8x128xbf16>,
    %c5_i32 = arith.constant 5 : i32
    %c8_i32_55 = arith.constant 8 : i32
    %164 = arith.muli %c5_i32, %c8_i32_55 : i32
    %165 = tpu.assume_multiple %164, 8 : i32
    %166 = arith.index_cast %165 : i32 to index
    %c0_56 = arith.constant 0 : index
    %167 = vector.load %arg9[%166, %c0_56] : memref<64x512xf32, #tpu.memory_space<vmem>>, vector<8x512xf32>
    %168 = arith.truncf %158 : vector<8x128xf32> to vector<8x128xbf16>
    %cst_57 = arith.constant dense<0.000000e+00> : vector<8x512xf32>
    %169 = tpu.matmul %168, %11, %cst_57 {dimension_numbers = #tpu.dot_dimension_numbers<[1], [0], [0], [1], [0, 0, 1, 1], [], []>} : vector<8x128xbf16>, vector<128x512xbf16>, vector<8x512xf32> -> vector<8x512xf32>
    %170 = arith.addf %167, %169 : vector<8x512xf32>
    %171 = vector.extract_strided_slice %170 {offsets = [0, 0], sizes = [8, 384], strides = [1, 1]} : vector<8x512xf32> to vector<8x384xf32>
    %cst_58 = arith.constant 5.000000e-01 : f32
    %172 = vector.broadcast %cst_58 : f32 to vector<8x384xf32>
    %173 = arith.mulf %172, %171 : vector<8x384xf32>
    %174 = math.tanh %173 : vector<8x384xf32>
    %cst_59 = arith.constant 1.000000e+00 : f32
    %175 = vector.broadcast %cst_59 : f32 to vector<8x384xf32>
    %176 = arith.addf %174, %175 : vector<8x384xf32>
    %cst_60 = arith.constant 5.000000e-01 : f32
    %177 = vector.broadcast %cst_60 : f32 to vector<8x384xf32>
    %178 = arith.mulf %177, %176 : vector<8x384xf32>
    %179 = vector.extract_strided_slice %170 {offsets = [0, 384], sizes = [8, 128], strides = [1, 1]} : vector<8x512xf32> to vector<8x128xf32>
    %180 = math.tanh %179 : vector<8x128xf32>
    %181 = vector.extract_strided_slice %178 {offsets = [0, 0], sizes = [8, 128], strides = [1, 1]} : vector<8x384xf32> to vector<8x128xf32>
    %182 = arith.mulf %181, %155 : vector<8x128xf32>
    %183 = vector.extract_strided_slice %178 {offsets = [0, 128], sizes = [8, 128], strides = [1, 1]} : vector<8x384xf32> to vector<8x128xf32>
    %184 = arith.mulf %183, %180 : vector<8x128xf32>
    %185 = arith.addf %182, %184 : vector<8x128xf32>
    %186 = math.tanh %185 : vector<8x128xf32>
    %187 = vector.extract_strided_slice %178 {offsets = [0, 256], sizes = [8, 128], strides = [1, 1]} : vector<8x384xf32> to vector<8x128xf32>
    %188 = arith.mulf %186, %187 : vector<8x128xf32>
    %189 = arith.truncf %188 : vector<8x128xf32> to vector<8x128xbf16>
    %190 = arith.index_cast %c5_i32 : i32 to index
    %c0_61 = arith.constant 0 : index
    %c0_62 = arith.constant 0 : index
    %191 = vector.load %arg6[%190, %c0_61, %c0_62] : memref<8x8x128xbf16, #tpu.memory_space<vmem>>, vector<1x8x128xbf16>
    %192 = vector.shape_cast %191 : vector<1x8x128xbf16> to vector<8x128xbf16>
    %193 = vector.shape_cast %189 : vector<8x128xbf16> to vector<1x8x128xbf16>
    tpu.vector_store %arg6[%190, %c0_61, %c0_62], %193 {strides = array<i32>} : memref<8x8x128xbf16, #tpu.memory_space<vmem>>, vector<1x8x128xbf16>,
    %c6_i32 = arith.constant 6 : i32
    %c8_i32_63 = arith.constant 8 : i32
    %194 = arith.muli %c6_i32, %c8_i32_63 : i32
    %195 = tpu.assume_multiple %194, 8 : i32
    %196 = arith.index_cast %195 : i32 to index
    %c0_64 = arith.constant 0 : index
    %197 = vector.load %arg9[%196, %c0_64] : memref<64x512xf32, #tpu.memory_space<vmem>>, vector<8x512xf32>
    %198 = arith.truncf %188 : vector<8x128xf32> to vector<8x128xbf16>
    %cst_65 = arith.constant dense<0.000000e+00> : vector<8x512xf32>
    %199 = tpu.matmul %198, %11, %cst_65 {dimension_numbers = #tpu.dot_dimension_numbers<[1], [0], [0], [1], [0, 0, 1, 1], [], []>} : vector<8x128xbf16>, vector<128x512xbf16>, vector<8x512xf32> -> vector<8x512xf32>
    %200 = arith.addf %197, %199 : vector<8x512xf32>
    %201 = vector.extract_strided_slice %200 {offsets = [0, 0], sizes = [8, 384], strides = [1, 1]} : vector<8x512xf32> to vector<8x384xf32>
    %cst_66 = arith.constant 5.000000e-01 : f32
    %202 = vector.broadcast %cst_66 : f32 to vector<8x384xf32>
    %203 = arith.mulf %202, %201 : vector<8x384xf32>
    %204 = math.tanh %203 : vector<8x384xf32>
    %cst_67 = arith.constant 1.000000e+00 : f32
    %205 = vector.broadcast %cst_67 : f32 to vector<8x384xf32>
    %206 = arith.addf %204, %205 : vector<8x384xf32>
    %cst_68 = arith.constant 5.000000e-01 : f32
    %207 = vector.broadcast %cst_68 : f32 to vector<8x384xf32>
    %208 = arith.mulf %207, %206 : vector<8x384xf32>
    %209 = vector.extract_strided_slice %200 {offsets = [0, 384], sizes = [8, 128], strides = [1, 1]} : vector<8x512xf32> to vector<8x128xf32>
    %210 = math.tanh %209 : vector<8x128xf32>
    %211 = vector.extract_strided_slice %208 {offsets = [0, 0], sizes = [8, 128], strides = [1, 1]} : vector<8x384xf32> to vector<8x128xf32>
    %212 = arith.mulf %211, %185 : vector<8x128xf32>
    %213 = vector.extract_strided_slice %208 {offsets = [0, 128], sizes = [8, 128], strides = [1, 1]} : vector<8x384xf32> to vector<8x128xf32>
    %214 = arith.mulf %213, %210 : vector<8x128xf32>
    %215 = arith.addf %212, %214 : vector<8x128xf32>
    %216 = math.tanh %215 : vector<8x128xf32>
    %217 = vector.extract_strided_slice %208 {offsets = [0, 256], sizes = [8, 128], strides = [1, 1]} : vector<8x384xf32> to vector<8x128xf32>
    %218 = arith.mulf %216, %217 : vector<8x128xf32>
    %219 = arith.truncf %218 : vector<8x128xf32> to vector<8x128xbf16>
    %220 = arith.index_cast %c6_i32 : i32 to index
    %c0_69 = arith.constant 0 : index
    %c0_70 = arith.constant 0 : index
    %221 = vector.load %arg6[%220, %c0_69, %c0_70] : memref<8x8x128xbf16, #tpu.memory_space<vmem>>, vector<1x8x128xbf16>
    %222 = vector.shape_cast %221 : vector<1x8x128xbf16> to vector<8x128xbf16>
    %223 = vector.shape_cast %219 : vector<8x128xbf16> to vector<1x8x128xbf16>
    tpu.vector_store %arg6[%220, %c0_69, %c0_70], %223 {strides = array<i32>} : memref<8x8x128xbf16, #tpu.memory_space<vmem>>, vector<1x8x128xbf16>,
    %c7_i32 = arith.constant 7 : i32
    %c8_i32_71 = arith.constant 8 : i32
    %224 = arith.muli %c7_i32, %c8_i32_71 : i32
    %225 = tpu.assume_multiple %224, 8 : i32
    %226 = arith.index_cast %225 : i32 to index
    %c0_72 = arith.constant 0 : index
    %227 = vector.load %arg9[%226, %c0_72] : memref<64x512xf32, #tpu.memory_space<vmem>>, vector<8x512xf32>
    %228 = arith.truncf %218 : vector<8x128xf32> to vector<8x128xbf16>
    %cst_73 = arith.constant dense<0.000000e+00> : vector<8x512xf32>
    %229 = tpu.matmul %228, %11, %cst_73 {dimension_numbers = #tpu.dot_dimension_numbers<[1], [0], [0], [1], [0, 0, 1, 1], [], []>} : vector<8x128xbf16>, vector<128x512xbf16>, vector<8x512xf32> -> vector<8x512xf32>
    %230 = arith.addf %227, %229 : vector<8x512xf32>
    %231 = vector.extract_strided_slice %230 {offsets = [0, 0], sizes = [8, 384], strides = [1, 1]} : vector<8x512xf32> to vector<8x384xf32>
    %cst_74 = arith.constant 5.000000e-01 : f32
    %232 = vector.broadcast %cst_74 : f32 to vector<8x384xf32>
    %233 = arith.mulf %232, %231 : vector<8x384xf32>
    %234 = math.tanh %233 : vector<8x384xf32>
    %cst_75 = arith.constant 1.000000e+00 : f32
    %235 = vector.broadcast %cst_75 : f32 to vector<8x384xf32>
    %236 = arith.addf %234, %235 : vector<8x384xf32>
    %cst_76 = arith.constant 5.000000e-01 : f32
    %237 = vector.broadcast %cst_76 : f32 to vector<8x384xf32>
    %238 = arith.mulf %237, %236 : vector<8x384xf32>
    %239 = vector.extract_strided_slice %230 {offsets = [0, 384], sizes = [8, 128], strides = [1, 1]} : vector<8x512xf32> to vector<8x128xf32>
    %240 = math.tanh %239 : vector<8x128xf32>
    %241 = vector.extract_strided_slice %238 {offsets = [0, 0], sizes = [8, 128], strides = [1, 1]} : vector<8x384xf32> to vector<8x128xf32>
    %242 = arith.mulf %241, %215 : vector<8x128xf32>
    %243 = vector.extract_strided_slice %238 {offsets = [0, 128], sizes = [8, 128], strides = [1, 1]} : vector<8x384xf32> to vector<8x128xf32>
    %244 = arith.mulf %243, %240 : vector<8x128xf32>
    %245 = arith.addf %242, %244 : vector<8x128xf32>
    %246 = math.tanh %245 : vector<8x128xf32>
    %247 = vector.extract_strided_slice %238 {offsets = [0, 256], sizes = [8, 128], strides = [1, 1]} : vector<8x384xf32> to vector<8x128xf32>
    %248 = arith.mulf %246, %247 : vector<8x128xf32>
    %249 = arith.truncf %248 : vector<8x128xf32> to vector<8x128xbf16>
    %250 = arith.index_cast %c7_i32 : i32 to index
    %c0_77 = arith.constant 0 : index
    %c0_78 = arith.constant 0 : index
    %251 = vector.load %arg6[%250, %c0_77, %c0_78] : memref<8x8x128xbf16, #tpu.memory_space<vmem>>, vector<1x8x128xbf16>
    %252 = vector.shape_cast %251 : vector<1x8x128xbf16> to vector<8x128xbf16>
    %253 = vector.shape_cast %249 : vector<8x128xbf16> to vector<1x8x128xbf16>
    tpu.vector_store %arg6[%250, %c0_77, %c0_78], %253 {strides = array<i32>} : memref<8x8x128xbf16, #tpu.memory_space<vmem>>, vector<1x8x128xbf16>,
    %c8_i32_79 = arith.constant 8 : i32
    %c0_80 = arith.constant 0 : index
    %c0_81 = arith.constant 0 : index
    %254 = vector.load %arg7[%c0_80, %c0_81] : memref<8x128xf32, #tpu.memory_space<vmem>>, vector<8x128xf32>
    tpu.vector_store %arg7[%c0_80, %c0_81], %248 {strides = array<i32>} : memref<8x128xf32, #tpu.memory_space<vmem>>, vector<8x128xf32>,
    %c0_82 = arith.constant 0 : index
    %c0_83 = arith.constant 0 : index
    %255 = vector.load %arg8[%c0_82, %c0_83] : memref<8x128xf32, #tpu.memory_space<vmem>>, vector<8x128xf32>
    tpu.vector_store %arg8[%c0_82, %c0_83], %245 {strides = array<i32>} : memref<8x128xf32, #tpu.memory_space<vmem>>, vector<8x128xf32>,
    return
  }
  func.func @transform_0(%arg0: i32, %arg1: i32) -> (i32, i32, i32) {
    %c0_i32 = arith.constant 0 : i32
    %c0_i32_0 = arith.constant 0 : i32
    return %arg1, %arg0, %c0_i32 : i32, i32, i32
  }
  func.func @transform_1(%arg0: i32, %arg1: i32) -> (i32, i32) {
    %c0_i32 = arith.constant 0 : i32
    %c0_i32_0 = arith.constant 0 : i32
    %c0_i32_1 = arith.constant 0 : i32
    return %c0_i32, %c0_i32_0 : i32, i32
  }
  func.func @transform_2(%arg0: i32, %arg1: i32) -> (i32, i32) {
    %c0_i32 = arith.constant 0 : i32
    %c0_i32_0 = arith.constant 0 : i32
    %c0_i32_1 = arith.constant 0 : i32
    return %c0_i32, %c0_i32_0 : i32, i32
  }
  func.func @transform_3(%arg0: i32, %arg1: i32) -> (i32, i32) {
    %c0_i32 = arith.constant 0 : i32
    %c0_i32_0 = arith.constant 0 : i32
    %c0_i32_1 = arith.constant 0 : i32
    return %c0_i32, %c0_i32_0 : i32, i32
  }
  func.func @transform_4(%arg0: i32, %arg1: i32) -> (i32, i32, i32) {
    %c0_i32 = arith.constant 0 : i32
    %c0_i32_0 = arith.constant 0 : i32
    return %arg1, %arg0, %c0_i32 : i32, i32, i32
  }
  func.func @transform_5(%arg0: i32, %arg1: i32) -> (i32, i32) {
    %c0_i32 = arith.constant 0 : i32
    %c0_i32_0 = arith.constant 0 : i32
    return %arg0, %c0_i32 : i32, i32
  }
  func.func @transform_6(%arg0: i32, %arg1: i32) -> (i32, i32) {
    %c0_i32 = arith.constant 0 : i32
    %c0_i32_0 = arith.constant 0 : i32
    return %arg0, %c0_i32 : i32, i32
  }
}

module attributes {stable_mosaic.version = 11 : i64} {
  func.func @_lstm_chunk_kernel(%arg0: i32, %arg1: i32, %arg2: memref<8x8x128xbf16, #tpu.memory_space<vmem>>, %arg3: memref<128x512xbf16, #tpu.memory_space<vmem>>, %arg4: memref<128x512xbf16, #tpu.memory_space<vmem>>, %arg5: memref<1x512xf32, #tpu.memory_space<vmem>>, %arg6: memref<8x8x128xf32, #tpu.memory_space<vmem>>, %arg7: memref<8x128xf32, #tpu.memory_space<vmem>>, %arg8: memref<8x128xf32, #tpu.memory_space<vmem>>, %arg9: memref<64x512xf32, #tpu.memory_space<vmem>>) attributes {dimension_semantics = [#tpu.dimension_semantics<parallel>, #tpu.dimension_semantics<arbitrary>], iteration_bounds = array<i64: 1, 1>, scalar_prefetch = 0 : i64, scratch_operands = 1 : i64, tpu.core_type = #tpu.core_type<tc>, window_params = [{transform_indices = @transform_0, window_bounds = array<i64: 8, 8, 128>}, {pipeline_mode = #tpu.pipeline_mode<synchronous>, transform_indices = @transform_1, window_bounds = array<i64: 128, 512>}, {pipeline_mode = #tpu.pipeline_mode<synchronous>, transform_indices = @transform_2, window_bounds = array<i64: 128, 512>}, {pipeline_mode = #tpu.pipeline_mode<synchronous>, transform_indices = @transform_3, window_bounds = array<i64: 1, 512>}, {transform_indices = @transform_4, window_bounds = array<i64: 8, 8, 128>}, {transform_indices = @transform_5, window_bounds = array<i64: 8, 128>}, {transform_indices = @transform_6, window_bounds = array<i64: 8, 128>}]} {
    %c0_i32 = arith.constant 0 : i32
    %0 = arith.cmpi eq, %arg1, %c0_i32 : i32
    %1 = arith.extui %0 : i1 to i32
    %c0_i32_0 = arith.constant 0 : i32
    %2 = arith.cmpi ne, %1, %c0_i32_0 : i32
    scf.if %2 {
      %cst_84 = arith.constant 0.000000e+00 : f32
      %248 = vector.broadcast %cst_84 : f32 to vector<8x128xf32>
      %c0_85 = arith.constant 0 : index
      %c0_86 = arith.constant 0 : index
      %249 = vector.load %arg7[%c0_85, %c0_86] : memref<8x128xf32, #tpu.memory_space<vmem>>, vector<8x128xf32>
      tpu.vector_store %arg7[%c0_85, %c0_86], %248 {strides = array<i32>} : memref<8x128xf32, #tpu.memory_space<vmem>>, vector<8x128xf32>,
      %cst_87 = arith.constant 0.000000e+00 : f32
      %250 = vector.broadcast %cst_87 : f32 to vector<8x128xf32>
      %c0_88 = arith.constant 0 : index
      %c0_89 = arith.constant 0 : index
      %251 = vector.load %arg8[%c0_88, %c0_89] : memref<8x128xf32, #tpu.memory_space<vmem>>, vector<8x128xf32>
      tpu.vector_store %arg8[%c0_88, %c0_89], %250 {strides = array<i32>} : memref<8x128xf32, #tpu.memory_space<vmem>>, vector<8x128xf32>,
    } else {
    }
    %c0 = arith.constant 0 : index
    %c0_1 = arith.constant 0 : index
    %c0_2 = arith.constant 0 : index
    %3 = vector.load %arg2[%c0, %c0_1, %c0_2] : memref<8x8x128xbf16, #tpu.memory_space<vmem>>, vector<8x8x128xbf16>
    %4 = vector.shape_cast %3 : vector<8x8x128xbf16> to vector<64x128xbf16>
    %c0_3 = arith.constant 0 : index
    %c0_4 = arith.constant 0 : index
    %5 = vector.load %arg3[%c0_3, %c0_4] : memref<128x512xbf16, #tpu.memory_space<vmem>>, vector<128x512xbf16>
    %cst = arith.constant dense<0.000000e+00> : vector<64x512xf32>
    %6 = tpu.matmul %4, %5, %cst {dimension_numbers = #tpu.dot_dimension_numbers<[1], [0], [0], [1], [0, 0, 1, 1], [], []>} : vector<64x128xbf16>, vector<128x512xbf16>, vector<64x512xf32> -> vector<64x512xf32>
    %c0_5 = arith.constant 0 : index
    %c0_6 = arith.constant 0 : index
    %7 = vector.load %arg5[%c0_5, %c0_6] : memref<1x512xf32, #tpu.memory_space<vmem>>, vector<1x512xf32>
    %8 = vector.broadcast %7 : vector<1x512xf32> to vector<64x512xf32>
    %9 = arith.addf %6, %8 : vector<64x512xf32>
    %c0_7 = arith.constant 0 : index
    %c0_8 = arith.constant 0 : index
    %10 = vector.load %arg9[%c0_7, %c0_8] : memref<64x512xf32, #tpu.memory_space<vmem>>, vector<64x512xf32>
    tpu.vector_store %arg9[%c0_7, %c0_8], %9 {strides = array<i32>} : memref<64x512xf32, #tpu.memory_space<vmem>>, vector<64x512xf32>,
    %c0_9 = arith.constant 0 : index
    %c0_10 = arith.constant 0 : index
    %11 = vector.load %arg4[%c0_9, %c0_10] : memref<128x512xbf16, #tpu.memory_space<vmem>>, vector<128x512xbf16>
    %c0_11 = arith.constant 0 : index
    %c0_12 = arith.constant 0 : index
    %12 = vector.load %arg7[%c0_11, %c0_12] : memref<8x128xf32, #tpu.memory_space<vmem>>, vector<8x128xf32>
    %c0_13 = arith.constant 0 : index
    %c0_14 = arith.constant 0 : index
    %13 = vector.load %arg8[%c0_13, %c0_14] : memref<8x128xf32, #tpu.memory_space<vmem>>, vector<8x128xf32>
    %c0_i32_15 = arith.constant 0 : i32
    %c8_i32 = arith.constant 8 : i32
    %14 = arith.muli %c0_i32_15, %c8_i32 : i32
    %15 = tpu.assume_multiple %14, 8 : i32
    %16 = arith.index_cast %15 : i32 to index
    %c0_16 = arith.constant 0 : index
    %17 = vector.load %arg9[%16, %c0_16] : memref<64x512xf32, #tpu.memory_space<vmem>>, vector<8x512xf32>
    %18 = arith.truncf %12 : vector<8x128xf32> to vector<8x128xbf16>
    %cst_17 = arith.constant dense<0.000000e+00> : vector<8x512xf32>
    %19 = tpu.matmul %18, %11, %cst_17 {dimension_numbers = #tpu.dot_dimension_numbers<[1], [0], [0], [1], [0, 0, 1, 1], [], []>} : vector<8x128xbf16>, vector<128x512xbf16>, vector<8x512xf32> -> vector<8x512xf32>
    %20 = arith.addf %17, %19 : vector<8x512xf32>
    %21 = vector.extract_strided_slice %20 {offsets = [0, 0], sizes = [8, 384], strides = [1, 1]} : vector<8x512xf32> to vector<8x384xf32>
    %cst_18 = arith.constant 5.000000e-01 : f32
    %22 = vector.broadcast %cst_18 : f32 to vector<8x384xf32>
    %23 = arith.mulf %22, %21 : vector<8x384xf32>
    %24 = math.tanh %23 : vector<8x384xf32>
    %cst_19 = arith.constant 1.000000e+00 : f32
    %25 = vector.broadcast %cst_19 : f32 to vector<8x384xf32>
    %26 = arith.addf %24, %25 : vector<8x384xf32>
    %cst_20 = arith.constant 5.000000e-01 : f32
    %27 = vector.broadcast %cst_20 : f32 to vector<8x384xf32>
    %28 = arith.mulf %27, %26 : vector<8x384xf32>
    %29 = vector.extract_strided_slice %20 {offsets = [0, 384], sizes = [8, 128], strides = [1, 1]} : vector<8x512xf32> to vector<8x128xf32>
    %30 = math.tanh %29 : vector<8x128xf32>
    %31 = vector.extract_strided_slice %28 {offsets = [0, 0], sizes = [8, 128], strides = [1, 1]} : vector<8x384xf32> to vector<8x128xf32>
    %32 = arith.mulf %31, %13 : vector<8x128xf32>
    %33 = vector.extract_strided_slice %28 {offsets = [0, 128], sizes = [8, 128], strides = [1, 1]} : vector<8x384xf32> to vector<8x128xf32>
    %34 = arith.mulf %33, %30 : vector<8x128xf32>
    %35 = arith.addf %32, %34 : vector<8x128xf32>
    %36 = math.tanh %35 : vector<8x128xf32>
    %37 = vector.extract_strided_slice %28 {offsets = [0, 256], sizes = [8, 128], strides = [1, 1]} : vector<8x384xf32> to vector<8x128xf32>
    %38 = arith.mulf %36, %37 : vector<8x128xf32>
    %39 = arith.index_cast %c0_i32_15 : i32 to index
    %c0_21 = arith.constant 0 : index
    %c0_22 = arith.constant 0 : index
    %40 = vector.load %arg6[%39, %c0_21, %c0_22] : memref<8x8x128xf32, #tpu.memory_space<vmem>>, vector<1x8x128xf32>
    %41 = vector.shape_cast %40 : vector<1x8x128xf32> to vector<8x128xf32>
    %42 = vector.shape_cast %38 : vector<8x128xf32> to vector<1x8x128xf32>
    tpu.vector_store %arg6[%39, %c0_21, %c0_22], %42 {strides = array<i32>} : memref<8x8x128xf32, #tpu.memory_space<vmem>>, vector<1x8x128xf32>,
    %c1_i32 = arith.constant 1 : i32
    %c8_i32_23 = arith.constant 8 : i32
    %43 = arith.muli %c1_i32, %c8_i32_23 : i32
    %44 = tpu.assume_multiple %43, 8 : i32
    %45 = arith.index_cast %44 : i32 to index
    %c0_24 = arith.constant 0 : index
    %46 = vector.load %arg9[%45, %c0_24] : memref<64x512xf32, #tpu.memory_space<vmem>>, vector<8x512xf32>
    %47 = arith.truncf %38 : vector<8x128xf32> to vector<8x128xbf16>
    %cst_25 = arith.constant dense<0.000000e+00> : vector<8x512xf32>
    %48 = tpu.matmul %47, %11, %cst_25 {dimension_numbers = #tpu.dot_dimension_numbers<[1], [0], [0], [1], [0, 0, 1, 1], [], []>} : vector<8x128xbf16>, vector<128x512xbf16>, vector<8x512xf32> -> vector<8x512xf32>
    %49 = arith.addf %46, %48 : vector<8x512xf32>
    %50 = vector.extract_strided_slice %49 {offsets = [0, 0], sizes = [8, 384], strides = [1, 1]} : vector<8x512xf32> to vector<8x384xf32>
    %cst_26 = arith.constant 5.000000e-01 : f32
    %51 = vector.broadcast %cst_26 : f32 to vector<8x384xf32>
    %52 = arith.mulf %51, %50 : vector<8x384xf32>
    %53 = math.tanh %52 : vector<8x384xf32>
    %cst_27 = arith.constant 1.000000e+00 : f32
    %54 = vector.broadcast %cst_27 : f32 to vector<8x384xf32>
    %55 = arith.addf %53, %54 : vector<8x384xf32>
    %cst_28 = arith.constant 5.000000e-01 : f32
    %56 = vector.broadcast %cst_28 : f32 to vector<8x384xf32>
    %57 = arith.mulf %56, %55 : vector<8x384xf32>
    %58 = vector.extract_strided_slice %49 {offsets = [0, 384], sizes = [8, 128], strides = [1, 1]} : vector<8x512xf32> to vector<8x128xf32>
    %59 = math.tanh %58 : vector<8x128xf32>
    %60 = vector.extract_strided_slice %57 {offsets = [0, 0], sizes = [8, 128], strides = [1, 1]} : vector<8x384xf32> to vector<8x128xf32>
    %61 = arith.mulf %60, %35 : vector<8x128xf32>
    %62 = vector.extract_strided_slice %57 {offsets = [0, 128], sizes = [8, 128], strides = [1, 1]} : vector<8x384xf32> to vector<8x128xf32>
    %63 = arith.mulf %62, %59 : vector<8x128xf32>
    %64 = arith.addf %61, %63 : vector<8x128xf32>
    %65 = math.tanh %64 : vector<8x128xf32>
    %66 = vector.extract_strided_slice %57 {offsets = [0, 256], sizes = [8, 128], strides = [1, 1]} : vector<8x384xf32> to vector<8x128xf32>
    %67 = arith.mulf %65, %66 : vector<8x128xf32>
    %68 = arith.index_cast %c1_i32 : i32 to index
    %c0_29 = arith.constant 0 : index
    %c0_30 = arith.constant 0 : index
    %69 = vector.load %arg6[%68, %c0_29, %c0_30] : memref<8x8x128xf32, #tpu.memory_space<vmem>>, vector<1x8x128xf32>
    %70 = vector.shape_cast %69 : vector<1x8x128xf32> to vector<8x128xf32>
    %71 = vector.shape_cast %67 : vector<8x128xf32> to vector<1x8x128xf32>
    tpu.vector_store %arg6[%68, %c0_29, %c0_30], %71 {strides = array<i32>} : memref<8x8x128xf32, #tpu.memory_space<vmem>>, vector<1x8x128xf32>,
    %c2_i32 = arith.constant 2 : i32
    %c8_i32_31 = arith.constant 8 : i32
    %72 = arith.muli %c2_i32, %c8_i32_31 : i32
    %73 = tpu.assume_multiple %72, 8 : i32
    %74 = arith.index_cast %73 : i32 to index
    %c0_32 = arith.constant 0 : index
    %75 = vector.load %arg9[%74, %c0_32] : memref<64x512xf32, #tpu.memory_space<vmem>>, vector<8x512xf32>
    %76 = arith.truncf %67 : vector<8x128xf32> to vector<8x128xbf16>
    %cst_33 = arith.constant dense<0.000000e+00> : vector<8x512xf32>
    %77 = tpu.matmul %76, %11, %cst_33 {dimension_numbers = #tpu.dot_dimension_numbers<[1], [0], [0], [1], [0, 0, 1, 1], [], []>} : vector<8x128xbf16>, vector<128x512xbf16>, vector<8x512xf32> -> vector<8x512xf32>
    %78 = arith.addf %75, %77 : vector<8x512xf32>
    %79 = vector.extract_strided_slice %78 {offsets = [0, 0], sizes = [8, 384], strides = [1, 1]} : vector<8x512xf32> to vector<8x384xf32>
    %cst_34 = arith.constant 5.000000e-01 : f32
    %80 = vector.broadcast %cst_34 : f32 to vector<8x384xf32>
    %81 = arith.mulf %80, %79 : vector<8x384xf32>
    %82 = math.tanh %81 : vector<8x384xf32>
    %cst_35 = arith.constant 1.000000e+00 : f32
    %83 = vector.broadcast %cst_35 : f32 to vector<8x384xf32>
    %84 = arith.addf %82, %83 : vector<8x384xf32>
    %cst_36 = arith.constant 5.000000e-01 : f32
    %85 = vector.broadcast %cst_36 : f32 to vector<8x384xf32>
    %86 = arith.mulf %85, %84 : vector<8x384xf32>
    %87 = vector.extract_strided_slice %78 {offsets = [0, 384], sizes = [8, 128], strides = [1, 1]} : vector<8x512xf32> to vector<8x128xf32>
    %88 = math.tanh %87 : vector<8x128xf32>
    %89 = vector.extract_strided_slice %86 {offsets = [0, 0], sizes = [8, 128], strides = [1, 1]} : vector<8x384xf32> to vector<8x128xf32>
    %90 = arith.mulf %89, %64 : vector<8x128xf32>
    %91 = vector.extract_strided_slice %86 {offsets = [0, 128], sizes = [8, 128], strides = [1, 1]} : vector<8x384xf32> to vector<8x128xf32>
    %92 = arith.mulf %91, %88 : vector<8x128xf32>
    %93 = arith.addf %90, %92 : vector<8x128xf32>
    %94 = math.tanh %93 : vector<8x128xf32>
    %95 = vector.extract_strided_slice %86 {offsets = [0, 256], sizes = [8, 128], strides = [1, 1]} : vector<8x384xf32> to vector<8x128xf32>
    %96 = arith.mulf %94, %95 : vector<8x128xf32>
    %97 = arith.index_cast %c2_i32 : i32 to index
    %c0_37 = arith.constant 0 : index
    %c0_38 = arith.constant 0 : index
    %98 = vector.load %arg6[%97, %c0_37, %c0_38] : memref<8x8x128xf32, #tpu.memory_space<vmem>>, vector<1x8x128xf32>
    %99 = vector.shape_cast %98 : vector<1x8x128xf32> to vector<8x128xf32>
    %100 = vector.shape_cast %96 : vector<8x128xf32> to vector<1x8x128xf32>
    tpu.vector_store %arg6[%97, %c0_37, %c0_38], %100 {strides = array<i32>} : memref<8x8x128xf32, #tpu.memory_space<vmem>>, vector<1x8x128xf32>,
    %c3_i32 = arith.constant 3 : i32
    %c8_i32_39 = arith.constant 8 : i32
    %101 = arith.muli %c3_i32, %c8_i32_39 : i32
    %102 = tpu.assume_multiple %101, 8 : i32
    %103 = arith.index_cast %102 : i32 to index
    %c0_40 = arith.constant 0 : index
    %104 = vector.load %arg9[%103, %c0_40] : memref<64x512xf32, #tpu.memory_space<vmem>>, vector<8x512xf32>
    %105 = arith.truncf %96 : vector<8x128xf32> to vector<8x128xbf16>
    %cst_41 = arith.constant dense<0.000000e+00> : vector<8x512xf32>
    %106 = tpu.matmul %105, %11, %cst_41 {dimension_numbers = #tpu.dot_dimension_numbers<[1], [0], [0], [1], [0, 0, 1, 1], [], []>} : vector<8x128xbf16>, vector<128x512xbf16>, vector<8x512xf32> -> vector<8x512xf32>
    %107 = arith.addf %104, %106 : vector<8x512xf32>
    %108 = vector.extract_strided_slice %107 {offsets = [0, 0], sizes = [8, 384], strides = [1, 1]} : vector<8x512xf32> to vector<8x384xf32>
    %cst_42 = arith.constant 5.000000e-01 : f32
    %109 = vector.broadcast %cst_42 : f32 to vector<8x384xf32>
    %110 = arith.mulf %109, %108 : vector<8x384xf32>
    %111 = math.tanh %110 : vector<8x384xf32>
    %cst_43 = arith.constant 1.000000e+00 : f32
    %112 = vector.broadcast %cst_43 : f32 to vector<8x384xf32>
    %113 = arith.addf %111, %112 : vector<8x384xf32>
    %cst_44 = arith.constant 5.000000e-01 : f32
    %114 = vector.broadcast %cst_44 : f32 to vector<8x384xf32>
    %115 = arith.mulf %114, %113 : vector<8x384xf32>
    %116 = vector.extract_strided_slice %107 {offsets = [0, 384], sizes = [8, 128], strides = [1, 1]} : vector<8x512xf32> to vector<8x128xf32>
    %117 = math.tanh %116 : vector<8x128xf32>
    %118 = vector.extract_strided_slice %115 {offsets = [0, 0], sizes = [8, 128], strides = [1, 1]} : vector<8x384xf32> to vector<8x128xf32>
    %119 = arith.mulf %118, %93 : vector<8x128xf32>
    %120 = vector.extract_strided_slice %115 {offsets = [0, 128], sizes = [8, 128], strides = [1, 1]} : vector<8x384xf32> to vector<8x128xf32>
    %121 = arith.mulf %120, %117 : vector<8x128xf32>
    %122 = arith.addf %119, %121 : vector<8x128xf32>
    %123 = math.tanh %122 : vector<8x128xf32>
    %124 = vector.extract_strided_slice %115 {offsets = [0, 256], sizes = [8, 128], strides = [1, 1]} : vector<8x384xf32> to vector<8x128xf32>
    %125 = arith.mulf %123, %124 : vector<8x128xf32>
    %126 = arith.index_cast %c3_i32 : i32 to index
    %c0_45 = arith.constant 0 : index
    %c0_46 = arith.constant 0 : index
    %127 = vector.load %arg6[%126, %c0_45, %c0_46] : memref<8x8x128xf32, #tpu.memory_space<vmem>>, vector<1x8x128xf32>
    %128 = vector.shape_cast %127 : vector<1x8x128xf32> to vector<8x128xf32>
    %129 = vector.shape_cast %125 : vector<8x128xf32> to vector<1x8x128xf32>
    tpu.vector_store %arg6[%126, %c0_45, %c0_46], %129 {strides = array<i32>} : memref<8x8x128xf32, #tpu.memory_space<vmem>>, vector<1x8x128xf32>,
    %c4_i32 = arith.constant 4 : i32
    %c8_i32_47 = arith.constant 8 : i32
    %130 = arith.muli %c4_i32, %c8_i32_47 : i32
    %131 = tpu.assume_multiple %130, 8 : i32
    %132 = arith.index_cast %131 : i32 to index
    %c0_48 = arith.constant 0 : index
    %133 = vector.load %arg9[%132, %c0_48] : memref<64x512xf32, #tpu.memory_space<vmem>>, vector<8x512xf32>
    %134 = arith.truncf %125 : vector<8x128xf32> to vector<8x128xbf16>
    %cst_49 = arith.constant dense<0.000000e+00> : vector<8x512xf32>
    %135 = tpu.matmul %134, %11, %cst_49 {dimension_numbers = #tpu.dot_dimension_numbers<[1], [0], [0], [1], [0, 0, 1, 1], [], []>} : vector<8x128xbf16>, vector<128x512xbf16>, vector<8x512xf32> -> vector<8x512xf32>
    %136 = arith.addf %133, %135 : vector<8x512xf32>
    %137 = vector.extract_strided_slice %136 {offsets = [0, 0], sizes = [8, 384], strides = [1, 1]} : vector<8x512xf32> to vector<8x384xf32>
    %cst_50 = arith.constant 5.000000e-01 : f32
    %138 = vector.broadcast %cst_50 : f32 to vector<8x384xf32>
    %139 = arith.mulf %138, %137 : vector<8x384xf32>
    %140 = math.tanh %139 : vector<8x384xf32>
    %cst_51 = arith.constant 1.000000e+00 : f32
    %141 = vector.broadcast %cst_51 : f32 to vector<8x384xf32>
    %142 = arith.addf %140, %141 : vector<8x384xf32>
    %cst_52 = arith.constant 5.000000e-01 : f32
    %143 = vector.broadcast %cst_52 : f32 to vector<8x384xf32>
    %144 = arith.mulf %143, %142 : vector<8x384xf32>
    %145 = vector.extract_strided_slice %136 {offsets = [0, 384], sizes = [8, 128], strides = [1, 1]} : vector<8x512xf32> to vector<8x128xf32>
    %146 = math.tanh %145 : vector<8x128xf32>
    %147 = vector.extract_strided_slice %144 {offsets = [0, 0], sizes = [8, 128], strides = [1, 1]} : vector<8x384xf32> to vector<8x128xf32>
    %148 = arith.mulf %147, %122 : vector<8x128xf32>
    %149 = vector.extract_strided_slice %144 {offsets = [0, 128], sizes = [8, 128], strides = [1, 1]} : vector<8x384xf32> to vector<8x128xf32>
    %150 = arith.mulf %149, %146 : vector<8x128xf32>
    %151 = arith.addf %148, %150 : vector<8x128xf32>
    %152 = math.tanh %151 : vector<8x128xf32>
    %153 = vector.extract_strided_slice %144 {offsets = [0, 256], sizes = [8, 128], strides = [1, 1]} : vector<8x384xf32> to vector<8x128xf32>
    %154 = arith.mulf %152, %153 : vector<8x128xf32>
    %155 = arith.index_cast %c4_i32 : i32 to index
    %c0_53 = arith.constant 0 : index
    %c0_54 = arith.constant 0 : index
    %156 = vector.load %arg6[%155, %c0_53, %c0_54] : memref<8x8x128xf32, #tpu.memory_space<vmem>>, vector<1x8x128xf32>
    %157 = vector.shape_cast %156 : vector<1x8x128xf32> to vector<8x128xf32>
    %158 = vector.shape_cast %154 : vector<8x128xf32> to vector<1x8x128xf32>
    tpu.vector_store %arg6[%155, %c0_53, %c0_54], %158 {strides = array<i32>} : memref<8x8x128xf32, #tpu.memory_space<vmem>>, vector<1x8x128xf32>,
    %c5_i32 = arith.constant 5 : i32
    %c8_i32_55 = arith.constant 8 : i32
    %159 = arith.muli %c5_i32, %c8_i32_55 : i32
    %160 = tpu.assume_multiple %159, 8 : i32
    %161 = arith.index_cast %160 : i32 to index
    %c0_56 = arith.constant 0 : index
    %162 = vector.load %arg9[%161, %c0_56] : memref<64x512xf32, #tpu.memory_space<vmem>>, vector<8x512xf32>
    %163 = arith.truncf %154 : vector<8x128xf32> to vector<8x128xbf16>
    %cst_57 = arith.constant dense<0.000000e+00> : vector<8x512xf32>
    %164 = tpu.matmul %163, %11, %cst_57 {dimension_numbers = #tpu.dot_dimension_numbers<[1], [0], [0], [1], [0, 0, 1, 1], [], []>} : vector<8x128xbf16>, vector<128x512xbf16>, vector<8x512xf32> -> vector<8x512xf32>
    %165 = arith.addf %162, %164 : vector<8x512xf32>
    %166 = vector.extract_strided_slice %165 {offsets = [0, 0], sizes = [8, 384], strides = [1, 1]} : vector<8x512xf32> to vector<8x384xf32>
    %cst_58 = arith.constant 5.000000e-01 : f32
    %167 = vector.broadcast %cst_58 : f32 to vector<8x384xf32>
    %168 = arith.mulf %167, %166 : vector<8x384xf32>
    %169 = math.tanh %168 : vector<8x384xf32>
    %cst_59 = arith.constant 1.000000e+00 : f32
    %170 = vector.broadcast %cst_59 : f32 to vector<8x384xf32>
    %171 = arith.addf %169, %170 : vector<8x384xf32>
    %cst_60 = arith.constant 5.000000e-01 : f32
    %172 = vector.broadcast %cst_60 : f32 to vector<8x384xf32>
    %173 = arith.mulf %172, %171 : vector<8x384xf32>
    %174 = vector.extract_strided_slice %165 {offsets = [0, 384], sizes = [8, 128], strides = [1, 1]} : vector<8x512xf32> to vector<8x128xf32>
    %175 = math.tanh %174 : vector<8x128xf32>
    %176 = vector.extract_strided_slice %173 {offsets = [0, 0], sizes = [8, 128], strides = [1, 1]} : vector<8x384xf32> to vector<8x128xf32>
    %177 = arith.mulf %176, %151 : vector<8x128xf32>
    %178 = vector.extract_strided_slice %173 {offsets = [0, 128], sizes = [8, 128], strides = [1, 1]} : vector<8x384xf32> to vector<8x128xf32>
    %179 = arith.mulf %178, %175 : vector<8x128xf32>
    %180 = arith.addf %177, %179 : vector<8x128xf32>
    %181 = math.tanh %180 : vector<8x128xf32>
    %182 = vector.extract_strided_slice %173 {offsets = [0, 256], sizes = [8, 128], strides = [1, 1]} : vector<8x384xf32> to vector<8x128xf32>
    %183 = arith.mulf %181, %182 : vector<8x128xf32>
    %184 = arith.index_cast %c5_i32 : i32 to index
    %c0_61 = arith.constant 0 : index
    %c0_62 = arith.constant 0 : index
    %185 = vector.load %arg6[%184, %c0_61, %c0_62] : memref<8x8x128xf32, #tpu.memory_space<vmem>>, vector<1x8x128xf32>
    %186 = vector.shape_cast %185 : vector<1x8x128xf32> to vector<8x128xf32>
    %187 = vector.shape_cast %183 : vector<8x128xf32> to vector<1x8x128xf32>
    tpu.vector_store %arg6[%184, %c0_61, %c0_62], %187 {strides = array<i32>} : memref<8x8x128xf32, #tpu.memory_space<vmem>>, vector<1x8x128xf32>,
    %c6_i32 = arith.constant 6 : i32
    %c8_i32_63 = arith.constant 8 : i32
    %188 = arith.muli %c6_i32, %c8_i32_63 : i32
    %189 = tpu.assume_multiple %188, 8 : i32
    %190 = arith.index_cast %189 : i32 to index
    %c0_64 = arith.constant 0 : index
    %191 = vector.load %arg9[%190, %c0_64] : memref<64x512xf32, #tpu.memory_space<vmem>>, vector<8x512xf32>
    %192 = arith.truncf %183 : vector<8x128xf32> to vector<8x128xbf16>
    %cst_65 = arith.constant dense<0.000000e+00> : vector<8x512xf32>
    %193 = tpu.matmul %192, %11, %cst_65 {dimension_numbers = #tpu.dot_dimension_numbers<[1], [0], [0], [1], [0, 0, 1, 1], [], []>} : vector<8x128xbf16>, vector<128x512xbf16>, vector<8x512xf32> -> vector<8x512xf32>
    %194 = arith.addf %191, %193 : vector<8x512xf32>
    %195 = vector.extract_strided_slice %194 {offsets = [0, 0], sizes = [8, 384], strides = [1, 1]} : vector<8x512xf32> to vector<8x384xf32>
    %cst_66 = arith.constant 5.000000e-01 : f32
    %196 = vector.broadcast %cst_66 : f32 to vector<8x384xf32>
    %197 = arith.mulf %196, %195 : vector<8x384xf32>
    %198 = math.tanh %197 : vector<8x384xf32>
    %cst_67 = arith.constant 1.000000e+00 : f32
    %199 = vector.broadcast %cst_67 : f32 to vector<8x384xf32>
    %200 = arith.addf %198, %199 : vector<8x384xf32>
    %cst_68 = arith.constant 5.000000e-01 : f32
    %201 = vector.broadcast %cst_68 : f32 to vector<8x384xf32>
    %202 = arith.mulf %201, %200 : vector<8x384xf32>
    %203 = vector.extract_strided_slice %194 {offsets = [0, 384], sizes = [8, 128], strides = [1, 1]} : vector<8x512xf32> to vector<8x128xf32>
    %204 = math.tanh %203 : vector<8x128xf32>
    %205 = vector.extract_strided_slice %202 {offsets = [0, 0], sizes = [8, 128], strides = [1, 1]} : vector<8x384xf32> to vector<8x128xf32>
    %206 = arith.mulf %205, %180 : vector<8x128xf32>
    %207 = vector.extract_strided_slice %202 {offsets = [0, 128], sizes = [8, 128], strides = [1, 1]} : vector<8x384xf32> to vector<8x128xf32>
    %208 = arith.mulf %207, %204 : vector<8x128xf32>
    %209 = arith.addf %206, %208 : vector<8x128xf32>
    %210 = math.tanh %209 : vector<8x128xf32>
    %211 = vector.extract_strided_slice %202 {offsets = [0, 256], sizes = [8, 128], strides = [1, 1]} : vector<8x384xf32> to vector<8x128xf32>
    %212 = arith.mulf %210, %211 : vector<8x128xf32>
    %213 = arith.index_cast %c6_i32 : i32 to index
    %c0_69 = arith.constant 0 : index
    %c0_70 = arith.constant 0 : index
    %214 = vector.load %arg6[%213, %c0_69, %c0_70] : memref<8x8x128xf32, #tpu.memory_space<vmem>>, vector<1x8x128xf32>
    %215 = vector.shape_cast %214 : vector<1x8x128xf32> to vector<8x128xf32>
    %216 = vector.shape_cast %212 : vector<8x128xf32> to vector<1x8x128xf32>
    tpu.vector_store %arg6[%213, %c0_69, %c0_70], %216 {strides = array<i32>} : memref<8x8x128xf32, #tpu.memory_space<vmem>>, vector<1x8x128xf32>,
    %c7_i32 = arith.constant 7 : i32
    %c8_i32_71 = arith.constant 8 : i32
    %217 = arith.muli %c7_i32, %c8_i32_71 : i32
    %218 = tpu.assume_multiple %217, 8 : i32
    %219 = arith.index_cast %218 : i32 to index
    %c0_72 = arith.constant 0 : index
    %220 = vector.load %arg9[%219, %c0_72] : memref<64x512xf32, #tpu.memory_space<vmem>>, vector<8x512xf32>
    %221 = arith.truncf %212 : vector<8x128xf32> to vector<8x128xbf16>
    %cst_73 = arith.constant dense<0.000000e+00> : vector<8x512xf32>
    %222 = tpu.matmul %221, %11, %cst_73 {dimension_numbers = #tpu.dot_dimension_numbers<[1], [0], [0], [1], [0, 0, 1, 1], [], []>} : vector<8x128xbf16>, vector<128x512xbf16>, vector<8x512xf32> -> vector<8x512xf32>
    %223 = arith.addf %220, %222 : vector<8x512xf32>
    %224 = vector.extract_strided_slice %223 {offsets = [0, 0], sizes = [8, 384], strides = [1, 1]} : vector<8x512xf32> to vector<8x384xf32>
    %cst_74 = arith.constant 5.000000e-01 : f32
    %225 = vector.broadcast %cst_74 : f32 to vector<8x384xf32>
    %226 = arith.mulf %225, %224 : vector<8x384xf32>
    %227 = math.tanh %226 : vector<8x384xf32>
    %cst_75 = arith.constant 1.000000e+00 : f32
    %228 = vector.broadcast %cst_75 : f32 to vector<8x384xf32>
    %229 = arith.addf %227, %228 : vector<8x384xf32>
    %cst_76 = arith.constant 5.000000e-01 : f32
    %230 = vector.broadcast %cst_76 : f32 to vector<8x384xf32>
    %231 = arith.mulf %230, %229 : vector<8x384xf32>
    %232 = vector.extract_strided_slice %223 {offsets = [0, 384], sizes = [8, 128], strides = [1, 1]} : vector<8x512xf32> to vector<8x128xf32>
    %233 = math.tanh %232 : vector<8x128xf32>
    %234 = vector.extract_strided_slice %231 {offsets = [0, 0], sizes = [8, 128], strides = [1, 1]} : vector<8x384xf32> to vector<8x128xf32>
    %235 = arith.mulf %234, %209 : vector<8x128xf32>
    %236 = vector.extract_strided_slice %231 {offsets = [0, 128], sizes = [8, 128], strides = [1, 1]} : vector<8x384xf32> to vector<8x128xf32>
    %237 = arith.mulf %236, %233 : vector<8x128xf32>
    %238 = arith.addf %235, %237 : vector<8x128xf32>
    %239 = math.tanh %238 : vector<8x128xf32>
    %240 = vector.extract_strided_slice %231 {offsets = [0, 256], sizes = [8, 128], strides = [1, 1]} : vector<8x384xf32> to vector<8x128xf32>
    %241 = arith.mulf %239, %240 : vector<8x128xf32>
    %242 = arith.index_cast %c7_i32 : i32 to index
    %c0_77 = arith.constant 0 : index
    %c0_78 = arith.constant 0 : index
    %243 = vector.load %arg6[%242, %c0_77, %c0_78] : memref<8x8x128xf32, #tpu.memory_space<vmem>>, vector<1x8x128xf32>
    %244 = vector.shape_cast %243 : vector<1x8x128xf32> to vector<8x128xf32>
    %245 = vector.shape_cast %241 : vector<8x128xf32> to vector<1x8x128xf32>
    tpu.vector_store %arg6[%242, %c0_77, %c0_78], %245 {strides = array<i32>} : memref<8x8x128xf32, #tpu.memory_space<vmem>>, vector<1x8x128xf32>,
    %c8_i32_79 = arith.constant 8 : i32
    %c0_80 = arith.constant 0 : index
    %c0_81 = arith.constant 0 : index
    %246 = vector.load %arg7[%c0_80, %c0_81] : memref<8x128xf32, #tpu.memory_space<vmem>>, vector<8x128xf32>
    tpu.vector_store %arg7[%c0_80, %c0_81], %241 {strides = array<i32>} : memref<8x128xf32, #tpu.memory_space<vmem>>, vector<8x128xf32>,
    %c0_82 = arith.constant 0 : index
    %c0_83 = arith.constant 0 : index
    %247 = vector.load %arg8[%c0_82, %c0_83] : memref<8x128xf32, #tpu.memory_space<vmem>>, vector<8x128xf32>
    tpu.vector_store %arg8[%c0_82, %c0_83], %238 {strides = array<i32>} : memref<8x128xf32, #tpu.memory_space<vmem>>, vector<8x128xf32>,
    return
  }
  func.func @transform_0(%arg0: i32, %arg1: i32) -> (i32, i32, i32) {
    %c0_i32 = arith.constant 0 : i32
    %c0_i32_0 = arith.constant 0 : i32
    return %arg1, %arg0, %c0_i32 : i32, i32, i32
  }
  func.func @transform_1(%arg0: i32, %arg1: i32) -> (i32, i32) {
    %c0_i32 = arith.constant 0 : i32
    %c0_i32_0 = arith.constant 0 : i32
    %c0_i32_1 = arith.constant 0 : i32
    return %c0_i32, %c0_i32_0 : i32, i32
  }
  func.func @transform_2(%arg0: i32, %arg1: i32) -> (i32, i32) {
    %c0_i32 = arith.constant 0 : i32
    %c0_i32_0 = arith.constant 0 : i32
    %c0_i32_1 = arith.constant 0 : i32
    return %c0_i32, %c0_i32_0 : i32, i32
  }
  func.func @transform_3(%arg0: i32, %arg1: i32) -> (i32, i32) {
    %c0_i32 = arith.constant 0 : i32
    %c0_i32_0 = arith.constant 0 : i32
    %c0_i32_1 = arith.constant 0 : i32
    return %c0_i32, %c0_i32_0 : i32, i32
  }
  func.func @transform_4(%arg0: i32, %arg1: i32) -> (i32, i32, i32) {
    %c0_i32 = arith.constant 0 : i32
    %c0_i32_0 = arith.constant 0 : i32
    return %arg1, %arg0, %c0_i32 : i32, i32, i32
  }
  func.func @transform_5(%arg0: i32, %arg1: i32) -> (i32, i32) {
    %c0_i32 = arith.constant 0 : i32
    %c0_i32_0 = arith.constant 0 : i32
    return %arg0, %c0_i32 : i32, i32
  }
  func.func @transform_6(%arg0: i32, %arg1: i32) -> (i32, i32) {
    %c0_i32 = arith.constant 0 : i32
    %c0_i32_0 = arith.constant 0 : i32
    return %arg0, %c0_i32 : i32, i32
  }
}

</mosaic_0001>

<llo_original>
// kernel: _lambda_.2
$region0: #{_lambda_.2}
  #allocation0 [shape = 'u32[]', space=smem, size = 0x4, offset = 0x4, fixed_abs, tag = 'smem constant byte address 0x4 - core index']
  #allocation1 [shape = 'u32[72,128]{1,0:T(1,128)}', space=vmem, size = 0x9000, scoped, tag = 'internal scratch']
  #allocation2 [shape = 'f32[64,512]{1,0:T(8,128)}', space=vmem, size = 0x20000, scoped, tag = 'scratch operand']
  %s0 = inlined_call_operand.vmem [shape: bf16[8,8,4], index: 0, kind: input, shape index: {}]
  %s1 = inlined_call_operand.vmem [shape: bf16[4,512], index: 1, kind: input, shape index: {}]
  %s2 = inlined_call_operand.hbm [shape: bf16[128,512], index: 2, kind: input, shape index: {}]
  %s3 = inlined_call_operand.vmem [shape: f32[1,512], index: 3, kind: input, shape index: {}]
  %s4 = inlined_call_operand.vmem [shape: bf16[8,8,128], index: 4, kind: output, shape index: {0}]
  %s5 = inlined_call_operand.vmem [shape: f32[8,128], index: 5, kind: output, shape index: {1}]
  %s6 = inlined_call_operand.vmem [shape: f32[8,128], index: 6, kind: output, shape index: {2}]
  %7 = xla_tuple %s4, %s5, %s6
  %s8 = sld [smem:[#allocation0]]
  $region50: #{_lambda_.2} parent=0
    _
  %s10 = ssub.s32 1, %s8
  %s11 = scalar_select 0, %s10, %s8
  $region1: #{_lambda_.2} parent=0
    #allocation3 [shape = 'u8[131072]{0}', space=vmem, size = 0x20000, scoped, tag = 'input window, operand 2, single buffered']
    #allocation4 [shape = 's32[1]{0}', space=sflag, size = 0x4, scoped, tag = 'scoped memory for _lambda_.2']
    %12 = vsyncpa [#allocation4], 0
    // Predicated region
    $region2: #{_lambda_.2} parent=1 // pred_check
      _
    $region3: #{_lambda_.2} parent=1 // pred_check_branch
      %14 = sbr.rel (0) target = $region5
    $region4: #{_lambda_.2} parent=1 // pred_region
      _
    $region5: #{_lambda_.2} parent=1 // pred_fallthru
      _
    // Predicated region
    $region6: #{_lambda_.2} parent=1 // pred_check
      _
    $region7: #{_lambda_.2} parent=1 // pred_check_branch
      %16 = sbr.rel (0) target = $region9
    $region8: #{_lambda_.2} parent=1 // pred_region
      _
    $region9: #{_lambda_.2} parent=1 // pred_fallthru
      _
    // Predicated region
    $region10: #{_lambda_.2} parent=1 // pred_check
      _
    $region11: #{_lambda_.2} parent=1 // pred_check_branch
      %18 = sbr.rel (0) target = $region13
    $region12: #{_lambda_.2} parent=1 // pred_region
      %20 = vsyncadd [#allocation4], 0
      %s21 = sshll.u32 %s2, 4
      %s22 = int_to_ptr.hbm [resolvable:$true] %s21
      %s23 = sshll.u32 [#allocation3], 4
      %s24 = int_to_ptr.vmem [resolvable:$true] %s23
      %29 = dma.hbm_to_vmem [thread:$0]  %s22, 4096, %s24, [#allocation4], 256, 256, 16
    $region13: #{_lambda_.2} parent=1 // pred_fallthru
      _
    // Predicated region
    $region14: #{_lambda_.2} parent=1 // pred_check
      _
    $region15: #{_lambda_.2} parent=1 // pred_check_branch
      %31 = sbr.rel (0) target = $region17
    $region16: #{_lambda_.2} parent=1 // pred_region
      _
    $region17: #{_lambda_.2} parent=1 // pred_fallthru
      _
    // Predicated region
    $region18: #{_lambda_.2} parent=1 // pred_check
      _
    $region19: #{_lambda_.2} parent=1 // pred_check_branch
      %33 = sbr.rel (0) target = $region21
    $region20: #{_lambda_.2} parent=1 // pred_region
      %35 = dma.done [#allocation4], 4096
    $region21: #{_lambda_.2} parent=1 // pred_fallthru
      _
    %p37 = scmp.eq.s32.totalorder 0, 0
    // Predicated region
    $region22: #{_lambda_.2} parent=1 // pred_check
      %p38 = pneg %p37
    $region23: #{_lambda_.2} parent=1 // pred_check_branch
      %40 = sbr.rel (%p38) target = $region25
    $region24: #{_lambda_.2} parent=1 // pred_region
      %41 = vst [vmem:[%s5] sm:$0xff] 0.0
      %42 = vst [vmem:[%s6] sm:$0xff] 0.0
    $region25: #{_lambda_.2} parent=1 // pred_fallthru
      _
    %v43 = vld [vmem:[%s0] sm:$0xf]
    %v44 = vld [vmem:[%s0 + $0x4] sm:$0xf]
    %v45 = vld [vmem:[%s0 + $0x8] sm:$0xf]
    %v46 = vld [vmem:[%s0 + $0xc] sm:$0xf]
    %v47 = vld [vmem:[%s0 + $0x10] sm:$0xf]
    %v48 = vld [vmem:[%s0 + $0x14] sm:$0xf]
    %v49 = vld [vmem:[%s0 + $0x18] sm:$0xf]
    %v50 = vld [vmem:[%s0 + $0x1c] sm:$0xf]
    %v51 = vld [vmem:[%s1] sm:$0xff]
    %v52 = vld [vmem:[%s3] sm:$0xf]
    %v54 = vperm.slane %v52, 0
    %v55 = vperm.slane %v52, 1
    %v56 = vperm.slane %v52, 2
    %v57 = vperm.slane %v52, 3
    %v70 = vunpack.c.l.b16 %v43
    %v71 = vunpack.c.l.b16 %v44
    %v72 = vunpack.c.l.b16 %v45
    %v73 = vunpack.c.l.b16 %v46
    %v74 = vunpack.c.l.b16 %v47
    %v75 = vunpack.c.l.b16 %v48
    %v76 = vunpack.c.l.b16 %v49
    %v77 = vunpack.c.l.b16 %v50
    %v78 = vpack.c.b16 %v71, %v70
    %v79 = vpack.c.b16 %v73, %v72
    %v80 = vpack.c.b16 %v75, %v74
    %v81 = vpack.c.b16 %v77, %v76
    %83 = vst [vmem:[#allocation1] ss:$4 sm:$0xff] %v51
    %v84 = vld.sshfl [vmem:[#allocation1] sm:$0xff pattern:$0x73625140]
    %v85 = vld.sshfl [vmem:[#allocation1 + $0x8] sm:$0xff pattern:$0x73625140]
    %v86 = vld.sshfl [vmem:[#allocation1 + $0x10] sm:$0xff pattern:$0x73625140]
    %v87 = vld.sshfl [vmem:[#allocation1 + $0x18] sm:$0xff pattern:$0x73625140]
    %vm88 = vcmask 31744
    %v90 = vsel %vm88, %v78, 0
    %v93 = vsel %vm88, %v79, 0
    %v96 = vsel %vm88, %v80, 0
    %v99 = vsel %vm88, %v81, 0
    %vm101 = vcmask 1041408
    %v102 = vsel %vm101, %v84, 0
    %v104 = vsel %vm101, %v85, 0
    %v106 = vsel %vm101, %v86, 0
    %v108 = vsel %vm101, %v87, 0
    %110 = vmatpush.bf16.msra.mxu0 0
    %111 = vmatpush.bf16.msra.mxu0 0
    %112 = vmatpush.bf16.msra.mxu0 0
    %113 = vmatpush.bf16.msra.mxu0 0
    %114 = vmatpush.bf16.msra.mxu0 0
    %115 = vmatpush.bf16.msra.mxu0 0
    %116 = vmatpush.bf16.msra.mxu0 0
    %117 = vmatpush.bf16.msra.mxu0 %v102
    %118 = vmatmul.bf16.gmra.mxu0 %v90
    %v119 = vpop.f32.mrf.mxu0
    %v120 = vadd.f32 %v54, %v119
    %v121 = vpop.f32.mrf.mxu0
    %v122 = vadd.f32 %v54, %v121
    %123 = vmatmul.bf16.gmra.mxu0 %v93
    %v124 = vpop.f32.mrf.mxu0
    %v125 = vadd.f32 %v54, %v124
    %v126 = vpop.f32.mrf.mxu0
    %v127 = vadd.f32 %v54, %v126
    %128 = vmatmul.bf16.gmra.mxu0 %v96
    %v129 = vpop.f32.mrf.mxu0
    %v130 = vadd.f32 %v54, %v129
    %v131 = vpop.f32.mrf.mxu0
    %v132 = vadd.f32 %v54, %v131
    %133 = vmatmul.bf16.gmra.mxu0 %v99
    %v134 = vpop.f32.mrf.mxu0
    %v135 = vadd.f32 %v54, %v134
    %v136 = vpop.f32.mrf.mxu0
    %v137 = vadd.f32 %v54, %v136
    %138 = vdwg.mxu0
    %139 = vmatpush.bf16.msra.mxu0 0
    %140 = vmatpush.bf16.msra.mxu0 0
    %141 = vmatpush.bf16.msra.mxu0 0
    %142 = vmatpush.bf16.msra.mxu0 0
    %143 = vmatpush.bf16.msra.mxu0 0
    %144 = vmatpush.bf16.msra.mxu0 0
    %145 = vmatpush.bf16.msra.mxu0 0
    %146 = vmatpush.bf16.msra.mxu0 %v104
    %147 = vmatmul.bf16.gmra.mxu0 %v90
    %v148 = vpop.f32.mrf.mxu0
    %v149 = vadd.f32 %v55, %v148
    %v150 = vpop.f32.mrf.mxu0
    %v151 = vadd.f32 %v55, %v150
    %152 = vmatmul.bf16.gmra.mxu0 %v93
    %v153 = vpop.f32.mrf.mxu0
    %v154 = vadd.f32 %v55, %v153
    %v155 = vpop.f32.mrf.mxu0
    %v156 = vadd.f32 %v55, %v155
    %157 = vmatmul.bf16.gmra.mxu0 %v96
    %v158 = vpop.f32.mrf.mxu0
    %v159 = vadd.f32 %v55, %v158
    %v160 = vpop.f32.mrf.mxu0
    %v161 = vadd.f32 %v55, %v160
    %162 = vmatmul.bf16.gmra.mxu0 %v99
    %v163 = vpop.f32.mrf.mxu0
    %v164 = vadd.f32 %v55, %v163
    %v165 = vpop.f32.mrf.mxu0
    %v166 = vadd.f32 %v55, %v165
    %167 = vdwg.mxu0
    %168 = vmatpush.bf16.msra.mxu0 0
    %169 = vmatpush.bf16.msra.mxu0 0
    %170 = vmatpush.bf16.msra.mxu0 0
    %171 = vmatpush.bf16.msra.mxu0 0
    %172 = vmatpush.bf16.msra.mxu0 0
    %173 = vmatpush.bf16.msra.mxu0 0
    %174 = vmatpush.bf16.msra.mxu0 0
    %175 = vmatpush.bf16.msra.mxu0 %v106
    %176 = vmatmul.bf16.gmra.mxu0 %v90
    %v177 = vpop.f32.mrf.mxu0
    %v178 = vadd.f32 %v56, %v177
    %v179 = vpop.f32.mrf.mxu0
    %v180 = vadd.f32 %v56, %v179
    %181 = vmatmul.bf16.gmra.mxu0 %v93
    %v182 = vpop.f32.mrf.mxu0
    %v183 = vadd.f32 %v56, %v182
    %v184 = vpop.f32.mrf.mxu0
    %v185 = vadd.f32 %v56, %v184
    %186 = vmatmul.bf16.gmra.mxu0 %v96
    %v187 = vpop.f32.mrf.mxu0
    %v188 = vadd.f32 %v56, %v187
    %v189 = vpop.f32.mrf.mxu0
    %v190 = vadd.f32 %v56, %v189
    %191 = vmatmul.bf16.gmra.mxu0 %v99
    %v192 = vpop.f32.mrf.mxu0
    %v193 = vadd.f32 %v56, %v192
    %v194 = vpop.f32.mrf.mxu0
    %v195 = vadd.f32 %v56, %v194
    %196 = vdwg.mxu0
    %197 = vmatpush.bf16.msra.mxu0 0
    %198 = vmatpush.bf16.msra.mxu0 0
    %199 = vmatpush.bf16.msra.mxu0 0
    %200 = vmatpush.bf16.msra.mxu0 0
    %201 = vmatpush.bf16.msra.mxu0 0
    %202 = vmatpush.bf16.msra.mxu0 0
    %203 = vmatpush.bf16.msra.mxu0 0
    %204 = vmatpush.bf16.msra.mxu0 %v108
    %205 = vmatmul.bf16.gmra.mxu0 %v90
    %v206 = vpop.f32.mrf.mxu0
    %v207 = vadd.f32 %v57, %v206
    %v208 = vpop.f32.mrf.mxu0
    %v209 = vadd.f32 %v57, %v208
    %210 = vmatmul.bf16.gmra.mxu0 %v93
    %v211 = vpop.f32.mrf.mxu0
    %v212 = vadd.f32 %v57, %v211
    %v213 = vpop.f32.mrf.mxu0
    %v214 = vadd.f32 %v57, %v213
    %215 = vmatmul.bf16.gmra.mxu0 %v96
    %v216 = vpop.f32.mrf.mxu0
    %v217 = vadd.f32 %v57, %v216
    %v218 = vpop.f32.mrf.mxu0
    %v219 = vadd.f32 %v57, %v218
    %220 = vmatmul.bf16.gmra.mxu0 %v99
    %v221 = vpop.f32.mrf.mxu0
    %v222 = vadd.f32 %v57, %v221
    %v223 = vpop.f32.mrf.mxu0
    %v224 = vadd.f32 %v57, %v223
    %225 = vdwg.mxu0
    %226 = vst [vmem:[#allocation2] sm:$0xff] %v120
    %227 = vst [vmem:[#allocation2 + $0x8] sm:$0xff] %v149
    %228 = vst [vmem:[#allocation2 + $0x10] sm:$0xff] %v178
    %229 = vst [vmem:[#allocation2 + $0x18] sm:$0xff] %v207
    %230 = vst [vmem:[#allocation2 + $0x20] sm:$0xff] %v122
    %231 = vst [vmem:[#allocation2 + $0x28] sm:$0xff] %v151
    %232 = vst [vmem:[#allocation2 + $0x30] sm:$0xff] %v180
    %233 = vst [vmem:[#allocation2 + $0x38] sm:$0xff] %v209
    %234 = vst [vmem:[#allocation2 + $0x40] sm:$0xff] %v125
    %235 = vst [vmem:[#allocation2 + $0x48] sm:$0xff] %v154
    %236 = vst [vmem:[#allocation2 + $0x50] sm:$0xff] %v183
    %237 = vst [vmem:[#allocation2 + $0x58] sm:$0xff] %v212
    %238 = vst [vmem:[#allocation2 + $0x60] sm:$0xff] %v127
    %239 = vst [vmem:[#allocation2 + $0x68] sm:$0xff] %v156
    %240 = vst [vmem:[#allocation2 + $0x70] sm:$0xff] %v185
    %241 = vst [vmem:[#allocation2 + $0x78] sm:$0xff] %v214
    %242 = vst [vmem:[#allocation2 + $0x80] sm:$0xff] %v130
    %243 = vst [vmem:[#allocation2 + $0x88] sm:$0xff] %v159
    %244 = vst [vmem:[#allocation2 + $0x90] sm:$0xff] %v188
    %245 = vst [vmem:[#allocation2 + $0x98] sm:$0xff] %v217
    %246 = vst [vmem:[#allocation2 + $0xa0] sm:$0xff] %v132
    %247 = vst [vmem:[#allocation2 + $0xa8] sm:$0xff] %v161
    %248 = vst [vmem:[#allocation2 + $0xb0] sm:$0xff] %v190
    %249 = vst [vmem:[#allocation2 + $0xb8] sm:$0xff] %v219
    %250 = vst [vmem:[#allocation2 + $0xc0] sm:$0xff] %v135
    %251 = vst [vmem:[#allocation2 + $0xc8] sm:$0xff] %v164
    %252 = vst [vmem:[#allocation2 + $0xd0] sm:$0xff] %v193
    %253 = vst [vmem:[#allocation2 + $0xd8] sm:$0xff] %v222
    %254 = vst [vmem:[#allocation2 + $0xe0] sm:$0xff] %v137
    %255 = vst [vmem:[#allocation2 + $0xe8] sm:$0xff] %v166
    %256 = vst [vmem:[#allocation2 + $0xf0] sm:$0xff] %v195
    %257 = vst [vmem:[#allocation2 + $0xf8] sm:$0xff] %v224
    %v258 = vld [vmem:[#allocation3] sm:$0xff]
    %v259 = vld [vmem:[#allocation3 + $0x8] sm:$0xff]
    %v260 = vld [vmem:[#allocation3 + $0x10] sm:$0xff]
    %v261 = vld [vmem:[#allocation3 + $0x18] sm:$0xff]
    %v262 = vld [vmem:[#allocation3 + $0x20] sm:$0xff]
    %v263 = vld [vmem:[#allocation3 + $0x28] sm:$0xff]
    %v264 = vld [vmem:[#allocation3 + $0x30] sm:$0xff]
    %v265 = vld [vmem:[#allocation3 + $0x38] sm:$0xff]
    %v266 = vld [vmem:[#allocation3 + $0x40] sm:$0xff]
    %v267 = vld [vmem:[#allocation3 + $0x48] sm:$0xff]
    %v268 = vld [vmem:[#allocation3 + $0x50] sm:$0xff]
    %v269 = vld [vmem:[#allocation3 + $0x58] sm:$0xff]
    %v270 = vld [vmem:[#allocation3 + $0x60] sm:$0xff]
    %v271 = vld [vmem:[#allocation3 + $0x68] sm:$0xff]
    %v272 = vld [vmem:[#allocation3 + $0x70] sm:$0xff]
    %v273 = vld [vmem:[#allocation3 + $0x78] sm:$0xff]
    %v274 = vld [vmem:[#allocation3 + $0x80] sm:$0xff]
    %v275 = vld [vmem:[#allocation3 + $0x88] sm:$0xff]
    %v276 = vld [vmem:[#allocation3 + $0x90] sm:$0xff]
    %v277 = vld [vmem:[#allocation3 + $0x98] sm:$0xff]
    %v278 = vld [vmem:[#allocation3 + $0xa0] sm:$0xff]
    %v279 = vld [vmem:[#allocation3 + $0xa8] sm:$0xff]
    %v280 = vld [vmem:[#allocation3 + $0xb0] sm:$0xff]
    %v281 = vld [vmem:[#allocation3 + $0xb8] sm:$0xff]
    %v282 = vld [vmem:[#allocation3 + $0xc0] sm:$0xff]
    %v283 = vld [vmem:[#allocation3 + $0xc8] sm:$0xff]
    %v284 = vld [vmem:[#allocation3 + $0xd0] sm:$0xff]
    %v285 = vld [vmem:[#allocation3 + $0xd8] sm:$0xff]
    %v286 = vld [vmem:[#allocation3 + $0xe0] sm:$0xff]
    %v287 = vld [vmem:[#allocation3 + $0xe8] sm:$0xff]
    %v288 = vld [vmem:[#allocation3 + $0xf0] sm:$0xff]
    %v289 = vld [vmem:[#allocation3 + $0xf8] sm:$0xff]
    %v290 = vld [vmem:[%s5] sm:$0xff]
    %v291 = vld [vmem:[%s6] sm:$0xff]
    %s292 = smul.u32 0, 4
    %s293 = smul.addr %s292, 8
    %s294 = scalar_lea.vmem [#allocation2], %s293
    %v295 = vld [vmem:[%s294] sm:$0xff]
    %v296 = vld [vmem:[%s294 + $0x8] sm:$0xff]
    %v297 = vld [vmem:[%s294 + $0x10] sm:$0xff]
    %v298 = vld [vmem:[%s294 + $0x18] sm:$0xff]
    %v299 = vpack.c.bf16 %v290, %v290
    %v332 = vunpack.c.l.b16 %v258
    %v333 = vunpack.c.h.b16 %v258
    %v334 = vunpack.c.l.b16 %v259
    %v335 = vunpack.c.h.b16 %v259
    %v336 = vunpack.c.l.b16 %v260
    %v337 = vunpack.c.h.b16 %v260
    %v338 = vunpack.c.l.b16 %v261
    %v339 = vunpack.c.h.b16 %v261
    %v340 = vunpack.c.l.b16 %v262
    %v341 = vunpack.c.h.b16 %v262
    %v342 = vunpack.c.l.b16 %v263
    %v343 = vunpack.c.h.b16 %v263
    %v344 = vunpack.c.l.b16 %v264
    %v345 = vunpack.c.h.b16 %v264
    %v346 = vunpack.c.l.b16 %v265
    %v347 = vunpack.c.h.b16 %v265
    %v348 = vunpack.c.l.b16 %v266
    %v349 = vunpack.c.h.b16 %v266
    %v350 = vunpack.c.l.b16 %v267
    %v351 = vunpack.c.h.b16 %v267
    %v352 = vunpack.c.l.b16 %v268
    %v353 = vunpack.c.h.b16 %v268
    %v354 = vunpack.c.l.b16 %v269
    %v355 = vunpack.c.h.b16 %v269
    %v356 = vunpack.c.l.b16 %v270
    %v357 = vunpack.c.h.b16 %v270
    %v358 = vunpack.c.l.b16 %v271
    %v359 = vunpack.c.h.b16 %v271
    %v360 = vunpack.c.l.b16 %v272
    %v361 = vunpack.c.h.b16 %v272
    %v362 = vunpack.c.l.b16 %v273
    %v363 = vunpack.c.h.b16 %v273
    %v364 = vunpack.c.l.b16 %v274
    %v365 = vunpack.c.h.b16 %v274
    %v366 = vunpack.c.l.b16 %v275
    %v367 = vunpack.c.h.b16 %v275
    %v368 = vunpack.c.l.b16 %v276
    %v369 = vunpack.c.h.b16 %v276
    %v370 = vunpack.c.l.b16 %v277
    %v371 = vunpack.c.h.b16 %v277
    %v372 = vunpack.c.l.b16 %v278
    %v373 = vunpack.c.h.b16 %v278
    %v374 = vunpack.c.l.b16 %v279
    %v375 = vunpack.c.h.b16 %v279
    %v376 = vunpack.c.l.b16 %v280
    %v377 = vunpack.c.h.b16 %v280
    %v378 = vunpack.c.l.b16 %v281
    %v379 = vunpack.c.h.b16 %v281
    %v380 = vunpack.c.l.b16 %v282
    %v381 = vunpack.c.h.b16 %v282
    %v382 = vunpack.c.l.b16 %v283
    %v383 = vunpack.c.h.b16 %v283
    %v384 = vunpack.c.l.b16 %v284
    %v385 = vunpack.c.h.b16 %v284
    %v386 = vunpack.c.l.b16 %v285
    %v387 = vunpack.c.h.b16 %v285
    %v388 = vunpack.c.l.b16 %v286
    %v389 = vunpack.c.h.b16 %v286
    %v390 = vunpack.c.l.b16 %v287
    %v391 = vunpack.c.h.b16 %v287
    %v392 = vunpack.c.l.b16 %v288
    %v393 = vunpack.c.h.b16 %v288
    %v394 = vunpack.c.l.b16 %v289
    %v395 = vunpack.c.h.b16 %v289
    %v396 = vpack.c.b16 %v336, %v332
    %v397 = vpack.c.b16 %v337, %v333
    %v398 = vpack.c.b16 %v338, %v334
    %v399 = vpack.c.b16 %v339, %v335
    %v400 = vpack.c.b16 %v344, %v340
    %v401 = vpack.c.b16 %v345, %v341
    %v402 = vpack.c.b16 %v346, %v342
    %v403 = vpack.c.b16 %v347, %v343
    %v404 = vpack.c.b16 %v352, %v348
    %v405 = vpack.c.b16 %v353, %v349
    %v406 = vpack.c.b16 %v354, %v350
    %v407 = vpack.c.b16 %v355, %v351
    %v408 = vpack.c.b16 %v360, %v356
    %v409 = vpack.c.b16 %v361, %v357
    %v410 = vpack.c.b16 %v362, %v358
    %v411 = vpack.c.b16 %v363, %v359
    %v412 = vpack.c.b16 %v368, %v364
    %v413 = vpack.c.b16 %v369, %v365
    %v414 = vpack.c.b16 %v370, %v366
    %v415 = vpack.c.b16 %v371, %v367
    %v416 = vpack.c.b16 %v376, %v372
    %v417 = vpack.c.b16 %v377, %v373
    %v418 = vpack.c.b16 %v378, %v374
    %v419 = vpack.c.b16 %v379, %v375
    %v420 = vpack.c.b16 %v384, %v380
    %v421 = vpack.c.b16 %v385, %v381
    %v422 = vpack.c.b16 %v386, %v382
    %v423 = vpack.c.b16 %v387, %v383
    %v424 = vpack.c.b16 %v392, %v388
    %v425 = vpack.c.b16 %v393, %v389
    %v426 = vpack.c.b16 %v394, %v390
    %v427 = vpack.c.b16 %v395, %v391
    %460 = vmatpush.bf16.msra.mxu0 %v424
    %461 = vmatpush.bf16.msra.mxu0 %v420
    %462 = vmatpush.bf16.msra.mxu0 %v416
    %463 = vmatpush.bf16.msra.mxu0 %v412
    %464 = vmatpush.bf16.msra.mxu0 %v408
    %465 = vmatpush.bf16.msra.mxu0 %v404
    %466 = vmatpush.bf16.msra.mxu0 %v400
    %467 = vmatpush.bf16.msra.mxu0 %v396
    %468 = vmatmul.bf16.gmra.mxu0 %v299
    %v469 = vpop.f32.mrf.mxu0
    %v470 = vadd.f32 0.0, %v469
    %v471 = vpop.f32.mrf.mxu0
    %472 = vdwg.mxu0
    %473 = vmatpush.bf16.msra.mxu0 %v425
    %474 = vmatpush.bf16.msra.mxu0 %v421
    %475 = vmatpush.bf16.msra.mxu0 %v417
    %476 = vmatpush.bf16.msra.mxu0 %v413
    %477 = vmatpush.bf16.msra.mxu0 %v409
    %478 = vmatpush.bf16.msra.mxu0 %v405
    %479 = vmatpush.bf16.msra.mxu0 %v401
    %480 = vmatpush.bf16.msra.mxu0 %v397
    %481 = vmatmul.bf16.gmra.mxu0 %v299
    %v482 = vpop.f32.mrf.mxu0
    %v483 = vadd.f32 0.0, %v482
    %v484 = vpop.f32.mrf.mxu0
    %485 = vdwg.mxu0
    %486 = vmatpush.bf16.msra.mxu0 %v426
    %487 = vmatpush.bf16.msra.mxu0 %v422
    %488 = vmatpush.bf16.msra.mxu0 %v418
    %489 = vmatpush.bf16.msra.mxu0 %v414
    %490 = vmatpush.bf16.msra.mxu0 %v410
    %491 = vmatpush.bf16.msra.mxu0 %v406
    %492 = vmatpush.bf16.msra.mxu0 %v402
    %493 = vmatpush.bf16.msra.mxu0 %v398
    %494 = vmatmul.bf16.gmra.mxu0 %v299
    %v495 = vpop.f32.mrf.mxu0
    %v496 = vadd.f32 0.0, %v495
    %v497 = vpop.f32.mrf.mxu0
    %498 = vdwg.mxu0
    %499 = vmatpush.bf16.msra.mxu0 %v427
    %500 = vmatpush.bf16.msra.mxu0 %v423
    %501 = vmatpush.bf16.msra.mxu0 %v419
    %502 = vmatpush.bf16.msra.mxu0 %v415
    %503 = vmatpush.bf16.msra.mxu0 %v411
    %504 = vmatpush.bf16.msra.mxu0 %v407
    %505 = vmatpush.bf16.msra.mxu0 %v403
    %506 = vmatpush.bf16.msra.mxu0 %v399
    %507 = vmatmul.bf16.gmra.mxu0 %v299
    %v508 = vpop.f32.mrf.mxu0
    %v509 = vadd.f32 0.0, %v508
    %v510 = vpop.f32.mrf.mxu0
    %511 = vdwg.mxu0
    %v512 = vadd.f32 %v295, %v470
    %v513 = vadd.f32 %v296, %v483
    %v514 = vadd.f32 %v297, %v496
    %v515 = vadd.f32 %v298, %v509
    %v516 = vmul.f32 %v512, 0.5
    %v517 = vmul.f32 %v513, 0.5
    %v518 = vmul.f32 %v514, 0.5
    %v519 = vtanh.pop %v516
    %v520 = vtanh.pop %v517
    %v521 = vtanh.pop %v518
    %v522 = vadd.f32 %v519, 1.0
    %v523 = vadd.f32 %v520, 1.0
    %v524 = vadd.f32 %v521, 1.0
    %v525 = vmul.f32 %v522, 0.5
    %v526 = vmul.f32 %v523, 0.5
    %v527 = vmul.f32 %v524, 0.5
    %v528 = vtanh.pop %v515
    %v529 = vmul.f32 %v525, %v291
    %v530 = vmul.f32 %v526, %v528
    %v531 = vadd.f32 %v529, %v530
    %v532 = vtanh.pop %v531
    %v533 = vmul.f32 %v532, %v527
    %v534 = vpack.c.bf16 %v533, %v533
    %535 = vst [vmem:[%s4] sm:$0xf] %v534
    %s536 = smul.u32 1, 4
    %s537 = smul.addr %s536, 8
    %s538 = scalar_lea.vmem [#allocation2], %s537
    %v539 = vld [vmem:[%s538] sm:$0xff]
    %v540 = vld [vmem:[%s538 + $0x8] sm:$0xff]
    %v541 = vld [vmem:[%s538 + $0x10] sm:$0xff]
    %v542 = vld [vmem:[%s538 + $0x18] sm:$0xff]
    %543 = vmatpush.bf16.msra.mxu0 %v424
    %544 = vmatpush.bf16.msra.mxu0 %v420
    %545 = vmatpush.bf16.msra.mxu0 %v416
    %546 = vmatpush.bf16.msra.mxu0 %v412
    %547 = vmatpush.bf16.msra.mxu0 %v408
    %548 = vmatpush.bf16.msra.mxu0 %v404
    %549 = vmatpush.bf16.msra.mxu0 %v400
    %550 = vmatpush.bf16.msra.mxu0 %v396
    %551 = vmatmul.bf16.gmra.mxu0 %v534
    %v552 = vpop.f32.mrf.mxu0
    %v553 = vadd.f32 0.0, %v552
    %v554 = vpop.f32.mrf.mxu0
    %555 = vdwg.mxu0
    %556 = vmatpush.bf16.msra.mxu0 %v425
    %557 = vmatpush.bf16.msra.mxu0 %v421
    %558 = vmatpush.bf16.msra.mxu0 %v417
    %559 = vmatpush.bf16.msra.mxu0 %v413
    %560 = vmatpush.bf16.msra.mxu0 %v409
    %561 = vmatpush.bf16.msra.mxu0 %v405
    %562 = vmatpush.bf16.msra.mxu0 %v401
    %563 = vmatpush.bf16.msra.mxu0 %v397
    %564 = vmatmul.bf16.gmra.mxu0 %v534
    %v565 = vpop.f32.mrf.mxu0
    %v566 = vadd.f32 0.0, %v565
    %v567 = vpop.f32.mrf.mxu0
    %568 = vdwg.mxu0
    %569 = vmatpush.bf16.msra.mxu0 %v426
    %570 = vmatpush.bf16.msra.mxu0 %v422
    %571 = vmatpush.bf16.msra.mxu0 %v418
    %572 = vmatpush.bf16.msra.mxu0 %v414
    %573 = vmatpush.bf16.msra.mxu0 %v410
    %574 = vmatpush.bf16.msra.mxu0 %v406
    %575 = vmatpush.bf16.msra.mxu0 %v402
    %576 = vmatpush.bf16.msra.mxu0 %v398
    %577 = vmatmul.bf16.gmra.mxu0 %v534
    %v578 = vpop.f32.mrf.mxu0
    %v579 = vadd.f32 0.0, %v578
    %v580 = vpop.f32.mrf.mxu0
    %581 = vdwg.mxu0
    %582 = vmatpush.bf16.msra.mxu0 %v427
    %583 = vmatpush.bf16.msra.mxu0 %v423
    %584 = vmatpush.bf16.msra.mxu0 %v419
    %585 = vmatpush.bf16.msra.mxu0 %v415
    %586 = vmatpush.bf16.msra.mxu0 %v411
    %587 = vmatpush.bf16.msra.mxu0 %v407
    %588 = vmatpush.bf16.msra.mxu0 %v403
    %589 = vmatpush.bf16.msra.mxu0 %v399
    %590 = vmatmul.bf16.gmra.mxu0 %v534
    %v591 = vpop.f32.mrf.mxu0
    %v592 = vadd.f32 0.0, %v591
    %v593 = vpop.f32.mrf.mxu0
    %594 = vdwg.mxu0
    %v595 = vadd.f32 %v539, %v553
    %v596 = vadd.f32 %v540, %v566
    %v597 = vadd.f32 %v541, %v579
    %v598 = vadd.f32 %v542, %v592
    %v599 = vmul.f32 %v595, 0.5
    %v600 = vmul.f32 %v596, 0.5
    %v601 = vmul.f32 %v597, 0.5
    %v602 = vtanh.pop %v599
    %v603 = vtanh.pop %v600
    %v604 = vtanh.pop %v601
    %v605 = vadd.f32 %v602, 1.0
    %v606 = vadd.f32 %v603, 1.0
    %v607 = vadd.f32 %v604, 1.0
    %v608 = vmul.f32 %v605, 0.5
    %v609 = vmul.f32 %v606, 0.5
    %v610 = vmul.f32 %v607, 0.5
    %v611 = vtanh.pop %v598
    %v612 = vmul.f32 %v608, %v531
    %v613 = vmul.f32 %v609, %v611
    %v614 = vadd.f32 %v612, %v613
    %v615 = vtanh.pop %v614
    %v616 = vmul.f32 %v615, %v610
    %v617 = vpack.c.bf16 %v616, %v616
    %s618 = scalar_lea.vmem %s4, 4
    %619 = vst [vmem:[%s618] sm:$0xf] %v617
    %s620 = smul.u32 2, 4
    %s621 = smul.addr %s620, 8
    %s622 = scalar_lea.vmem [#allocation2], %s621
    %v623 = vld [vmem:[%s622] sm:$0xff]
    %v624 = vld [vmem:[%s622 + $0x8] sm:$0xff]
    %v625 = vld [vmem:[%s622 + $0x10] sm:$0xff]
    %v626 = vld [vmem:[%s622 + $0x18] sm:$0xff]
    %627 = vmatpush.bf16.msra.mxu0 %v424
    %628 = vmatpush.bf16.msra.mxu0 %v420
    %629 = vmatpush.bf16.msra.mxu0 %v416
    %630 = vmatpush.bf16.msra.mxu0 %v412
    %631 = vmatpush.bf16.msra.mxu0 %v408
    %632 = vmatpush.bf16.msra.mxu0 %v404
    %633 = vmatpush.bf16.msra.mxu0 %v400
    %634 = vmatpush.bf16.msra.mxu0 %v396
    %635 = vmatmul.bf16.gmra.mxu0 %v617
    %v636 = vpop.f32.mrf.mxu0
    %v637 = vadd.f32 0.0, %v636
    %v638 = vpop.f32.mrf.mxu0
    %639 = vdwg.mxu0
    %640 = vmatpush.bf16.msra.mxu0 %v425
    %641 = vmatpush.bf16.msra.mxu0 %v421
    %642 = vmatpush.bf16.msra.mxu0 %v417
    %643 = vmatpush.bf16.msra.mxu0 %v413
    %644 = vmatpush.bf16.msra.mxu0 %v409
    %645 = vmatpush.bf16.msra.mxu0 %v405
    %646 = vmatpush.bf16.msra.mxu0 %v401
    %647 = vmatpush.bf16.msra.mxu0 %v397
    %648 = vmatmul.bf16.gmra.mxu0 %v617
    %v649 = vpop.f32.mrf.mxu0
    %v650 = vadd.f32 0.0, %v649
    %v651 = vpop.f32.mrf.mxu0
    %652 = vdwg.mxu0
    %653 = vmatpush.bf16.msra.mxu0 %v426
    %654 = vmatpush.bf16.msra.mxu0 %v422
    %655 = vmatpush.bf16.msra.mxu0 %v418
    %656 = vmatpush.bf16.msra.mxu0 %v414
    %657 = vmatpush.bf16.msra.mxu0 %v410
    %658 = vmatpush.bf16.msra.mxu0 %v406
    %659 = vmatpush.bf16.msra.mxu0 %v402
    %660 = vmatpush.bf16.msra.mxu0 %v398
    %661 = vmatmul.bf16.gmra.mxu0 %v617
    %v662 = vpop.f32.mrf.mxu0
    %v663 = vadd.f32 0.0, %v662
    %v664 = vpop.f32.mrf.mxu0
    %665 = vdwg.mxu0
    %666 = vmatpush.bf16.msra.mxu0 %v427
    %667 = vmatpush.bf16.msra.mxu0 %v423
    %668 = vmatpush.bf16.msra.mxu0 %v419
    %669 = vmatpush.bf16.msra.mxu0 %v415
    %670 = vmatpush.bf16.msra.mxu0 %v411
    %671 = vmatpush.bf16.msra.mxu0 %v407
    %672 = vmatpush.bf16.msra.mxu0 %v403
    %673 = vmatpush.bf16.msra.mxu0 %v399
    %674 = vmatmul.bf16.gmra.mxu0 %v617
    %v675 = vpop.f32.mrf.mxu0
    %v676 = vadd.f32 0.0, %v675
    %v677 = vpop.f32.mrf.mxu0
    %678 = vdwg.mxu0
    %v679 = vadd.f32 %v623, %v637
    %v680 = vadd.f32 %v624, %v650
    %v681 = vadd.f32 %v625, %v663
    %v682 = vadd.f32 %v626, %v676
    %v683 = vmul.f32 %v679, 0.5
    %v684 = vmul.f32 %v680, 0.5
    %v685 = vmul.f32 %v681, 0.5
    %v686 = vtanh.pop %v683
    %v687 = vtanh.pop %v684
    %v688 = vtanh.pop %v685
    %v689 = vadd.f32 %v686, 1.0
    %v690 = vadd.f32 %v687, 1.0
    %v691 = vadd.f32 %v688, 1.0
    %v692 = vmul.f32 %v689, 0.5
    %v693 = vmul.f32 %v690, 0.5
    %v694 = vmul.f32 %v691, 0.5
    %v695 = vtanh.pop %v682
    %v696 = vmul.f32 %v692, %v614
    %v697 = vmul.f32 %v693, %v695
    %v698 = vadd.f32 %v696, %v697
    %v699 = vtanh.pop %v698
    %v700 = vmul.f32 %v699, %v694
    %v701 = vpack.c.bf16 %v700, %v700
    %s702 = scalar_lea.vmem %s4, 8
    %703 = vst [vmem:[%s702] sm:$0xf] %v701
    %s704 = smul.u32 3, 4
    %s705 = smul.addr %s704, 8
    %s706 = scalar_lea.vmem [#allocation2], %s705
    %v707 = vld [vmem:[%s706] sm:$0xff]
    %v708 = vld [vmem:[%s706 + $0x8] sm:$0xff]
    %v709 = vld [vmem:[%s706 + $0x10] sm:$0xff]
    %v710 = vld [vmem:[%s706 + $0x18] sm:$0xff]
    %711 = vmatpush.bf16.msra.mxu0 %v424
    %712 = vmatpush.bf16.msra.mxu0 %v420
    %713 = vmatpush.bf16.msra.mxu0 %v416
    %714 = vmatpush.bf16.msra.mxu0 %v412
    %715 = vmatpush.bf16.msra.mxu0 %v408
    %716 = vmatpush.bf16.msra.mxu0 %v404
    %717 = vmatpush.bf16.msra.mxu0 %v400
    %718 = vmatpush.bf16.msra.mxu0 %v396
    %719 = vmatmul.bf16.gmra.mxu0 %v701
    %v720 = vpop.f32.mrf.mxu0
    %v721 = vadd.f32 0.0, %v720
    %v722 = vpop.f32.mrf.mxu0
    %723 = vdwg.mxu0
    %724 = vmatpush.bf16.msra.mxu0 %v425
    %725 = vmatpush.bf16.msra.mxu0 %v421
    %726 = vmatpush.bf16.msra.mxu0 %v417
    %727 = vmatpush.bf16.msra.mxu0 %v413
    %728 = vmatpush.bf16.msra.mxu0 %v409
    %729 = vmatpush.bf16.msra.mxu0 %v405
    %730 = vmatpush.bf16.msra.mxu0 %v401
    %731 = vmatpush.bf16.msra.mxu0 %v397
    %732 = vmatmul.bf16.gmra.mxu0 %v701
    %v733 = vpop.f32.mrf.mxu0
    %v734 = vadd.f32 0.0, %v733
    %v735 = vpop.f32.mrf.mxu0
    %736 = vdwg.mxu0
    %737 = vmatpush.bf16.msra.mxu0 %v426
    %738 = vmatpush.bf16.msra.mxu0 %v422
    %739 = vmatpush.bf16.msra.mxu0 %v418
    %740 = vmatpush.bf16.msra.mxu0 %v414
    %741 = vmatpush.bf16.msra.mxu0 %v410
    %742 = vmatpush.bf16.msra.mxu0 %v406
    %743 = vmatpush.bf16.msra.mxu0 %v402
    %744 = vmatpush.bf16.msra.mxu0 %v398
    %745 = vmatmul.bf16.gmra.mxu0 %v701
    %v746 = vpop.f32.mrf.mxu0
    %v747 = vadd.f32 0.0, %v746
    %v748 = vpop.f32.mrf.mxu0
    %749 = vdwg.mxu0
    %750 = vmatpush.bf16.msra.mxu0 %v427
    %751 = vmatpush.bf16.msra.mxu0 %v423
    %752 = vmatpush.bf16.msra.mxu0 %v419
    %753 = vmatpush.bf16.msra.mxu0 %v415
    %754 = vmatpush.bf16.msra.mxu0 %v411
    %755 = vmatpush.bf16.msra.mxu0 %v407
    %756 = vmatpush.bf16.msra.mxu0 %v403
    %757 = vmatpush.bf16.msra.mxu0 %v399
    %758 = vmatmul.bf16.gmra.mxu0 %v701
    %v759 = vpop.f32.mrf.mxu0
    %v760 = vadd.f32 0.0, %v759
    %v761 = vpop.f32.mrf.mxu0
    %762 = vdwg.mxu0
    %v763 = vadd.f32 %v707, %v721
    %v764 = vadd.f32 %v708, %v734
    %v765 = vadd.f32 %v709, %v747
    %v766 = vadd.f32 %v710, %v760
    %v767 = vmul.f32 %v763, 0.5
    %v768 = vmul.f32 %v764, 0.5
    %v769 = vmul.f32 %v765, 0.5
    %v770 = vtanh.pop %v767
    %v771 = vtanh.pop %v768
    %v772 = vtanh.pop %v769
    %v773 = vadd.f32 %v770, 1.0
    %v774 = vadd.f32 %v771, 1.0
    %v775 = vadd.f32 %v772, 1.0
    %v776 = vmul.f32 %v773, 0.5
    %v777 = vmul.f32 %v774, 0.5
    %v778 = vmul.f32 %v775, 0.5
    %v779 = vtanh.pop %v766
    %v780 = vmul.f32 %v776, %v698
    %v781 = vmul.f32 %v777, %v779
    %v782 = vadd.f32 %v780, %v781
    %v783 = vtanh.pop %v782
    %v784 = vmul.f32 %v783, %v778
    %v785 = vpack.c.bf16 %v784, %v784
    %s786 = scalar_lea.vmem %s4, 12
    %787 = vst [vmem:[%s786] sm:$0xf] %v785
    %s788 = smul.u32 4, 4
    %s789 = smul.addr %s788, 8
    %s790 = scalar_lea.vmem [#allocation2], %s789
    %v791 = vld [vmem:[%s790] sm:$0xff]
    %v792 = vld [vmem:[%s790 + $0x8] sm:$0xff]
    %v793 = vld [vmem:[%s790 + $0x10] sm:$0xff]
    %v794 = vld [vmem:[%s790 + $0x18] sm:$0xff]
    %795 = vmatpush.bf16.msra.mxu0 %v424
    %796 = vmatpush.bf16.msra.mxu0 %v420
    %797 = vmatpush.bf16.msra.mxu0 %v416
    %798 = vmatpush.bf16.msra.mxu0 %v412
    %799 = vmatpush.bf16.msra.mxu0 %v408
    %800 = vmatpush.bf16.msra.mxu0 %v404
    %801 = vmatpush.bf16.msra.mxu0 %v400
    %802 = vmatpush.bf16.msra.mxu0 %v396
    %803 = vmatmul.bf16.gmra.mxu0 %v785
    %v804 = vpop.f32.mrf.mxu0
    %v805 = vadd.f32 0.0, %v804
    %v806 = vpop.f32.mrf.mxu0
    %807 = vdwg.mxu0
    %808 = vmatpush.bf16.msra.mxu0 %v425
    %809 = vmatpush.bf16.msra.mxu0 %v421
    %810 = vmatpush.bf16.msra.mxu0 %v417
    %811 = vmatpush.bf16.msra.mxu0 %v413
    %812 = vmatpush.bf16.msra.mxu0 %v409
    %813 = vmatpush.bf16.msra.mxu0 %v405
    %814 = vmatpush.bf16.msra.mxu0 %v401
    %815 = vmatpush.bf16.msra.mxu0 %v397
    %816 = vmatmul.bf16.gmra.mxu0 %v785
    %v817 = vpop.f32.mrf.mxu0
    %v818 = vadd.f32 0.0, %v817
    %v819 = vpop.f32.mrf.mxu0
    %820 = vdwg.mxu0
    %821 = vmatpush.bf16.msra.mxu0 %v426
    %822 = vmatpush.bf16.msra.mxu0 %v422
    %823 = vmatpush.bf16.msra.mxu0 %v418
    %824 = vmatpush.bf16.msra.mxu0 %v414
    %825 = vmatpush.bf16.msra.mxu0 %v410
    %826 = vmatpush.bf16.msra.mxu0 %v406
    %827 = vmatpush.bf16.msra.mxu0 %v402
    %828 = vmatpush.bf16.msra.mxu0 %v398
    %829 = vmatmul.bf16.gmra.mxu0 %v785
    %v830 = vpop.f32.mrf.mxu0
    %v831 = vadd.f32 0.0, %v830
    %v832 = vpop.f32.mrf.mxu0
    %833 = vdwg.mxu0
    %834 = vmatpush.bf16.msra.mxu0 %v427
    %835 = vmatpush.bf16.msra.mxu0 %v423
    %836 = vmatpush.bf16.msra.mxu0 %v419
    %837 = vmatpush.bf16.msra.mxu0 %v415
    %838 = vmatpush.bf16.msra.mxu0 %v411
    %839 = vmatpush.bf16.msra.mxu0 %v407
    %840 = vmatpush.bf16.msra.mxu0 %v403
    %841 = vmatpush.bf16.msra.mxu0 %v399
    %842 = vmatmul.bf16.gmra.mxu0 %v785
    %v843 = vpop.f32.mrf.mxu0
    %v844 = vadd.f32 0.0, %v843
    %v845 = vpop.f32.mrf.mxu0
    %846 = vdwg.mxu0
    %v847 = vadd.f32 %v791, %v805
    %v848 = vadd.f32 %v792, %v818
    %v849 = vadd.f32 %v793, %v831
    %v850 = vadd.f32 %v794, %v844
    %v851 = vmul.f32 %v847, 0.5
    %v852 = vmul.f32 %v848, 0.5
    %v853 = vmul.f32 %v849, 0.5
    %v854 = vtanh.pop %v851
    %v855 = vtanh.pop %v852
    %v856 = vtanh.pop %v853
    %v857 = vadd.f32 %v854, 1.0
    %v858 = vadd.f32 %v855, 1.0
    %v859 = vadd.f32 %v856, 1.0
    %v860 = vmul.f32 %v857, 0.5
    %v861 = vmul.f32 %v858, 0.5
    %v862 = vmul.f32 %v859, 0.5
    %v863 = vtanh.pop %v850
    %v864 = vmul.f32 %v860, %v782
    %v865 = vmul.f32 %v861, %v863
    %v866 = vadd.f32 %v864, %v865
    %v867 = vtanh.pop %v866
    %v868 = vmul.f32 %v867, %v862
    %v869 = vpack.c.bf16 %v868, %v868
    %s870 = scalar_lea.vmem %s4, 16
    %871 = vst [vmem:[%s870] sm:$0xf] %v869
    %s872 = smul.u32 5, 4
    %s873 = smul.addr %s872, 8
    %s874 = scalar_lea.vmem [#allocation2], %s873
    %v875 = vld [vmem:[%s874] sm:$0xff]
    %v876 = vld [vmem:[%s874 + $0x8] sm:$0xff]
    %v877 = vld [vmem:[%s874 + $0x10] sm:$0xff]
    %v878 = vld [vmem:[%s874 + $0x18] sm:$0xff]
    %879 = vmatpush.bf16.msra.mxu0 %v424
    %880 = vmatpush.bf16.msra.mxu0 %v420
    %881 = vmatpush.bf16.msra.mxu0 %v416
    %882 = vmatpush.bf16.msra.mxu0 %v412
    %883 = vmatpush.bf16.msra.mxu0 %v408
    %884 = vmatpush.bf16.msra.mxu0 %v404
    %885 = vmatpush.bf16.msra.mxu0 %v400
    %886 = vmatpush.bf16.msra.mxu0 %v396
    %887 = vmatmul.bf16.gmra.mxu0 %v869
    %v888 = vpop.f32.mrf.mxu0
    %v889 = vadd.f32 0.0, %v888
    %v890 = vpop.f32.mrf.mxu0
    %891 = vdwg.mxu0
    %892 = vmatpush.bf16.msra.mxu0 %v425
    %893 = vmatpush.bf16.msra.mxu0 %v421
    %894 = vmatpush.bf16.msra.mxu0 %v417
    %895 = vmatpush.bf16.msra.mxu0 %v413
    %896 = vmatpush.bf16.msra.mxu0 %v409
    %897 = vmatpush.bf16.msra.mxu0 %v405
    %898 = vmatpush.bf16.msra.mxu0 %v401
    %899 = vmatpush.bf16.msra.mxu0 %v397
    %900 = vmatmul.bf16.gmra.mxu0 %v869
    %v901 = vpop.f32.mrf.mxu0
    %v902 = vadd.f32 0.0, %v901
    %v903 = vpop.f32.mrf.mxu0
    %904 = vdwg.mxu0
    %905 = vmatpush.bf16.msra.mxu0 %v426
    %906 = vmatpush.bf16.msra.mxu0 %v422
    %907 = vmatpush.bf16.msra.mxu0 %v418
    %908 = vmatpush.bf16.msra.mxu0 %v414
    %909 = vmatpush.bf16.msra.mxu0 %v410
    %910 = vmatpush.bf16.msra.mxu0 %v406
    %911 = vmatpush.bf16.msra.mxu0 %v402
    %912 = vmatpush.bf16.msra.mxu0 %v398
    %913 = vmatmul.bf16.gmra.mxu0 %v869
    %v914 = vpop.f32.mrf.mxu0
    %v915 = vadd.f32 0.0, %v914
    %v916 = vpop.f32.mrf.mxu0
    %917 = vdwg.mxu0
    %918 = vmatpush.bf16.msra.mxu0 %v427
    %919 = vmatpush.bf16.msra.mxu0 %v423
    %920 = vmatpush.bf16.msra.mxu0 %v419
    %921 = vmatpush.bf16.msra.mxu0 %v415
    %922 = vmatpush.bf16.msra.mxu0 %v411
    %923 = vmatpush.bf16.msra.mxu0 %v407
    %924 = vmatpush.bf16.msra.mxu0 %v403
    %925 = vmatpush.bf16.msra.mxu0 %v399
    %926 = vmatmul.bf16.gmra.mxu0 %v869
    %v927 = vpop.f32.mrf.mxu0
    %v928 = vadd.f32 0.0, %v927
    %v929 = vpop.f32.mrf.mxu0
    %930 = vdwg.mxu0
    %v931 = vadd.f32 %v875, %v889
    %v932 = vadd.f32 %v876, %v902
    %v933 = vadd.f32 %v877, %v915
    %v934 = vadd.f32 %v878, %v928
    %v935 = vmul.f32 %v931, 0.5
    %v936 = vmul.f32 %v932, 0.5
    %v937 = vmul.f32 %v933, 0.5
    %v938 = vtanh.pop %v935
    %v939 = vtanh.pop %v936
    %v940 = vtanh.pop %v937
    %v941 = vadd.f32 %v938, 1.0
    %v942 = vadd.f32 %v939, 1.0
    %v943 = vadd.f32 %v940, 1.0
    %v944 = vmul.f32 %v941, 0.5
    %v945 = vmul.f32 %v942, 0.5
    %v946 = vmul.f32 %v943, 0.5
    %v947 = vtanh.pop %v934
    %v948 = vmul.f32 %v944, %v866
    %v949 = vmul.f32 %v945, %v947
    %v950 = vadd.f32 %v948, %v949
    %v951 = vtanh.pop %v950
    %v952 = vmul.f32 %v951, %v946
    %v953 = vpack.c.bf16 %v952, %v952
    %s954 = scalar_lea.vmem %s4, 20
    %955 = vst [vmem:[%s954] sm:$0xf] %v953
    %s956 = smul.u32 6, 4
    %s957 = smul.addr %s956, 8
    %s958 = scalar_lea.vmem [#allocation2], %s957
    %v959 = vld [vmem:[%s958] sm:$0xff]
    %v960 = vld [vmem:[%s958 + $0x8] sm:$0xff]
    %v961 = vld [vmem:[%s958 + $0x10] sm:$0xff]
    %v962 = vld [vmem:[%s958 + $0x18] sm:$0xff]
    %963 = vmatpush.bf16.msra.mxu0 %v424
    %964 = vmatpush.bf16.msra.mxu0 %v420
    %965 = vmatpush.bf16.msra.mxu0 %v416
    %966 = vmatpush.bf16.msra.mxu0 %v412
    %967 = vmatpush.bf16.msra.mxu0 %v408
    %968 = vmatpush.bf16.msra.mxu0 %v404
    %969 = vmatpush.bf16.msra.mxu0 %v400
    %970 = vmatpush.bf16.msra.mxu0 %v396
    %971 = vmatmul.bf16.gmra.mxu0 %v953
    %v972 = vpop.f32.mrf.mxu0
    %v973 = vadd.f32 0.0, %v972
    %v974 = vpop.f32.mrf.mxu0
    %975 = vdwg.mxu0
    %976 = vmatpush.bf16.msra.mxu0 %v425
    %977 = vmatpush.bf16.msra.mxu0 %v421
    %978 = vmatpush.bf16.msra.mxu0 %v417
    %979 = vmatpush.bf16.msra.mxu0 %v413
    %980 = vmatpush.bf16.msra.mxu0 %v409
    %981 = vmatpush.bf16.msra.mxu0 %v405
    %982 = vmatpush.bf16.msra.mxu0 %v401
    %983 = vmatpush.bf16.msra.mxu0 %v397
    %984 = vmatmul.bf16.gmra.mxu0 %v953
    %v985 = vpop.f32.mrf.mxu0
    %v986 = vadd.f32 0.0, %v985
    %v987 = vpop.f32.mrf.mxu0
    %988 = vdwg.mxu0
    %989 = vmatpush.bf16.msra.mxu0 %v426
    %990 = vmatpush.bf16.msra.mxu0 %v422
    %991 = vmatpush.bf16.msra.mxu0 %v418
    %992 = vmatpush.bf16.msra.mxu0 %v414
    %993 = vmatpush.bf16.msra.mxu0 %v410
    %994 = vmatpush.bf16.msra.mxu0 %v406
    %995 = vmatpush.bf16.msra.mxu0 %v402
    %996 = vmatpush.bf16.msra.mxu0 %v398
    %997 = vmatmul.bf16.gmra.mxu0 %v953
    %v998 = vpop.f32.mrf.mxu0
    %v999 = vadd.f32 0.0, %v998
    %v1000 = vpop.f32.mrf.mxu0
    %1001 = vdwg.mxu0
    %1002 = vmatpush.bf16.msra.mxu0 %v427
    %1003 = vmatpush.bf16.msra.mxu0 %v423
    %1004 = vmatpush.bf16.msra.mxu0 %v419
    %1005 = vmatpush.bf16.msra.mxu0 %v415
    %1006 = vmatpush.bf16.msra.mxu0 %v411
    %1007 = vmatpush.bf16.msra.mxu0 %v407
    %1008 = vmatpush.bf16.msra.mxu0 %v403
    %1009 = vmatpush.bf16.msra.mxu0 %v399
    %1010 = vmatmul.bf16.gmra.mxu0 %v953
    %v1011 = vpop.f32.mrf.mxu0
    %v1012 = vadd.f32 0.0, %v1011
    %v1013 = vpop.f32.mrf.mxu0
    %1014 = vdwg.mxu0
    %v1015 = vadd.f32 %v959, %v973
    %v1016 = vadd.f32 %v960, %v986
    %v1017 = vadd.f32 %v961, %v999
    %v1018 = vadd.f32 %v962, %v1012
    %v1019 = vmul.f32 %v1015, 0.5
    %v1020 = vmul.f32 %v1016, 0.5
    %v1021 = vmul.f32 %v1017, 0.5
    %v1022 = vtanh.pop %v1019
    %v1023 = vtanh.pop %v1020
    %v1024 = vtanh.pop %v1021
    %v1025 = vadd.f32 %v1022, 1.0
    %v1026 = vadd.f32 %v1023, 1.0
    %v1027 = vadd.f32 %v1024, 1.0
    %v1028 = vmul.f32 %v1025, 0.5
    %v1029 = vmul.f32 %v1026, 0.5
    %v1030 = vmul.f32 %v1027, 0.5
    %v1031 = vtanh.pop %v1018
    %v1032 = vmul.f32 %v1028, %v950
    %v1033 = vmul.f32 %v1029, %v1031
    %v1034 = vadd.f32 %v1032, %v1033
    %v1035 = vtanh.pop %v1034
    %v1036 = vmul.f32 %v1035, %v1030
    %v1037 = vpack.c.bf16 %v1036, %v1036
    %s1038 = scalar_lea.vmem %s4, 24
    %1039 = vst [vmem:[%s1038] sm:$0xf] %v1037
    %s1040 = smul.u32 7, 4
    %s1041 = smul.addr %s1040, 8
    %s1042 = scalar_lea.vmem [#allocation2], %s1041
    %v1043 = vld [vmem:[%s1042] sm:$0xff]
    %v1044 = vld [vmem:[%s1042 + $0x8] sm:$0xff]
    %v1045 = vld [vmem:[%s1042 + $0x10] sm:$0xff]
    %v1046 = vld [vmem:[%s1042 + $0x18] sm:$0xff]
    %1047 = vmatpush.bf16.msra.mxu0 %v424
    %1048 = vmatpush.bf16.msra.mxu0 %v420
    %1049 = vmatpush.bf16.msra.mxu0 %v416
    %1050 = vmatpush.bf16.msra.mxu0 %v412
    %1051 = vmatpush.bf16.msra.mxu0 %v408
    %1052 = vmatpush.bf16.msra.mxu0 %v404
    %1053 = vmatpush.bf16.msra.mxu0 %v400
    %1054 = vmatpush.bf16.msra.mxu0 %v396
    %1055 = vmatmul.bf16.gmra.mxu0 %v1037
    %v1056 = vpop.f32.mrf.mxu0
    %v1057 = vadd.f32 0.0, %v1056
    %v1058 = vpop.f32.mrf.mxu0
    %1059 = vdwg.mxu0
    %1060 = vmatpush.bf16.msra.mxu0 %v425
    %1061 = vmatpush.bf16.msra.mxu0 %v421
    %1062 = vmatpush.bf16.msra.mxu0 %v417
    %1063 = vmatpush.bf16.msra.mxu0 %v413
    %1064 = vmatpush.bf16.msra.mxu0 %v409
    %1065 = vmatpush.bf16.msra.mxu0 %v405
    %1066 = vmatpush.bf16.msra.mxu0 %v401
    %1067 = vmatpush.bf16.msra.mxu0 %v397
    %1068 = vmatmul.bf16.gmra.mxu0 %v1037
    %v1069 = vpop.f32.mrf.mxu0
    %v1070 = vadd.f32 0.0, %v1069
    %v1071 = vpop.f32.mrf.mxu0
    %1072 = vdwg.mxu0
    %1073 = vmatpush.bf16.msra.mxu0 %v426
    %1074 = vmatpush.bf16.msra.mxu0 %v422
    %1075 = vmatpush.bf16.msra.mxu0 %v418
    %1076 = vmatpush.bf16.msra.mxu0 %v414
    %1077 = vmatpush.bf16.msra.mxu0 %v410
    %1078 = vmatpush.bf16.msra.mxu0 %v406
    %1079 = vmatpush.bf16.msra.mxu0 %v402
    %1080 = vmatpush.bf16.msra.mxu0 %v398
    %1081 = vmatmul.bf16.gmra.mxu0 %v1037
    %v1082 = vpop.f32.mrf.mxu0
    %v1083 = vadd.f32 0.0, %v1082
    %v1084 = vpop.f32.mrf.mxu0
    %1085 = vdwg.mxu0
    %1086 = vmatpush.bf16.msra.mxu0 %v427
    %1087 = vmatpush.bf16.msra.mxu0 %v423
    %1088 = vmatpush.bf16.msra.mxu0 %v419
    %1089 = vmatpush.bf16.msra.mxu0 %v415
    %1090 = vmatpush.bf16.msra.mxu0 %v411
    %1091 = vmatpush.bf16.msra.mxu0 %v407
    %1092 = vmatpush.bf16.msra.mxu0 %v403
    %1093 = vmatpush.bf16.msra.mxu0 %v399
    %1094 = vmatmul.bf16.gmra.mxu0 %v1037
    %v1095 = vpop.f32.mrf.mxu0
    %v1096 = vadd.f32 0.0, %v1095
    %v1097 = vpop.f32.mrf.mxu0
    %1098 = vdwg.mxu0
    %v1099 = vadd.f32 %v1043, %v1057
    %v1100 = vadd.f32 %v1044, %v1070
    %v1101 = vadd.f32 %v1045, %v1083
    %v1102 = vadd.f32 %v1046, %v1096
    %v1103 = vmul.f32 %v1099, 0.5
    %v1104 = vmul.f32 %v1100, 0.5
    %v1105 = vmul.f32 %v1101, 0.5
    %v1106 = vtanh.pop %v1103
    %v1107 = vtanh.pop %v1104
    %v1108 = vtanh.pop %v1105
    %v1109 = vadd.f32 %v1106, 1.0
    %v1110 = vadd.f32 %v1107, 1.0
    %v1111 = vadd.f32 %v1108, 1.0
    %v1112 = vmul.f32 %v1109, 0.5
    %v1113 = vmul.f32 %v1110, 0.5
    %v1114 = vmul.f32 %v1111, 0.5
    %v1115 = vtanh.pop %v1102
    %v1116 = vmul.f32 %v1112, %v1034
    %v1117 = vmul.f32 %v1113, %v1115
    %v1118 = vadd.f32 %v1116, %v1117
    %v1119 = vtanh.pop %v1118
    %v1120 = vmul.f32 %v1119, %v1114
    %v1121 = vpack.c.bf16 %v1120, %v1120
    %s1122 = scalar_lea.vmem %s4, 28
    %1123 = vst [vmem:[%s1122] sm:$0xf] %v1121
    %1124 = vst [vmem:[%s5] sm:$0xff] %v1120
    %1125 = vst [vmem:[%s6] sm:$0xff] %v1118
    // Predicated region
    $region26: #{_lambda_.2} parent=1 // pred_check
      _
    $region27: #{_lambda_.2} parent=1 // pred_check_branch
      %1127 = sbr.rel (0) target = $region29
    $region28: #{_lambda_.2} parent=1 // pred_region
      _
    $region29: #{_lambda_.2} parent=1 // pred_fallthru
      _
    // Predicated region
    $region30: #{_lambda_.2} parent=1 // pred_check
      _
    $region31: #{_lambda_.2} parent=1 // pred_check_branch
      %1129 = sbr.rel (0) target = $region33
    $region32: #{_lambda_.2} parent=1 // pred_region
      _
    $region33: #{_lambda_.2} parent=1 // pred_fallthru
      _
    // Predicated region
    $region34: #{_lambda_.2} parent=1 // pred_check
      _
    $region35: #{_lambda_.2} parent=1 // pred_check_branch
      %1131 = sbr.rel (0) target = $region37
    $region36: #{_lambda_.2} parent=1 // pred_region
      _
    $region37: #{_lambda_.2} parent=1 // pred_fallthru
      _
    // Predicated region
    $region38: #{_lambda_.2} parent=1 // pred_check
      _
    $region39: #{_lambda_.2} parent=1 // pred_check_branch
      %1133 = sbr.rel (0) target = $region41
    $region40: #{_lambda_.2} parent=1 // pred_region
      _
    $region41: #{_lambda_.2} parent=1 // pred_fallthru
      _
    // Predicated region
    $region42: #{_lambda_.2} parent=1 // pred_check
      _
    $region43: #{_lambda_.2} parent=1 // pred_check_branch
      %1135 = sbr.rel (0) target = $region45
    $region44: #{_lambda_.2} parent=1 // pred_region
      _
    $region45: #{_lambda_.2} parent=1 // pred_fallthru
      _
    // Predicated region
    $region46: #{_lambda_.2} parent=1 // pred_check
      _
    $region47: #{_lambda_.2} parent=1 // pred_check_branch
      %1137 = sbr.rel (0) target = $region49
    $region48: #{_lambda_.2} parent=1 // pred_region
      _
    $region49: #{_lambda_.2} parent=1 // pred_fallthru
      _
    %1138 = vsyncpa [#allocation4], 1

// kernel: _lambda_.3
$region0: #{_lambda_.3}
  #allocation0 [shape = 'u32[]', space=smem, size = 0x4, offset = 0x4, fixed_abs, tag = 'smem constant byte address 0x4 - core index']
  #allocation1 [shape = 'u32[72,128]{1,0:T(1,128)}', space=vmem, size = 0x9000, scoped, tag = 'internal scratch']
  #allocation2 [shape = 'f32[64,512]{1,0:T(8,128)}', space=vmem, size = 0x20000, scoped, tag = 'scratch operand']
  %s0 = inlined_call_operand.vmem [shape: bf16[8,8,128], index: 0, kind: input, shape index: {}]
  %s1 = inlined_call_operand.hbm [shape: bf16[128,512], index: 1, kind: input, shape index: {}]
  %s2 = inlined_call_operand.hbm [shape: bf16[128,512], index: 2, kind: input, shape index: {}]
  %s3 = inlined_call_operand.vmem [shape: f32[1,512], index: 3, kind: input, shape index: {}]
  %s4 = inlined_call_operand.vmem [shape: f32[8,8,128], index: 4, kind: output, shape index: {0}]
  %s5 = inlined_call_operand.vmem [shape: f32[8,128], index: 5, kind: output, shape index: {1}]
  %s6 = inlined_call_operand.vmem [shape: f32[8,128], index: 6, kind: output, shape index: {2}]
  %7 = xla_tuple %s4, %s5, %s6
  %s8 = sld [smem:[#allocation0]]
  $region54: #{_lambda_.3} parent=0
    _
  %s10 = ssub.s32 1, %s8
  %s11 = scalar_select 0, %s10, %s8
  $region1: #{_lambda_.3} parent=0
    #allocation3 [shape = 'u8[131072]{0}', space=vmem, size = 0x20000, scoped, tag = 'input window, operand 1, single buffered']
    #allocation4 [shape = 's32[1]{0}', space=sflag, size = 0x4, scoped, tag = 'scoped memory for _lambda_.3']
    #allocation5 [shape = 'u8[131072]{0}', space=vmem, size = 0x20000, scoped, tag = 'input window, operand 2, single buffered']
    #allocation6 [shape = 's32[1]{0}', space=sflag, size = 0x4, scoped, tag = 'scoped memory for _lambda_.3']
    %12 = vsyncpa [#allocation4], 0
    %13 = vsyncpa [#allocation6], 0
    // Predicated region
    $region2: #{_lambda_.3} parent=1 // pred_check
      _
    $region3: #{_lambda_.3} parent=1 // pred_check_branch
      %15 = sbr.rel (0) target = $region5
    $region4: #{_lambda_.3} parent=1 // pred_region
      _
    $region5: #{_lambda_.3} parent=1 // pred_fallthru
      _
    // Predicated region
    $region6: #{_lambda_.3} parent=1 // pred_check
      _
    $region7: #{_lambda_.3} parent=1 // pred_check_branch
      %17 = sbr.rel (0) target = $region9
    $region8: #{_lambda_.3} parent=1 // pred_region
      %19 = vsyncadd [#allocation4], 0
      %s20 = sshll.u32 %s1, 4
      %s21 = int_to_ptr.hbm [resolvable:$true] %s20
      %s22 = sshll.u32 [#allocation3], 4
      %s23 = int_to_ptr.vmem [resolvable:$true] %s22
      %28 = dma.hbm_to_vmem [thread:$0]  %s21, 4096, %s23, [#allocation4], 256, 256, 16
    $region9: #{_lambda_.3} parent=1 // pred_fallthru
      _
    // Predicated region
    $region10: #{_lambda_.3} parent=1 // pred_check
      _
    $region11: #{_lambda_.3} parent=1 // pred_check_branch
      %30 = sbr.rel (0) target = $region13
    $region12: #{_lambda_.3} parent=1 // pred_region
      %32 = vsyncadd [#allocation6], 0
      %s33 = sshll.u32 %s2, 4
      %s34 = int_to_ptr.hbm [resolvable:$true] %s33
      %s35 = sshll.u32 [#allocation5], 4
      %s36 = int_to_ptr.vmem [resolvable:$true] %s35
      %41 = dma.hbm_to_vmem [thread:$0]  %s34, 4096, %s36, [#allocation6], 256, 256, 16
    $region13: #{_lambda_.3} parent=1 // pred_fallthru
      _
    // Predicated region
    $region14: #{_lambda_.3} parent=1 // pred_check
      _
    $region15: #{_lambda_.3} parent=1 // pred_check_branch
      %43 = sbr.rel (0) target = $region17
    $region16: #{_lambda_.3} parent=1 // pred_region
      _
    $region17: #{_lambda_.3} parent=1 // pred_fallthru
      _
    // Predicated region
    $region18: #{_lambda_.3} parent=1 // pred_check
      _
    $region19: #{_lambda_.3} parent=1 // pred_check_branch
      %45 = sbr.rel (0) target = $region21
    $region20: #{_lambda_.3} parent=1 // pred_region
      %47 = dma.done [#allocation4], 4096
    $region21: #{_lambda_.3} parent=1 // pred_fallthru
      _
    // Predicated region
    $region22: #{_lambda_.3} parent=1 // pred_check
      _
    $region23: #{_lambda_.3} parent=1 // pred_check_branch
      %49 = sbr.rel (0) target = $region25
    $region24: #{_lambda_.3} parent=1 // pred_region
      %51 = dma.done [#allocation6], 4096
    $region25: #{_lambda_.3} parent=1 // pred_fallthru
      _
    %p52 = scmp.eq.s32.totalorder 0, 0
    // Predicated region
    $region26: #{_lambda_.3} parent=1 // pred_check
      %p53 = pneg %p52
    $region27: #{_lambda_.3} parent=1 // pred_check_branch
      %55 = sbr.rel (%p53) target = $region29
    $region28: #{_lambda_.3} parent=1 // pred_region
      %56 = vst [vmem:[%s5] sm:$0xff] 0.0
      %57 = vst [vmem:[%s6] sm:$0xff] 0.0
    $region29: #{_lambda_.3} parent=1 // pred_fallthru
      _
    %v58 = vld [vmem:[%s0] sm:$0xf]
    %v59 = vld [vmem:[%s0 + $0x4] sm:$0xf]
    %v60 = vld [vmem:[%s0 + $0x8] sm:$0xf]
    %v61 = vld [vmem:[%s0 + $0xc] sm:$0xf]
    %v62 = vld [vmem:[%s0 + $0x10] sm:$0xf]
    %v63 = vld [vmem:[%s0 + $0x14] sm:$0xf]
    %v64 = vld [vmem:[%s0 + $0x18] sm:$0xf]
    %v65 = vld [vmem:[%s0 + $0x1c] sm:$0xf]
    %v66 = vld [vmem:[#allocation3] sm:$0xff]
    %v67 = vld [vmem:[#allocation3 + $0x8] sm:$0xff]
    %v68 = vld [vmem:[#allocation3 + $0x10] sm:$0xff]
    %v69 = vld [vmem:[#allocation3 + $0x18] sm:$0xff]
    %v70 = vld [vmem:[#allocation3 + $0x20] sm:$0xff]
    %v71 = vld [vmem:[#allocation3 + $0x28] sm:$0xff]
    %v72 = vld [vmem:[#allocation3 + $0x30] sm:$0xff]
    %v73 = vld [vmem:[#allocation3 + $0x38] sm:$0xff]
    %v74 = vld [vmem:[#allocation3 + $0x40] sm:$0xff]
    %v75 = vld [vmem:[#allocation3 + $0x48] sm:$0xff]
    %v76 = vld [vmem:[#allocation3 + $0x50] sm:$0xff]
    %v77 = vld [vmem:[#allocation3 + $0x58] sm:$0xff]
    %v78 = vld [vmem:[#allocation3 + $0x60] sm:$0xff]
    %v79 = vld [vmem:[#allocation3 + $0x68] sm:$0xff]
    %v80 = vld [vmem:[#allocation3 + $0x70] sm:$0xff]
    %v81 = vld [vmem:[#allocation3 + $0x78] sm:$0xff]
    %v82 = vld [vmem:[#allocation3 + $0x80] sm:$0xff]
    %v83 = vld [vmem:[#allocation3 + $0x88] sm:$0xff]
    %v84 = vld [vmem:[#allocation3 + $0x90] sm:$0xff]
    %v85 = vld [vmem:[#allocation3 + $0x98] sm:$0xff]
    %v86 = vld [vmem:[#allocation3 + $0xa0] sm:$0xff]
    %v87 = vld [vmem:[#allocation3 + $0xa8] sm:$0xff]
    %v88 = vld [vmem:[#allocation3 + $0xb0] sm:$0xff]
    %v89 = vld [vmem:[#allocation3 + $0xb8] sm:$0xff]
    %v90 = vld [vmem:[#allocation3 + $0xc0] sm:$0xff]
    %v91 = vld [vmem:[#allocation3 + $0xc8] sm:$0xff]
    %v92 = vld [vmem:[#allocation3 + $0xd0] sm:$0xff]
    %v93 = vld [vmem:[#allocation3 + $0xd8] sm:$0xff]
    %v94 = vld [vmem:[#allocation3 + $0xe0] sm:$0xff]
    %v95 = vld [vmem:[#allocation3 + $0xe8] sm:$0xff]
    %v96 = vld [vmem:[#allocation3 + $0xf0] sm:$0xff]
    %v97 = vld [vmem:[#allocation3 + $0xf8] sm:$0xff]
    %v98 = vld [vmem:[%s3] sm:$0xf]
    %v100 = vperm.slane %v98, 0
    %v101 = vperm.slane %v98, 1
    %v102 = vperm.slane %v98, 2
    %v103 = vperm.slane %v98, 3
    %v116 = vunpack.c.l.b16 %v58
    %v117 = vunpack.c.l.b16 %v59
    %v118 = vunpack.c.l.b16 %v60
    %v119 = vunpack.c.l.b16 %v61
    %v120 = vunpack.c.l.b16 %v62
    %v121 = vunpack.c.l.b16 %v63
    %v122 = vunpack.c.l.b16 %v64
    %v123 = vunpack.c.l.b16 %v65
    %v124 = vpack.c.b16 %v117, %v116
    %v125 = vpack.c.b16 %v119, %v118
    %v126 = vpack.c.b16 %v121, %v120
    %v127 = vpack.c.b16 %v123, %v122
    %v164 = vunpack.c.l.b16 %v66
    %v165 = vunpack.c.h.b16 %v66
    %v166 = vunpack.c.l.b16 %v67
    %v167 = vunpack.c.h.b16 %v67
    %v168 = vunpack.c.l.b16 %v68
    %v169 = vunpack.c.h.b16 %v68
    %v170 = vunpack.c.l.b16 %v69
    %v171 = vunpack.c.h.b16 %v69
    %v172 = vunpack.c.l.b16 %v70
    %v173 = vunpack.c.h.b16 %v70
    %v174 = vunpack.c.l.b16 %v71
    %v175 = vunpack.c.h.b16 %v71
    %v176 = vunpack.c.l.b16 %v72
    %v177 = vunpack.c.h.b16 %v72
    %v178 = vunpack.c.l.b16 %v73
    %v179 = vunpack.c.h.b16 %v73
    %v180 = vunpack.c.l.b16 %v74
    %v181 = vunpack.c.h.b16 %v74
    %v182 = vunpack.c.l.b16 %v75
    %v183 = vunpack.c.h.b16 %v75
    %v184 = vunpack.c.l.b16 %v76
    %v185 = vunpack.c.h.b16 %v76
    %v186 = vunpack.c.l.b16 %v77
    %v187 = vunpack.c.h.b16 %v77
    %v188 = vunpack.c.l.b16 %v78
    %v189 = vunpack.c.h.b16 %v78
    %v190 = vunpack.c.l.b16 %v79
    %v191 = vunpack.c.h.b16 %v79
    %v192 = vunpack.c.l.b16 %v80
    %v193 = vunpack.c.h.b16 %v80
    %v194 = vunpack.c.l.b16 %v81
    %v195 = vunpack.c.h.b16 %v81
    %v196 = vunpack.c.l.b16 %v82
    %v197 = vunpack.c.h.b16 %v82
    %v198 = vunpack.c.l.b16 %v83
    %v199 = vunpack.c.h.b16 %v83
    %v200 = vunpack.c.l.b16 %v84
    %v201 = vunpack.c.h.b16 %v84
    %v202 = vunpack.c.l.b16 %v85
    %v203 = vunpack.c.h.b16 %v85
    %v204 = vunpack.c.l.b16 %v86
    %v205 = vunpack.c.h.b16 %v86
    %v206 = vunpack.c.l.b16 %v87
    %v207 = vunpack.c.h.b16 %v87
    %v208 = vunpack.c.l.b16 %v88
    %v209 = vunpack.c.h.b16 %v88
    %v210 = vunpack.c.l.b16 %v89
    %v211 = vunpack.c.h.b16 %v89
    %v212 = vunpack.c.l.b16 %v90
    %v213 = vunpack.c.h.b16 %v90
    %v214 = vunpack.c.l.b16 %v91
    %v215 = vunpack.c.h.b16 %v91
    %v216 = vunpack.c.l.b16 %v92
    %v217 = vunpack.c.h.b16 %v92
    %v218 = vunpack.c.l.b16 %v93
    %v219 = vunpack.c.h.b16 %v93
    %v220 = vunpack.c.l.b16 %v94
    %v221 = vunpack.c.h.b16 %v94
    %v222 = vunpack.c.l.b16 %v95
    %v223 = vunpack.c.h.b16 %v95
    %v224 = vunpack.c.l.b16 %v96
    %v225 = vunpack.c.h.b16 %v96
    %v226 = vunpack.c.l.b16 %v97
    %v227 = vunpack.c.h.b16 %v97
    %v228 = vpack.c.b16 %v168, %v164
    %v229 = vpack.c.b16 %v169, %v165
    %v230 = vpack.c.b16 %v170, %v166
    %v231 = vpack.c.b16 %v171, %v167
    %v232 = vpack.c.b16 %v176, %v172
    %v233 = vpack.c.b16 %v177, %v173
    %v234 = vpack.c.b16 %v178, %v174
    %v235 = vpack.c.b16 %v179, %v175
    %v236 = vpack.c.b16 %v184, %v180
    %v237 = vpack.c.b16 %v185, %v181
    %v238 = vpack.c.b16 %v186, %v182
    %v239 = vpack.c.b16 %v187, %v183
    %v240 = vpack.c.b16 %v192, %v188
    %v241 = vpack.c.b16 %v193, %v189
    %v242 = vpack.c.b16 %v194, %v190
    %v243 = vpack.c.b16 %v195, %v191
    %v244 = vpack.c.b16 %v200, %v196
    %v245 = vpack.c.b16 %v201, %v197
    %v246 = vpack.c.b16 %v202, %v198
    %v247 = vpack.c.b16 %v203, %v199
    %v248 = vpack.c.b16 %v208, %v204
    %v249 = vpack.c.b16 %v209, %v205
    %v250 = vpack.c.b16 %v210, %v206
    %v251 = vpack.c.b16 %v211, %v207
    %v252 = vpack.c.b16 %v216, %v212
    %v253 = vpack.c.b16 %v217, %v213
    %v254 = vpack.c.b16 %v218, %v214
    %v255 = vpack.c.b16 %v219, %v215
    %v256 = vpack.c.b16 %v224, %v220
    %v257 = vpack.c.b16 %v225, %v221
    %v258 = vpack.c.b16 %v226, %v222
    %v259 = vpack.c.b16 %v227, %v223
    %292 = vmatpush.bf16.msra.mxu0 %v256
    %293 = vmatpush.bf16.msra.mxu0 %v252
    %294 = vmatpush.bf16.msra.mxu0 %v248
    %295 = vmatpush.bf16.msra.mxu0 %v244
    %296 = vmatpush.bf16.msra.mxu0 %v240
    %297 = vmatpush.bf16.msra.mxu0 %v236
    %298 = vmatpush.bf16.msra.mxu0 %v232
    %299 = vmatpush.bf16.msra.mxu0 %v228
    %300 = vmatmul.bf16.gmra.mxu0 %v124
    %v301 = vpop.f32.mrf.mxu0
    %v302 = vadd.f32 %v100, %v301
    %v303 = vpop.f32.mrf.mxu0
    %v304 = vadd.f32 %v100, %v303
    %305 = vmatmul.bf16.gmra.mxu0 %v125
    %v306 = vpop.f32.mrf.mxu0
    %v307 = vadd.f32 %v100, %v306
    %v308 = vpop.f32.mrf.mxu0
    %v309 = vadd.f32 %v100, %v308
    %310 = vmatmul.bf16.gmra.mxu0 %v126
    %v311 = vpop.f32.mrf.mxu0
    %v312 = vadd.f32 %v100, %v311
    %v313 = vpop.f32.mrf.mxu0
    %v314 = vadd.f32 %v100, %v313
    %315 = vmatmul.bf16.gmra.mxu0 %v127
    %v316 = vpop.f32.mrf.mxu0
    %v317 = vadd.f32 %v100, %v316
    %v318 = vpop.f32.mrf.mxu0
    %v319 = vadd.f32 %v100, %v318
    %320 = vdwg.mxu0
    %321 = vmatpush.bf16.msra.mxu0 %v257
    %322 = vmatpush.bf16.msra.mxu0 %v253
    %323 = vmatpush.bf16.msra.mxu0 %v249
    %324 = vmatpush.bf16.msra.mxu0 %v245
    %325 = vmatpush.bf16.msra.mxu0 %v241
    %326 = vmatpush.bf16.msra.mxu0 %v237
    %327 = vmatpush.bf16.msra.mxu0 %v233
    %328 = vmatpush.bf16.msra.mxu0 %v229
    %329 = vmatmul.bf16.gmra.mxu0 %v124
    %v330 = vpop.f32.mrf.mxu0
    %v331 = vadd.f32 %v101, %v330
    %v332 = vpop.f32.mrf.mxu0
    %v333 = vadd.f32 %v101, %v332
    %334 = vmatmul.bf16.gmra.mxu0 %v125
    %v335 = vpop.f32.mrf.mxu0
    %v336 = vadd.f32 %v101, %v335
    %v337 = vpop.f32.mrf.mxu0
    %v338 = vadd.f32 %v101, %v337
    %339 = vmatmul.bf16.gmra.mxu0 %v126
    %v340 = vpop.f32.mrf.mxu0
    %v341 = vadd.f32 %v101, %v340
    %v342 = vpop.f32.mrf.mxu0
    %v343 = vadd.f32 %v101, %v342
    %344 = vmatmul.bf16.gmra.mxu0 %v127
    %v345 = vpop.f32.mrf.mxu0
    %v346 = vadd.f32 %v101, %v345
    %v347 = vpop.f32.mrf.mxu0
    %v348 = vadd.f32 %v101, %v347
    %349 = vdwg.mxu0
    %350 = vmatpush.bf16.msra.mxu0 %v258
    %351 = vmatpush.bf16.msra.mxu0 %v254
    %352 = vmatpush.bf16.msra.mxu0 %v250
    %353 = vmatpush.bf16.msra.mxu0 %v246
    %354 = vmatpush.bf16.msra.mxu0 %v242
    %355 = vmatpush.bf16.msra.mxu0 %v238
    %356 = vmatpush.bf16.msra.mxu0 %v234
    %357 = vmatpush.bf16.msra.mxu0 %v230
    %358 = vmatmul.bf16.gmra.mxu0 %v124
    %v359 = vpop.f32.mrf.mxu0
    %v360 = vadd.f32 %v102, %v359
    %v361 = vpop.f32.mrf.mxu0
    %v362 = vadd.f32 %v102, %v361
    %363 = vmatmul.bf16.gmra.mxu0 %v125
    %v364 = vpop.f32.mrf.mxu0
    %v365 = vadd.f32 %v102, %v364
    %v366 = vpop.f32.mrf.mxu0
    %v367 = vadd.f32 %v102, %v366
    %368 = vmatmul.bf16.gmra.mxu0 %v126
    %v369 = vpop.f32.mrf.mxu0
    %v370 = vadd.f32 %v102, %v369
    %v371 = vpop.f32.mrf.mxu0
    %v372 = vadd.f32 %v102, %v371
    %373 = vmatmul.bf16.gmra.mxu0 %v127
    %v374 = vpop.f32.mrf.mxu0
    %v375 = vadd.f32 %v102, %v374
    %v376 = vpop.f32.mrf.mxu0
    %v377 = vadd.f32 %v102, %v376
    %378 = vdwg.mxu0
    %379 = vmatpush.bf16.msra.mxu0 %v259
    %380 = vmatpush.bf16.msra.mxu0 %v255
    %381 = vmatpush.bf16.msra.mxu0 %v251
    %382 = vmatpush.bf16.msra.mxu0 %v247
    %383 = vmatpush.bf16.msra.mxu0 %v243
    %384 = vmatpush.bf16.msra.mxu0 %v239
    %385 = vmatpush.bf16.msra.mxu0 %v235
    %386 = vmatpush.bf16.msra.mxu0 %v231
    %387 = vmatmul.bf16.gmra.mxu0 %v124
    %v388 = vpop.f32.mrf.mxu0
    %v389 = vadd.f32 %v103, %v388
    %v390 = vpop.f32.mrf.mxu0
    %v391 = vadd.f32 %v103, %v390
    %392 = vmatmul.bf16.gmra.mxu0 %v125
    %v393 = vpop.f32.mrf.mxu0
    %v394 = vadd.f32 %v103, %v393
    %v395 = vpop.f32.mrf.mxu0
    %v396 = vadd.f32 %v103, %v395
    %397 = vmatmul.bf16.gmra.mxu0 %v126
    %v398 = vpop.f32.mrf.mxu0
    %v399 = vadd.f32 %v103, %v398
    %v400 = vpop.f32.mrf.mxu0
    %v401 = vadd.f32 %v103, %v400
    %402 = vmatmul.bf16.gmra.mxu0 %v127
    %v403 = vpop.f32.mrf.mxu0
    %v404 = vadd.f32 %v103, %v403
    %v405 = vpop.f32.mrf.mxu0
    %v406 = vadd.f32 %v103, %v405
    %407 = vdwg.mxu0
    %408 = vst [vmem:[#allocation2] sm:$0xff] %v302
    %409 = vst [vmem:[#allocation2 + $0x8] sm:$0xff] %v331
    %410 = vst [vmem:[#allocation2 + $0x10] sm:$0xff] %v360
    %411 = vst [vmem:[#allocation2 + $0x18] sm:$0xff] %v389
    %412 = vst [vmem:[#allocation2 + $0x20] sm:$0xff] %v304
    %413 = vst [vmem:[#allocation2 + $0x28] sm:$0xff] %v333
    %414 = vst [vmem:[#allocation2 + $0x30] sm:$0xff] %v362
    %415 = vst [vmem:[#allocation2 + $0x38] sm:$0xff] %v391
    %416 = vst [vmem:[#allocation2 + $0x40] sm:$0xff] %v307
    %417 = vst [vmem:[#allocation2 + $0x48] sm:$0xff] %v336
    %418 = vst [vmem:[#allocation2 + $0x50] sm:$0xff] %v365
    %419 = vst [vmem:[#allocation2 + $0x58] sm:$0xff] %v394
    %420 = vst [vmem:[#allocation2 + $0x60] sm:$0xff] %v309
    %421 = vst [vmem:[#allocation2 + $0x68] sm:$0xff] %v338
    %422 = vst [vmem:[#allocation2 + $0x70] sm:$0xff] %v367
    %423 = vst [vmem:[#allocation2 + $0x78] sm:$0xff] %v396
    %424 = vst [vmem:[#allocation2 + $0x80] sm:$0xff] %v312
    %425 = vst [vmem:[#allocation2 + $0x88] sm:$0xff] %v341
    %426 = vst [vmem:[#allocation2 + $0x90] sm:$0xff] %v370
    %427 = vst [vmem:[#allocation2 + $0x98] sm:$0xff] %v399
    %428 = vst [vmem:[#allocation2 + $0xa0] sm:$0xff] %v314
    %429 = vst [vmem:[#allocation2 + $0xa8] sm:$0xff] %v343
    %430 = vst [vmem:[#allocation2 + $0xb0] sm:$0xff] %v372
    %431 = vst [vmem:[#allocation2 + $0xb8] sm:$0xff] %v401
    %432 = vst [vmem:[#allocation2 + $0xc0] sm:$0xff] %v317
    %433 = vst [vmem:[#allocation2 + $0xc8] sm:$0xff] %v346
    %434 = vst [vmem:[#allocation2 + $0xd0] sm:$0xff] %v375
    %435 = vst [vmem:[#allocation2 + $0xd8] sm:$0xff] %v404
    %436 = vst [vmem:[#allocation2 + $0xe0] sm:$0xff] %v319
    %437 = vst [vmem:[#allocation2 + $0xe8] sm:$0xff] %v348
    %438 = vst [vmem:[#allocation2 + $0xf0] sm:$0xff] %v377
    %439 = vst [vmem:[#allocation2 + $0xf8] sm:$0xff] %v406
    %v440 = vld [vmem:[#allocation5] sm:$0xff]
    %v441 = vld [vmem:[#allocation5 + $0x8] sm:$0xff]
    %v442 = vld [vmem:[#allocation5 + $0x10] sm:$0xff]
    %v443 = vld [vmem:[#allocation5 + $0x18] sm:$0xff]
    %v444 = vld [vmem:[#allocation5 + $0x20] sm:$0xff]
    %v445 = vld [vmem:[#allocation5 + $0x28] sm:$0xff]
    %v446 = vld [vmem:[#allocation5 + $0x30] sm:$0xff]
    %v447 = vld [vmem:[#allocation5 + $0x38] sm:$0xff]
    %v448 = vld [vmem:[#allocation5 + $0x40] sm:$0xff]
    %v449 = vld [vmem:[#allocation5 + $0x48] sm:$0xff]
    %v450 = vld [vmem:[#allocation5 + $0x50] sm:$0xff]
    %v451 = vld [vmem:[#allocation5 + $0x58] sm:$0xff]
    %v452 = vld [vmem:[#allocation5 + $0x60] sm:$0xff]
    %v453 = vld [vmem:[#allocation5 + $0x68] sm:$0xff]
    %v454 = vld [vmem:[#allocation5 + $0x70] sm:$0xff]
    %v455 = vld [vmem:[#allocation5 + $0x78] sm:$0xff]
    %v456 = vld [vmem:[#allocation5 + $0x80] sm:$0xff]
    %v457 = vld [vmem:[#allocation5 + $0x88] sm:$0xff]
    %v458 = vld [vmem:[#allocation5 + $0x90] sm:$0xff]
    %v459 = vld [vmem:[#allocation5 + $0x98] sm:$0xff]
    %v460 = vld [vmem:[#allocation5 + $0xa0] sm:$0xff]
    %v461 = vld [vmem:[#allocation5 + $0xa8] sm:$0xff]
    %v462 = vld [vmem:[#allocation5 + $0xb0] sm:$0xff]
    %v463 = vld [vmem:[#allocation5 + $0xb8] sm:$0xff]
    %v464 = vld [vmem:[#allocation5 + $0xc0] sm:$0xff]
    %v465 = vld [vmem:[#allocation5 + $0xc8] sm:$0xff]
    %v466 = vld [vmem:[#allocation5 + $0xd0] sm:$0xff]
    %v467 = vld [vmem:[#allocation5 + $0xd8] sm:$0xff]
    %v468 = vld [vmem:[#allocation5 + $0xe0] sm:$0xff]
    %v469 = vld [vmem:[#allocation5 + $0xe8] sm:$0xff]
    %v470 = vld [vmem:[#allocation5 + $0xf0] sm:$0xff]
    %v471 = vld [vmem:[#allocation5 + $0xf8] sm:$0xff]
    %v472 = vld [vmem:[%s5] sm:$0xff]
    %v473 = vld [vmem:[%s6] sm:$0xff]
    %s474 = smul.u32 0, 4
    %s475 = smul.addr %s474, 8
    %s476 = scalar_lea.vmem [#allocation2], %s475
    %v477 = vld [vmem:[%s476] sm:$0xff]
    %v478 = vld [vmem:[%s476 + $0x8] sm:$0xff]
    %v479 = vld [vmem:[%s476 + $0x10] sm:$0xff]
    %v480 = vld [vmem:[%s476 + $0x18] sm:$0xff]
    %v481 = vpack.c.bf16 %v472, %v472
    %v514 = vunpack.c.l.b16 %v440
    %v515 = vunpack.c.h.b16 %v440
    %v516 = vunpack.c.l.b16 %v441
    %v517 = vunpack.c.h.b16 %v441
    %v518 = vunpack.c.l.b16 %v442
    %v519 = vunpack.c.h.b16 %v442
    %v520 = vunpack.c.l.b16 %v443
    %v521 = vunpack.c.h.b16 %v443
    %v522 = vunpack.c.l.b16 %v444
    %v523 = vunpack.c.h.b16 %v444
    %v524 = vunpack.c.l.b16 %v445
    %v525 = vunpack.c.h.b16 %v445
    %v526 = vunpack.c.l.b16 %v446
    %v527 = vunpack.c.h.b16 %v446
    %v528 = vunpack.c.l.b16 %v447
    %v529 = vunpack.c.h.b16 %v447
    %v530 = vunpack.c.l.b16 %v448
    %v531 = vunpack.c.h.b16 %v448
    %v532 = vunpack.c.l.b16 %v449
    %v533 = vunpack.c.h.b16 %v449
    %v534 = vunpack.c.l.b16 %v450
    %v535 = vunpack.c.h.b16 %v450
    %v536 = vunpack.c.l.b16 %v451
    %v537 = vunpack.c.h.b16 %v451
    %v538 = vunpack.c.l.b16 %v452
    %v539 = vunpack.c.h.b16 %v452
    %v540 = vunpack.c.l.b16 %v453
    %v541 = vunpack.c.h.b16 %v453
    %v542 = vunpack.c.l.b16 %v454
    %v543 = vunpack.c.h.b16 %v454
    %v544 = vunpack.c.l.b16 %v455
    %v545 = vunpack.c.h.b16 %v455
    %v546 = vunpack.c.l.b16 %v456
    %v547 = vunpack.c.h.b16 %v456
    %v548 = vunpack.c.l.b16 %v457
    %v549 = vunpack.c.h.b16 %v457
    %v550 = vunpack.c.l.b16 %v458
    %v551 = vunpack.c.h.b16 %v458
    %v552 = vunpack.c.l.b16 %v459
    %v553 = vunpack.c.h.b16 %v459
    %v554 = vunpack.c.l.b16 %v460
    %v555 = vunpack.c.h.b16 %v460
    %v556 = vunpack.c.l.b16 %v461
    %v557 = vunpack.c.h.b16 %v461
    %v558 = vunpack.c.l.b16 %v462
    %v559 = vunpack.c.h.b16 %v462
    %v560 = vunpack.c.l.b16 %v463
    %v561 = vunpack.c.h.b16 %v463
    %v562 = vunpack.c.l.b16 %v464
    %v563 = vunpack.c.h.b16 %v464
    %v564 = vunpack.c.l.b16 %v465
    %v565 = vunpack.c.h.b16 %v465
    %v566 = vunpack.c.l.b16 %v466
    %v567 = vunpack.c.h.b16 %v466
    %v568 = vunpack.c.l.b16 %v467
    %v569 = vunpack.c.h.b16 %v467
    %v570 = vunpack.c.l.b16 %v468
    %v571 = vunpack.c.h.b16 %v468
    %v572 = vunpack.c.l.b16 %v469
    %v573 = vunpack.c.h.b16 %v469
    %v574 = vunpack.c.l.b16 %v470
    %v575 = vunpack.c.h.b16 %v470
    %v576 = vunpack.c.l.b16 %v471
    %v577 = vunpack.c.h.b16 %v471
    %v578 = vpack.c.b16 %v518, %v514
    %v579 = vpack.c.b16 %v519, %v515
    %v580 = vpack.c.b16 %v520, %v516
    %v581 = vpack.c.b16 %v521, %v517
    %v582 = vpack.c.b16 %v526, %v522
    %v583 = vpack.c.b16 %v527, %v523
    %v584 = vpack.c.b16 %v528, %v524
    %v585 = vpack.c.b16 %v529, %v525
    %v586 = vpack.c.b16 %v534, %v530
    %v587 = vpack.c.b16 %v535, %v531
    %v588 = vpack.c.b16 %v536, %v532
    %v589 = vpack.c.b16 %v537, %v533
    %v590 = vpack.c.b16 %v542, %v538
    %v591 = vpack.c.b16 %v543, %v539
    %v592 = vpack.c.b16 %v544, %v540
    %v593 = vpack.c.b16 %v545, %v541
    %v594 = vpack.c.b16 %v550, %v546
    %v595 = vpack.c.b16 %v551, %v547
    %v596 = vpack.c.b16 %v552, %v548
    %v597 = vpack.c.b16 %v553, %v549
    %v598 = vpack.c.b16 %v558, %v554
    %v599 = vpack.c.b16 %v559, %v555
    %v600 = vpack.c.b16 %v560, %v556
    %v601 = vpack.c.b16 %v561, %v557
    %v602 = vpack.c.b16 %v566, %v562
    %v603 = vpack.c.b16 %v567, %v563
    %v604 = vpack.c.b16 %v568, %v564
    %v605 = vpack.c.b16 %v569, %v565
    %v606 = vpack.c.b16 %v574, %v570
    %v607 = vpack.c.b16 %v575, %v571
    %v608 = vpack.c.b16 %v576, %v572
    %v609 = vpack.c.b16 %v577, %v573
    %642 = vmatpush.bf16.msra.mxu0 %v606
    %643 = vmatpush.bf16.msra.mxu0 %v602
    %644 = vmatpush.bf16.msra.mxu0 %v598
    %645 = vmatpush.bf16.msra.mxu0 %v594
    %646 = vmatpush.bf16.msra.mxu0 %v590
    %647 = vmatpush.bf16.msra.mxu0 %v586
    %648 = vmatpush.bf16.msra.mxu0 %v582
    %649 = vmatpush.bf16.msra.mxu0 %v578
    %650 = vmatmul.bf16.gmra.mxu0 %v481
    %v651 = vpop.f32.mrf.mxu0
    %v652 = vadd.f32 0.0, %v651
    %v653 = vpop.f32.mrf.mxu0
    %654 = vdwg.mxu0
    %655 = vmatpush.bf16.msra.mxu0 %v607
    %656 = vmatpush.bf16.msra.mxu0 %v603
    %657 = vmatpush.bf16.msra.mxu0 %v599
    %658 = vmatpush.bf16.msra.mxu0 %v595
    %659 = vmatpush.bf16.msra.mxu0 %v591
    %660 = vmatpush.bf16.msra.mxu0 %v587
    %661 = vmatpush.bf16.msra.mxu0 %v583
    %662 = vmatpush.bf16.msra.mxu0 %v579
    %663 = vmatmul.bf16.gmra.mxu0 %v481
    %v664 = vpop.f32.mrf.mxu0
    %v665 = vadd.f32 0.0, %v664
    %v666 = vpop.f32.mrf.mxu0
    %667 = vdwg.mxu0
    %668 = vmatpush.bf16.msra.mxu0 %v608
    %669 = vmatpush.bf16.msra.mxu0 %v604
    %670 = vmatpush.bf16.msra.mxu0 %v600
    %671 = vmatpush.bf16.msra.mxu0 %v596
    %672 = vmatpush.bf16.msra.mxu0 %v592
    %673 = vmatpush.bf16.msra.mxu0 %v588
    %674 = vmatpush.bf16.msra.mxu0 %v584
    %675 = vmatpush.bf16.msra.mxu0 %v580
    %676 = vmatmul.bf16.gmra.mxu0 %v481
    %v677 = vpop.f32.mrf.mxu0
    %v678 = vadd.f32 0.0, %v677
    %v679 = vpop.f32.mrf.mxu0
    %680 = vdwg.mxu0
    %681 = vmatpush.bf16.msra.mxu0 %v609
    %682 = vmatpush.bf16.msra.mxu0 %v605
    %683 = vmatpush.bf16.msra.mxu0 %v601
    %684 = vmatpush.bf16.msra.mxu0 %v597
    %685 = vmatpush.bf16.msra.mxu0 %v593
    %686 = vmatpush.bf16.msra.mxu0 %v589
    %687 = vmatpush.bf16.msra.mxu0 %v585
    %688 = vmatpush.bf16.msra.mxu0 %v581
    %689 = vmatmul.bf16.gmra.mxu0 %v481
    %v690 = vpop.f32.mrf.mxu0
    %v691 = vadd.f32 0.0, %v690
    %v692 = vpop.f32.mrf.mxu0
    %693 = vdwg.mxu0
    %v694 = vadd.f32 %v477, %v652
    %v695 = vadd.f32 %v478, %v665
    %v696 = vadd.f32 %v479, %v678
    %v697 = vadd.f32 %v480, %v691
    %v698 = vmul.f32 %v694, 0.5
    %v699 = vmul.f32 %v695, 0.5
    %v700 = vmul.f32 %v696, 0.5
    %v701 = vtanh.pop %v698
    %v702 = vtanh.pop %v699
    %v703 = vtanh.pop %v700
    %v704 = vadd.f32 %v701, 1.0
    %v705 = vadd.f32 %v702, 1.0
    %v706 = vadd.f32 %v703, 1.0
    %v707 = vmul.f32 %v704, 0.5
    %v708 = vmul.f32 %v705, 0.5
    %v709 = vmul.f32 %v706, 0.5
    %v710 = vtanh.pop %v697
    %v711 = vmul.f32 %v707, %v473
    %v712 = vmul.f32 %v708, %v710
    %v713 = vadd.f32 %v711, %v712
    %v714 = vtanh.pop %v713
    %v715 = vmul.f32 %v714, %v709
    %716 = vst [vmem:[%s4] sm:$0xff] %v715
    %s717 = smul.u32 1, 4
    %s718 = smul.addr %s717, 8
    %s719 = scalar_lea.vmem [#allocation2], %s718
    %v720 = vld [vmem:[%s719] sm:$0xff]
    %v721 = vld [vmem:[%s719 + $0x8] sm:$0xff]
    %v722 = vld [vmem:[%s719 + $0x10] sm:$0xff]
    %v723 = vld [vmem:[%s719 + $0x18] sm:$0xff]
    %v724 = vpack.c.bf16 %v715, %v715
    %725 = vmatpush.bf16.msra.mxu0 %v606
    %726 = vmatpush.bf16.msra.mxu0 %v602
    %727 = vmatpush.bf16.msra.mxu0 %v598
    %728 = vmatpush.bf16.msra.mxu0 %v594
    %729 = vmatpush.bf16.msra.mxu0 %v590
    %730 = vmatpush.bf16.msra.mxu0 %v586
    %731 = vmatpush.bf16.msra.mxu0 %v582
    %732 = vmatpush.bf16.msra.mxu0 %v578
    %733 = vmatmul.bf16.gmra.mxu0 %v724
    %v734 = vpop.f32.mrf.mxu0
    %v735 = vadd.f32 0.0, %v734
    %v736 = vpop.f32.mrf.mxu0
    %737 = vdwg.mxu0
    %738 = vmatpush.bf16.msra.mxu0 %v607
    %739 = vmatpush.bf16.msra.mxu0 %v603
    %740 = vmatpush.bf16.msra.mxu0 %v599
    %741 = vmatpush.bf16.msra.mxu0 %v595
    %742 = vmatpush.bf16.msra.mxu0 %v591
    %743 = vmatpush.bf16.msra.mxu0 %v587
    %744 = vmatpush.bf16.msra.mxu0 %v583
    %745 = vmatpush.bf16.msra.mxu0 %v579
    %746 = vmatmul.bf16.gmra.mxu0 %v724
    %v747 = vpop.f32.mrf.mxu0
    %v748 = vadd.f32 0.0, %v747
    %v749 = vpop.f32.mrf.mxu0
    %750 = vdwg.mxu0
    %751 = vmatpush.bf16.msra.mxu0 %v608
    %752 = vmatpush.bf16.msra.mxu0 %v604
    %753 = vmatpush.bf16.msra.mxu0 %v600
    %754 = vmatpush.bf16.msra.mxu0 %v596
    %755 = vmatpush.bf16.msra.mxu0 %v592
    %756 = vmatpush.bf16.msra.mxu0 %v588
    %757 = vmatpush.bf16.msra.mxu0 %v584
    %758 = vmatpush.bf16.msra.mxu0 %v580
    %759 = vmatmul.bf16.gmra.mxu0 %v724
    %v760 = vpop.f32.mrf.mxu0
    %v761 = vadd.f32 0.0, %v760
    %v762 = vpop.f32.mrf.mxu0
    %763 = vdwg.mxu0
    %764 = vmatpush.bf16.msra.mxu0 %v609
    %765 = vmatpush.bf16.msra.mxu0 %v605
    %766 = vmatpush.bf16.msra.mxu0 %v601
    %767 = vmatpush.bf16.msra.mxu0 %v597
    %768 = vmatpush.bf16.msra.mxu0 %v593
    %769 = vmatpush.bf16.msra.mxu0 %v589
    %770 = vmatpush.bf16.msra.mxu0 %v585
    %771 = vmatpush.bf16.msra.mxu0 %v581
    %772 = vmatmul.bf16.gmra.mxu0 %v724
    %v773 = vpop.f32.mrf.mxu0
    %v774 = vadd.f32 0.0, %v773
    %v775 = vpop.f32.mrf.mxu0
    %776 = vdwg.mxu0
    %v777 = vadd.f32 %v720, %v735
    %v778 = vadd.f32 %v721, %v748
    %v779 = vadd.f32 %v722, %v761
    %v780 = vadd.f32 %v723, %v774
    %v781 = vmul.f32 %v777, 0.5
    %v782 = vmul.f32 %v778, 0.5
    %v783 = vmul.f32 %v779, 0.5
    %v784 = vtanh.pop %v781
    %v785 = vtanh.pop %v782
    %v786 = vtanh.pop %v783
    %v787 = vadd.f32 %v784, 1.0
    %v788 = vadd.f32 %v785, 1.0
    %v789 = vadd.f32 %v786, 1.0
    %v790 = vmul.f32 %v787, 0.5
    %v791 = vmul.f32 %v788, 0.5
    %v792 = vmul.f32 %v789, 0.5
    %v793 = vtanh.pop %v780
    %v794 = vmul.f32 %v790, %v713
    %v795 = vmul.f32 %v791, %v793
    %v796 = vadd.f32 %v794, %v795
    %v797 = vtanh.pop %v796
    %v798 = vmul.f32 %v797, %v792
    %s799 = scalar_lea.vmem %s4, 8
    %800 = vst [vmem:[%s799] sm:$0xff] %v798
    %s801 = smul.u32 2, 4
    %s802 = smul.addr %s801, 8
    %s803 = scalar_lea.vmem [#allocation2], %s802
    %v804 = vld [vmem:[%s803] sm:$0xff]
    %v805 = vld [vmem:[%s803 + $0x8] sm:$0xff]
    %v806 = vld [vmem:[%s803 + $0x10] sm:$0xff]
    %v807 = vld [vmem:[%s803 + $0x18] sm:$0xff]
    %v808 = vpack.c.bf16 %v798, %v798
    %809 = vmatpush.bf16.msra.mxu0 %v606
    %810 = vmatpush.bf16.msra.mxu0 %v602
    %811 = vmatpush.bf16.msra.mxu0 %v598
    %812 = vmatpush.bf16.msra.mxu0 %v594
    %813 = vmatpush.bf16.msra.mxu0 %v590
    %814 = vmatpush.bf16.msra.mxu0 %v586
    %815 = vmatpush.bf16.msra.mxu0 %v582
    %816 = vmatpush.bf16.msra.mxu0 %v578
    %817 = vmatmul.bf16.gmra.mxu0 %v808
    %v818 = vpop.f32.mrf.mxu0
    %v819 = vadd.f32 0.0, %v818
    %v820 = vpop.f32.mrf.mxu0
    %821 = vdwg.mxu0
    %822 = vmatpush.bf16.msra.mxu0 %v607
    %823 = vmatpush.bf16.msra.mxu0 %v603
    %824 = vmatpush.bf16.msra.mxu0 %v599
    %825 = vmatpush.bf16.msra.mxu0 %v595
    %826 = vmatpush.bf16.msra.mxu0 %v591
    %827 = vmatpush.bf16.msra.mxu0 %v587
    %828 = vmatpush.bf16.msra.mxu0 %v583
    %829 = vmatpush.bf16.msra.mxu0 %v579
    %830 = vmatmul.bf16.gmra.mxu0 %v808
    %v831 = vpop.f32.mrf.mxu0
    %v832 = vadd.f32 0.0, %v831
    %v833 = vpop.f32.mrf.mxu0
    %834 = vdwg.mxu0
    %835 = vmatpush.bf16.msra.mxu0 %v608
    %836 = vmatpush.bf16.msra.mxu0 %v604
    %837 = vmatpush.bf16.msra.mxu0 %v600
    %838 = vmatpush.bf16.msra.mxu0 %v596
    %839 = vmatpush.bf16.msra.mxu0 %v592
    %840 = vmatpush.bf16.msra.mxu0 %v588
    %841 = vmatpush.bf16.msra.mxu0 %v584
    %842 = vmatpush.bf16.msra.mxu0 %v580
    %843 = vmatmul.bf16.gmra.mxu0 %v808
    %v844 = vpop.f32.mrf.mxu0
    %v845 = vadd.f32 0.0, %v844
    %v846 = vpop.f32.mrf.mxu0
    %847 = vdwg.mxu0
    %848 = vmatpush.bf16.msra.mxu0 %v609
    %849 = vmatpush.bf16.msra.mxu0 %v605
    %850 = vmatpush.bf16.msra.mxu0 %v601
    %851 = vmatpush.bf16.msra.mxu0 %v597
    %852 = vmatpush.bf16.msra.mxu0 %v593
    %853 = vmatpush.bf16.msra.mxu0 %v589
    %854 = vmatpush.bf16.msra.mxu0 %v585
    %855 = vmatpush.bf16.msra.mxu0 %v581
    %856 = vmatmul.bf16.gmra.mxu0 %v808
    %v857 = vpop.f32.mrf.mxu0
    %v858 = vadd.f32 0.0, %v857
    %v859 = vpop.f32.mrf.mxu0
    %860 = vdwg.mxu0
    %v861 = vadd.f32 %v804, %v819
    %v862 = vadd.f32 %v805, %v832
    %v863 = vadd.f32 %v806, %v845
    %v864 = vadd.f32 %v807, %v858
    %v865 = vmul.f32 %v861, 0.5
    %v866 = vmul.f32 %v862, 0.5
    %v867 = vmul.f32 %v863, 0.5
    %v868 = vtanh.pop %v865
    %v869 = vtanh.pop %v866
    %v870 = vtanh.pop %v867
    %v871 = vadd.f32 %v868, 1.0
    %v872 = vadd.f32 %v869, 1.0
    %v873 = vadd.f32 %v870, 1.0
    %v874 = vmul.f32 %v871, 0.5
    %v875 = vmul.f32 %v872, 0.5
    %v876 = vmul.f32 %v873, 0.5
    %v877 = vtanh.pop %v864
    %v878 = vmul.f32 %v874, %v796
    %v879 = vmul.f32 %v875, %v877
    %v880 = vadd.f32 %v878, %v879
    %v881 = vtanh.pop %v880
    %v882 = vmul.f32 %v881, %v876
    %s883 = scalar_lea.vmem %s4, 16
    %884 = vst [vmem:[%s883] sm:$0xff] %v882
    %s885 = smul.u32 3, 4
    %s886 = smul.addr %s885, 8
    %s887 = scalar_lea.vmem [#allocation2], %s886
    %v888 = vld [vmem:[%s887] sm:$0xff]
    %v889 = vld [vmem:[%s887 + $0x8] sm:$0xff]
    %v890 = vld [vmem:[%s887 + $0x10] sm:$0xff]
    %v891 = vld [vmem:[%s887 + $0x18] sm:$0xff]
    %v892 = vpack.c.bf16 %v882, %v882
    %893 = vmatpush.bf16.msra.mxu0 %v606
    %894 = vmatpush.bf16.msra.mxu0 %v602
    %895 = vmatpush.bf16.msra.mxu0 %v598
    %896 = vmatpush.bf16.msra.mxu0 %v594
    %897 = vmatpush.bf16.msra.mxu0 %v590
    %898 = vmatpush.bf16.msra.mxu0 %v586
    %899 = vmatpush.bf16.msra.mxu0 %v582
    %900 = vmatpush.bf16.msra.mxu0 %v578
    %901 = vmatmul.bf16.gmra.mxu0 %v892
    %v902 = vpop.f32.mrf.mxu0
    %v903 = vadd.f32 0.0, %v902
    %v904 = vpop.f32.mrf.mxu0
    %905 = vdwg.mxu0
    %906 = vmatpush.bf16.msra.mxu0 %v607
    %907 = vmatpush.bf16.msra.mxu0 %v603
    %908 = vmatpush.bf16.msra.mxu0 %v599
    %909 = vmatpush.bf16.msra.mxu0 %v595
    %910 = vmatpush.bf16.msra.mxu0 %v591
    %911 = vmatpush.bf16.msra.mxu0 %v587
    %912 = vmatpush.bf16.msra.mxu0 %v583
    %913 = vmatpush.bf16.msra.mxu0 %v579
    %914 = vmatmul.bf16.gmra.mxu0 %v892
    %v915 = vpop.f32.mrf.mxu0
    %v916 = vadd.f32 0.0, %v915
    %v917 = vpop.f32.mrf.mxu0
    %918 = vdwg.mxu0
    %919 = vmatpush.bf16.msra.mxu0 %v608
    %920 = vmatpush.bf16.msra.mxu0 %v604
    %921 = vmatpush.bf16.msra.mxu0 %v600
    %922 = vmatpush.bf16.msra.mxu0 %v596
    %923 = vmatpush.bf16.msra.mxu0 %v592
    %924 = vmatpush.bf16.msra.mxu0 %v588
    %925 = vmatpush.bf16.msra.mxu0 %v584
    %926 = vmatpush.bf16.msra.mxu0 %v580
    %927 = vmatmul.bf16.gmra.mxu0 %v892
    %v928 = vpop.f32.mrf.mxu0
    %v929 = vadd.f32 0.0, %v928
    %v930 = vpop.f32.mrf.mxu0
    %931 = vdwg.mxu0
    %932 = vmatpush.bf16.msra.mxu0 %v609
    %933 = vmatpush.bf16.msra.mxu0 %v605
    %934 = vmatpush.bf16.msra.mxu0 %v601
    %935 = vmatpush.bf16.msra.mxu0 %v597
    %936 = vmatpush.bf16.msra.mxu0 %v593
    %937 = vmatpush.bf16.msra.mxu0 %v589
    %938 = vmatpush.bf16.msra.mxu0 %v585
    %939 = vmatpush.bf16.msra.mxu0 %v581
    %940 = vmatmul.bf16.gmra.mxu0 %v892
    %v941 = vpop.f32.mrf.mxu0
    %v942 = vadd.f32 0.0, %v941
    %v943 = vpop.f32.mrf.mxu0
    %944 = vdwg.mxu0
    %v945 = vadd.f32 %v888, %v903
    %v946 = vadd.f32 %v889, %v916
    %v947 = vadd.f32 %v890, %v929
    %v948 = vadd.f32 %v891, %v942
    %v949 = vmul.f32 %v945, 0.5
    %v950 = vmul.f32 %v946, 0.5
    %v951 = vmul.f32 %v947, 0.5
    %v952 = vtanh.pop %v949
    %v953 = vtanh.pop %v950
    %v954 = vtanh.pop %v951
    %v955 = vadd.f32 %v952, 1.0
    %v956 = vadd.f32 %v953, 1.0
    %v957 = vadd.f32 %v954, 1.0
    %v958 = vmul.f32 %v955, 0.5
    %v959 = vmul.f32 %v956, 0.5
    %v960 = vmul.f32 %v957, 0.5
    %v961 = vtanh.pop %v948
    %v962 = vmul.f32 %v958, %v880
    %v963 = vmul.f32 %v959, %v961
    %v964 = vadd.f32 %v962, %v963
    %v965 = vtanh.pop %v964
    %v966 = vmul.f32 %v965, %v960
    %s967 = scalar_lea.vmem %s4, 24
    %968 = vst [vmem:[%s967] sm:$0xff] %v966
    %s969 = smul.u32 4, 4
    %s970 = smul.addr %s969, 8
    %s971 = scalar_lea.vmem [#allocation2], %s970
    %v972 = vld [vmem:[%s971] sm:$0xff]
    %v973 = vld [vmem:[%s971 + $0x8] sm:$0xff]
    %v974 = vld [vmem:[%s971 + $0x10] sm:$0xff]
    %v975 = vld [vmem:[%s971 + $0x18] sm:$0xff]
    %v976 = vpack.c.bf16 %v966, %v966
    %977 = vmatpush.bf16.msra.mxu0 %v606
    %978 = vmatpush.bf16.msra.mxu0 %v602
    %979 = vmatpush.bf16.msra.mxu0 %v598
    %980 = vmatpush.bf16.msra.mxu0 %v594
    %981 = vmatpush.bf16.msra.mxu0 %v590
    %982 = vmatpush.bf16.msra.mxu0 %v586
    %983 = vmatpush.bf16.msra.mxu0 %v582
    %984 = vmatpush.bf16.msra.mxu0 %v578
    %985 = vmatmul.bf16.gmra.mxu0 %v976
    %v986 = vpop.f32.mrf.mxu0
    %v987 = vadd.f32 0.0, %v986
    %v988 = vpop.f32.mrf.mxu0
    %989 = vdwg.mxu0
    %990 = vmatpush.bf16.msra.mxu0 %v607
    %991 = vmatpush.bf16.msra.mxu0 %v603
    %992 = vmatpush.bf16.msra.mxu0 %v599
    %993 = vmatpush.bf16.msra.mxu0 %v595
    %994 = vmatpush.bf16.msra.mxu0 %v591
    %995 = vmatpush.bf16.msra.mxu0 %v587
    %996 = vmatpush.bf16.msra.mxu0 %v583
    %997 = vmatpush.bf16.msra.mxu0 %v579
    %998 = vmatmul.bf16.gmra.mxu0 %v976
    %v999 = vpop.f32.mrf.mxu0
    %v1000 = vadd.f32 0.0, %v999
    %v1001 = vpop.f32.mrf.mxu0
    %1002 = vdwg.mxu0
    %1003 = vmatpush.bf16.msra.mxu0 %v608
    %1004 = vmatpush.bf16.msra.mxu0 %v604
    %1005 = vmatpush.bf16.msra.mxu0 %v600
    %1006 = vmatpush.bf16.msra.mxu0 %v596
    %1007 = vmatpush.bf16.msra.mxu0 %v592
    %1008 = vmatpush.bf16.msra.mxu0 %v588
    %1009 = vmatpush.bf16.msra.mxu0 %v584
    %1010 = vmatpush.bf16.msra.mxu0 %v580
    %1011 = vmatmul.bf16.gmra.mxu0 %v976
    %v1012 = vpop.f32.mrf.mxu0
    %v1013 = vadd.f32 0.0, %v1012
    %v1014 = vpop.f32.mrf.mxu0
    %1015 = vdwg.mxu0
    %1016 = vmatpush.bf16.msra.mxu0 %v609
    %1017 = vmatpush.bf16.msra.mxu0 %v605
    %1018 = vmatpush.bf16.msra.mxu0 %v601
    %1019 = vmatpush.bf16.msra.mxu0 %v597
    %1020 = vmatpush.bf16.msra.mxu0 %v593
    %1021 = vmatpush.bf16.msra.mxu0 %v589
    %1022 = vmatpush.bf16.msra.mxu0 %v585
    %1023 = vmatpush.bf16.msra.mxu0 %v581
    %1024 = vmatmul.bf16.gmra.mxu0 %v976
    %v1025 = vpop.f32.mrf.mxu0
    %v1026 = vadd.f32 0.0, %v1025
    %v1027 = vpop.f32.mrf.mxu0
    %1028 = vdwg.mxu0
    %v1029 = vadd.f32 %v972, %v987
    %v1030 = vadd.f32 %v973, %v1000
    %v1031 = vadd.f32 %v974, %v1013
    %v1032 = vadd.f32 %v975, %v1026
    %v1033 = vmul.f32 %v1029, 0.5
    %v1034 = vmul.f32 %v1030, 0.5
    %v1035 = vmul.f32 %v1031, 0.5
    %v1036 = vtanh.pop %v1033
    %v1037 = vtanh.pop %v1034
    %v1038 = vtanh.pop %v1035
    %v1039 = vadd.f32 %v1036, 1.0
    %v1040 = vadd.f32 %v1037, 1.0
    %v1041 = vadd.f32 %v1038, 1.0
    %v1042 = vmul.f32 %v1039, 0.5
    %v1043 = vmul.f32 %v1040, 0.5
    %v1044 = vmul.f32 %v1041, 0.5
    %v1045 = vtanh.pop %v1032
    %v1046 = vmul.f32 %v1042, %v964
    %v1047 = vmul.f32 %v1043, %v1045
    %v1048 = vadd.f32 %v1046, %v1047
    %v1049 = vtanh.pop %v1048
    %v1050 = vmul.f32 %v1049, %v1044
    %s1051 = scalar_lea.vmem %s4, 32
    %1052 = vst [vmem:[%s1051] sm:$0xff] %v1050
    %s1053 = smul.u32 5, 4
    %s1054 = smul.addr %s1053, 8
    %s1055 = scalar_lea.vmem [#allocation2], %s1054
    %v1056 = vld [vmem:[%s1055] sm:$0xff]
    %v1057 = vld [vmem:[%s1055 + $0x8] sm:$0xff]
    %v1058 = vld [vmem:[%s1055 + $0x10] sm:$0xff]
    %v1059 = vld [vmem:[%s1055 + $0x18] sm:$0xff]
    %v1060 = vpack.c.bf16 %v1050, %v1050
    %1061 = vmatpush.bf16.msra.mxu0 %v606
    %1062 = vmatpush.bf16.msra.mxu0 %v602
    %1063 = vmatpush.bf16.msra.mxu0 %v598
    %1064 = vmatpush.bf16.msra.mxu0 %v594
    %1065 = vmatpush.bf16.msra.mxu0 %v590
    %1066 = vmatpush.bf16.msra.mxu0 %v586
    %1067 = vmatpush.bf16.msra.mxu0 %v582
    %1068 = vmatpush.bf16.msra.mxu0 %v578
    %1069 = vmatmul.bf16.gmra.mxu0 %v1060
    %v1070 = vpop.f32.mrf.mxu0
    %v1071 = vadd.f32 0.0, %v1070
    %v1072 = vpop.f32.mrf.mxu0
    %1073 = vdwg.mxu0
    %1074 = vmatpush.bf16.msra.mxu0 %v607
    %1075 = vmatpush.bf16.msra.mxu0 %v603
    %1076 = vmatpush.bf16.msra.mxu0 %v599
    %1077 = vmatpush.bf16.msra.mxu0 %v595
    %1078 = vmatpush.bf16.msra.mxu0 %v591
    %1079 = vmatpush.bf16.msra.mxu0 %v587
    %1080 = vmatpush.bf16.msra.mxu0 %v583
    %1081 = vmatpush.bf16.msra.mxu0 %v579
    %1082 = vmatmul.bf16.gmra.mxu0 %v1060
    %v1083 = vpop.f32.mrf.mxu0
    %v1084 = vadd.f32 0.0, %v1083
    %v1085 = vpop.f32.mrf.mxu0
    %1086 = vdwg.mxu0
    %1087 = vmatpush.bf16.msra.mxu0 %v608
    %1088 = vmatpush.bf16.msra.mxu0 %v604
    %1089 = vmatpush.bf16.msra.mxu0 %v600
    %1090 = vmatpush.bf16.msra.mxu0 %v596
    %1091 = vmatpush.bf16.msra.mxu0 %v592
    %1092 = vmatpush.bf16.msra.mxu0 %v588
    %1093 = vmatpush.bf16.msra.mxu0 %v584
    %1094 = vmatpush.bf16.msra.mxu0 %v580
    %1095 = vmatmul.bf16.gmra.mxu0 %v1060
    %v1096 = vpop.f32.mrf.mxu0
    %v1097 = vadd.f32 0.0, %v1096
    %v1098 = vpop.f32.mrf.mxu0
    %1099 = vdwg.mxu0
    %1100 = vmatpush.bf16.msra.mxu0 %v609
    %1101 = vmatpush.bf16.msra.mxu0 %v605
    %1102 = vmatpush.bf16.msra.mxu0 %v601
    %1103 = vmatpush.bf16.msra.mxu0 %v597
    %1104 = vmatpush.bf16.msra.mxu0 %v593
    %1105 = vmatpush.bf16.msra.mxu0 %v589
    %1106 = vmatpush.bf16.msra.mxu0 %v585
    %1107 = vmatpush.bf16.msra.mxu0 %v581
    %1108 = vmatmul.bf16.gmra.mxu0 %v1060
    %v1109 = vpop.f32.mrf.mxu0
    %v1110 = vadd.f32 0.0, %v1109
    %v1111 = vpop.f32.mrf.mxu0
    %1112 = vdwg.mxu0
    %v1113 = vadd.f32 %v1056, %v1071
    %v1114 = vadd.f32 %v1057, %v1084
    %v1115 = vadd.f32 %v1058, %v1097
    %v1116 = vadd.f32 %v1059, %v1110
    %v1117 = vmul.f32 %v1113, 0.5
    %v1118 = vmul.f32 %v1114, 0.5
    %v1119 = vmul.f32 %v1115, 0.5
    %v1120 = vtanh.pop %v1117
    %v1121 = vtanh.pop %v1118
    %v1122 = vtanh.pop %v1119
    %v1123 = vadd.f32 %v1120, 1.0
    %v1124 = vadd.f32 %v1121, 1.0
    %v1125 = vadd.f32 %v1122, 1.0
    %v1126 = vmul.f32 %v1123, 0.5
    %v1127 = vmul.f32 %v1124, 0.5
    %v1128 = vmul.f32 %v1125, 0.5
    %v1129 = vtanh.pop %v1116
    %v1130 = vmul.f32 %v1126, %v1048
    %v1131 = vmul.f32 %v1127, %v1129
    %v1132 = vadd.f32 %v1130, %v1131
    %v1133 = vtanh.pop %v1132
    %v1134 = vmul.f32 %v1133, %v1128
    %s1135 = scalar_lea.vmem %s4, 40
    %1136 = vst [vmem:[%s1135] sm:$0xff] %v1134
    %s1137 = smul.u32 6, 4
    %s1138 = smul.addr %s1137, 8
    %s1139 = scalar_lea.vmem [#allocation2], %s1138
    %v1140 = vld [vmem:[%s1139] sm:$0xff]
    %v1141 = vld [vmem:[%s1139 + $0x8] sm:$0xff]
    %v1142 = vld [vmem:[%s1139 + $0x10] sm:$0xff]
    %v1143 = vld [vmem:[%s1139 + $0x18] sm:$0xff]
    %v1144 = vpack.c.bf16 %v1134, %v1134
    %1145 = vmatpush.bf16.msra.mxu0 %v606
    %1146 = vmatpush.bf16.msra.mxu0 %v602
    %1147 = vmatpush.bf16.msra.mxu0 %v598
    %1148 = vmatpush.bf16.msra.mxu0 %v594
    %1149 = vmatpush.bf16.msra.mxu0 %v590
    %1150 = vmatpush.bf16.msra.mxu0 %v586
    %1151 = vmatpush.bf16.msra.mxu0 %v582
    %1152 = vmatpush.bf16.msra.mxu0 %v578
    %1153 = vmatmul.bf16.gmra.mxu0 %v1144
    %v1154 = vpop.f32.mrf.mxu0
    %v1155 = vadd.f32 0.0, %v1154
    %v1156 = vpop.f32.mrf.mxu0
    %1157 = vdwg.mxu0
    %1158 = vmatpush.bf16.msra.mxu0 %v607
    %1159 = vmatpush.bf16.msra.mxu0 %v603
    %1160 = vmatpush.bf16.msra.mxu0 %v599
    %1161 = vmatpush.bf16.msra.mxu0 %v595
    %1162 = vmatpush.bf16.msra.mxu0 %v591
    %1163 = vmatpush.bf16.msra.mxu0 %v587
    %1164 = vmatpush.bf16.msra.mxu0 %v583
    %1165 = vmatpush.bf16.msra.mxu0 %v579
    %1166 = vmatmul.bf16.gmra.mxu0 %v1144
    %v1167 = vpop.f32.mrf.mxu0
    %v1168 = vadd.f32 0.0, %v1167
    %v1169 = vpop.f32.mrf.mxu0
    %1170 = vdwg.mxu0
    %1171 = vmatpush.bf16.msra.mxu0 %v608
    %1172 = vmatpush.bf16.msra.mxu0 %v604
    %1173 = vmatpush.bf16.msra.mxu0 %v600
    %1174 = vmatpush.bf16.msra.mxu0 %v596
    %1175 = vmatpush.bf16.msra.mxu0 %v592
    %1176 = vmatpush.bf16.msra.mxu0 %v588
    %1177 = vmatpush.bf16.msra.mxu0 %v584
    %1178 = vmatpush.bf16.msra.mxu0 %v580
    %1179 = vmatmul.bf16.gmra.mxu0 %v1144
    %v1180 = vpop.f32.mrf.mxu0
    %v1181 = vadd.f32 0.0, %v1180
    %v1182 = vpop.f32.mrf.mxu0
    %1183 = vdwg.mxu0
    %1184 = vmatpush.bf16.msra.mxu0 %v609
    %1185 = vmatpush.bf16.msra.mxu0 %v605
    %1186 = vmatpush.bf16.msra.mxu0 %v601
    %1187 = vmatpush.bf16.msra.mxu0 %v597
    %1188 = vmatpush.bf16.msra.mxu0 %v593
    %1189 = vmatpush.bf16.msra.mxu0 %v589
    %1190 = vmatpush.bf16.msra.mxu0 %v585
    %1191 = vmatpush.bf16.msra.mxu0 %v581
    %1192 = vmatmul.bf16.gmra.mxu0 %v1144
    %v1193 = vpop.f32.mrf.mxu0
    %v1194 = vadd.f32 0.0, %v1193
    %v1195 = vpop.f32.mrf.mxu0
    %1196 = vdwg.mxu0
    %v1197 = vadd.f32 %v1140, %v1155
    %v1198 = vadd.f32 %v1141, %v1168
    %v1199 = vadd.f32 %v1142, %v1181
    %v1200 = vadd.f32 %v1143, %v1194
    %v1201 = vmul.f32 %v1197, 0.5
    %v1202 = vmul.f32 %v1198, 0.5
    %v1203 = vmul.f32 %v1199, 0.5
    %v1204 = vtanh.pop %v1201
    %v1205 = vtanh.pop %v1202
    %v1206 = vtanh.pop %v1203
    %v1207 = vadd.f32 %v1204, 1.0
    %v1208 = vadd.f32 %v1205, 1.0
    %v1209 = vadd.f32 %v1206, 1.0
    %v1210 = vmul.f32 %v1207, 0.5
    %v1211 = vmul.f32 %v1208, 0.5
    %v1212 = vmul.f32 %v1209, 0.5
    %v1213 = vtanh.pop %v1200
    %v1214 = vmul.f32 %v1210, %v1132
    %v1215 = vmul.f32 %v1211, %v1213
    %v1216 = vadd.f32 %v1214, %v1215
    %v1217 = vtanh.pop %v1216
    %v1218 = vmul.f32 %v1217, %v1212
    %s1219 = scalar_lea.vmem %s4, 48
    %1220 = vst [vmem:[%s1219] sm:$0xff] %v1218
    %s1221 = smul.u32 7, 4
    %s1222 = smul.addr %s1221, 8
    %s1223 = scalar_lea.vmem [#allocation2], %s1222
    %v1224 = vld [vmem:[%s1223] sm:$0xff]
    %v1225 = vld [vmem:[%s1223 + $0x8] sm:$0xff]
    %v1226 = vld [vmem:[%s1223 + $0x10] sm:$0xff]
    %v1227 = vld [vmem:[%s1223 + $0x18] sm:$0xff]
    %v1228 = vpack.c.bf16 %v1218, %v1218
    %1229 = vmatpush.bf16.msra.mxu0 %v606
    %1230 = vmatpush.bf16.msra.mxu0 %v602
    %1231 = vmatpush.bf16.msra.mxu0 %v598
    %1232 = vmatpush.bf16.msra.mxu0 %v594
    %1233 = vmatpush.bf16.msra.mxu0 %v590
    %1234 = vmatpush.bf16.msra.mxu0 %v586
    %1235 = vmatpush.bf16.msra.mxu0 %v582
    %1236 = vmatpush.bf16.msra.mxu0 %v578
    %1237 = vmatmul.bf16.gmra.mxu0 %v1228
    %v1238 = vpop.f32.mrf.mxu0
    %v1239 = vadd.f32 0.0, %v1238
    %v1240 = vpop.f32.mrf.mxu0
    %1241 = vdwg.mxu0
    %1242 = vmatpush.bf16.msra.mxu0 %v607
    %1243 = vmatpush.bf16.msra.mxu0 %v603
    %1244 = vmatpush.bf16.msra.mxu0 %v599
    %1245 = vmatpush.bf16.msra.mxu0 %v595
    %1246 = vmatpush.bf16.msra.mxu0 %v591
    %1247 = vmatpush.bf16.msra.mxu0 %v587
    %1248 = vmatpush.bf16.msra.mxu0 %v583
    %1249 = vmatpush.bf16.msra.mxu0 %v579
    %1250 = vmatmul.bf16.gmra.mxu0 %v1228
    %v1251 = vpop.f32.mrf.mxu0
    %v1252 = vadd.f32 0.0, %v1251
    %v1253 = vpop.f32.mrf.mxu0
    %1254 = vdwg.mxu0
    %1255 = vmatpush.bf16.msra.mxu0 %v608
    %1256 = vmatpush.bf16.msra.mxu0 %v604
    %1257 = vmatpush.bf16.msra.mxu0 %v600
    %1258 = vmatpush.bf16.msra.mxu0 %v596
    %1259 = vmatpush.bf16.msra.mxu0 %v592
    %1260 = vmatpush.bf16.msra.mxu0 %v588
    %1261 = vmatpush.bf16.msra.mxu0 %v584
    %1262 = vmatpush.bf16.msra.mxu0 %v580
    %1263 = vmatmul.bf16.gmra.mxu0 %v1228
    %v1264 = vpop.f32.mrf.mxu0
    %v1265 = vadd.f32 0.0, %v1264
    %v1266 = vpop.f32.mrf.mxu0
    %1267 = vdwg.mxu0
    %1268 = vmatpush.bf16.msra.mxu0 %v609
    %1269 = vmatpush.bf16.msra.mxu0 %v605
    %1270 = vmatpush.bf16.msra.mxu0 %v601
    %1271 = vmatpush.bf16.msra.mxu0 %v597
    %1272 = vmatpush.bf16.msra.mxu0 %v593
    %1273 = vmatpush.bf16.msra.mxu0 %v589
    %1274 = vmatpush.bf16.msra.mxu0 %v585
    %1275 = vmatpush.bf16.msra.mxu0 %v581
    %1276 = vmatmul.bf16.gmra.mxu0 %v1228
    %v1277 = vpop.f32.mrf.mxu0
    %v1278 = vadd.f32 0.0, %v1277
    %v1279 = vpop.f32.mrf.mxu0
    %1280 = vdwg.mxu0
    %v1281 = vadd.f32 %v1224, %v1239
    %v1282 = vadd.f32 %v1225, %v1252
    %v1283 = vadd.f32 %v1226, %v1265
    %v1284 = vadd.f32 %v1227, %v1278
    %v1285 = vmul.f32 %v1281, 0.5
    %v1286 = vmul.f32 %v1282, 0.5
    %v1287 = vmul.f32 %v1283, 0.5
    %v1288 = vtanh.pop %v1285
    %v1289 = vtanh.pop %v1286
    %v1290 = vtanh.pop %v1287
    %v1291 = vadd.f32 %v1288, 1.0
    %v1292 = vadd.f32 %v1289, 1.0
    %v1293 = vadd.f32 %v1290, 1.0
    %v1294 = vmul.f32 %v1291, 0.5
    %v1295 = vmul.f32 %v1292, 0.5
    %v1296 = vmul.f32 %v1293, 0.5
    %v1297 = vtanh.pop %v1284
    %v1298 = vmul.f32 %v1294, %v1216
    %v1299 = vmul.f32 %v1295, %v1297
    %v1300 = vadd.f32 %v1298, %v1299
    %v1301 = vtanh.pop %v1300
    %v1302 = vmul.f32 %v1301, %v1296
    %s1303 = scalar_lea.vmem %s4, 56
    %1304 = vst [vmem:[%s1303] sm:$0xff] %v1302
    %1305 = vst [vmem:[%s5] sm:$0xff] %v1302
    %1306 = vst [vmem:[%s6] sm:$0xff] %v1300
    // Predicated region
    $region30: #{_lambda_.3} parent=1 // pred_check
      _
    $region31: #{_lambda_.3} parent=1 // pred_check_branch
      %1308 = sbr.rel (0) target = $region33
    $region32: #{_lambda_.3} parent=1 // pred_region
      _
    $region33: #{_lambda_.3} parent=1 // pred_fallthru
      _
    // Predicated region
    $region34: #{_lambda_.3} parent=1 // pred_check
      _
    $region35: #{_lambda_.3} parent=1 // pred_check_branch
      %1310 = sbr.rel (0) target = $region37
    $region36: #{_lambda_.3} parent=1 // pred_region
      _
    $region37: #{_lambda_.3} parent=1 // pred_fallthru
      _
    // Predicated region
    $region38: #{_lambda_.3} parent=1 // pred_check
      _
    $region39: #{_lambda_.3} parent=1 // pred_check_branch
      %1312 = sbr.rel (0) target = $region41
    $region40: #{_lambda_.3} parent=1 // pred_region
      _
    $region41: #{_lambda_.3} parent=1 // pred_fallthru
      _
    // Predicated region
    $region42: #{_lambda_.3} parent=1 // pred_check
      _
    $region43: #{_lambda_.3} parent=1 // pred_check_branch
      %1314 = sbr.rel (0) target = $region45
    $region44: #{_lambda_.3} parent=1 // pred_region
      _
    $region45: #{_lambda_.3} parent=1 // pred_fallthru
      _
    // Predicated region
    $region46: #{_lambda_.3} parent=1 // pred_check
      _
    $region47: #{_lambda_.3} parent=1 // pred_check_branch
      %1316 = sbr.rel (0) target = $region49
    $region48: #{_lambda_.3} parent=1 // pred_region
      _
    $region49: #{_lambda_.3} parent=1 // pred_fallthru
      _
    // Predicated region
    $region50: #{_lambda_.3} parent=1 // pred_check
      _
    $region51: #{_lambda_.3} parent=1 // pred_check_branch
      %1318 = sbr.rel (0) target = $region53
    $region52: #{_lambda_.3} parent=1 // pred_region
      _
    $region53: #{_lambda_.3} parent=1 // pred_fallthru
      _
    %1319 = vsyncpa [#allocation4], 1
    %1320 = vsyncpa [#allocation6], 1

</llo_original>
